<compile_context>
chip_gen: v7x
topology: tpu7x:2x2x1
jax: 0.10.0
libtpu: 0.0.40
codegen_flags: <defaults>
</compile_context>

<pallas_src>
import numpy as np
import jax
import jax.numpy as jnp
from jax.experimental import pallas as pl
from jax.experimental.pallas import tpu as pltpu


# small_vecs row layout:  0:wt1  1:bt1  2:bt2  3:bp1  4:lnp_g  5:lnp_b  6:bp2  7:bc  8:lno_g  9:lno_b
# layer_vecs row layout:  0:lnkv_g  1:lnkv_b  2:bvo  3:lnf_g  4:lnf_b  5:bf2
_INV_SQRT2 = np.float32(1.0 / np.sqrt(2.0))


def unet_kernel(x_start_ref, noise_ref, coefs_ref, pc_ref,
                sv_ref, wt2_ref, wp1_ref, wp2_ref, wc_ref, wout_ref, bout_ref,
                lv_ref, bf1_ref, wvo_ref, wf1_ref, wf2_ref,
                pred_ref,
                h_ref, pe_ref):
    l = pl.program_id(1)
    n_layers = pl.num_programs(1)

    def ln(x, g, b, eps=1e-5):
        mu = jnp.mean(x, axis=-1, keepdims=True)
        var = jnp.mean(jnp.square(x - mu), axis=-1, keepdims=True)
        return (x - mu) * jax.lax.rsqrt(var + eps) * g + b

    def silu(x):
        return x * jax.nn.sigmoid(x)

    def gelu(x):  # exact GELU (PyTorch nn.GELU default, approximate='none')
        return 0.5 * x * (1.0 + jax.lax.erf(x * _INV_SQRT2))

    def mm(a, w_bf16):
        # bf16 weight streaming, f32 accumulation on the MXU.
        return jnp.dot(a.astype(jnp.bfloat16), w_bf16,
                       preferred_element_type=jnp.float32)

    # ---- prologue (layer 0 only): q_sample + time/protein/compound embeddings ----
    @pl.when(l == 0)
    def _prologue():
        sv = sv_ref[...]                                   # [10, H] f32
        coefs = coefs_ref[...]                             # [TB, 3] f32
        sa, s1ma, tf = coefs[:, 0:1], coefs[:, 1:2], coefs[:, 2:3]

        # q_sample: forward diffusion (elementwise)
        x_t = sa * x_start_ref[...] + s1ma * noise_ref[...]

        # time embedding: Linear(1,H) -> SiLU -> Linear(H,H)
        t_h = silu(tf * sv[0:1, :] + sv[1:2, :])           # outer product w/ wt1
        t_emb = mm(t_h, wt2_ref[...]) + sv[2:3, :]

        # protein embedding: Linear -> LayerNorm -> SiLU -> (Dropout=id) -> Linear
        p_h = ln(mm(pc_ref[...], wp1_ref[...]) + sv[3:4, :], sv[4:5, :], sv[5:6, :])
        pe_ref[...] = mm(silu(p_h), wp2_ref[...]) + sv[6:7, :]

        # compound projection + time embedding
        h_ref[...] = mm(x_t, wc_ref[...]) + sv[7:8, :] + t_emb

    # ---- one attention block per grid step (even l: cross, odd l: self) ----------
    lv = lv_ref[0]                                         # [6, H] f32
    lnkv_g, lnkv_b = lv[0:1, :], lv[1:2, :]
    bvo = lv[2:3, :]
    lnf_g, lnf_b = lv[3:4, :], lv[4:5, :]
    bf2 = lv[5:6, :]

    h = h_ref[...]
    # select KV source without branching: 1.0 -> protein_emb (cross), 0.0 -> h (self)
    is_cross = ((l % 2) == 0).astype(jnp.float32)
    kv_in = is_cross * pe_ref[...] + (1.0 - is_cross) * h

    # seq_len == 1: softmax over a single key is 1, so attention == out_proj(V(kv_norm));
    # Q/K projections and the query-side LayerNorm cancel; V/out projections are folded.
    kv_norm = ln(kv_in, lnkv_g, lnkv_b)
    h = h + mm(kv_norm, wvo_ref[0]) + bvo

    f = gelu(mm(ln(h, lnf_g, lnf_b), wf1_ref[0]) + bf1_ref[0])
    h = h + mm(f, wf2_ref[0]) + bf2
    h_ref[...] = h

    # ---- epilogue (last layer): LayerNorm -> SiLU -> Linear(H, C) ----------------
    @pl.when(l == n_layers - 1)
    def _epilogue():
        sv = sv_ref[...]
        out = mm(silu(ln(h_ref[...], sv[8:9, :], sv[9:10, :])), wout_ref[...])
        pred_ref[...] = out + bout_ref[...]


# ------------------------------------------------------------------------------
# Host-side parameter construction / packing
# ------------------------------------------------------------------------------
def init_params(key, H, C, P, L):
    """Deterministic synthetic parameters (Linear weights pre-transposed to [in,out])."""
    keys = iter(jax.random.split(key, 40))

    def w(shape, scale=0.02):
        return jax.random.normal(next(keys), shape, jnp.float32) * scale

    p = {}
    # time_embed: Linear(1,H), Linear(H,H)
    p["wt1"], p["bt1"] = w((1, H)), w((H,))
    p["wt2"], p["bt2"] = w((H, H)), w((H,))
    # protein_embed: Linear(P,H), LayerNorm(H), Linear(H,H)
    p["wp1"], p["bp1"] = w((P, H)), w((H,))
    p["lnp_g"], p["lnp_b"] = jnp.ones((H,), jnp.float32), jnp.zeros((H,), jnp.float32)
    p["wp2"], p["bp2"] = w((H, H)), w((H,))
    # compound_proj: Linear(C,H)
    p["wc"], p["bc"] = w((C, H)), w((H,))
    # stacked attention blocks (alternating cross/self); kv-side LayerNorm only
    # (query-side norm is mathematically dead for seq_len == 1, so not created).
    p["lnkv_g"], p["lnkv_b"] = jnp.ones((L, H), jnp.float32), jnp.zeros((L, H), jnp.float32)
    p["wv"], p["bv"] = w((L, H, H)), w((L, H))       # V slice of in_proj
    p["wo"], p["bo"] = w((L, H, H)), w((L, H))       # attention out_proj
    p["lnf_g"], p["lnf_b"] = jnp.ones((L, H), jnp.float32), jnp.zeros((L, H), jnp.float32)
    p["wf1"], p["bf1"] = w((L, H, 4 * H)), w((L, 4 * H))
    p["wf2"], p["bf2"] = w((L, 4 * H, H)), w((L, H))
    # output_proj: LayerNorm(H), Linear(H, C)
    p["lno_g"], p["lno_b"] = jnp.ones((H,), jnp.float32), jnp.zeros((H,), jnp.float32)
    p["wout"], p["bout"] = w((H, C)), w((C,))
    return p


def pack_params(p):
    """Offline folding + packing + bf16 cast of the kernel parameter set."""
    # Fold V-proj and out-proj (exact re-association of two composed Linears).
    wvo = jnp.einsum("lij,ljk->lik", p["wv"], p["wo"])               # [L,H,H]
    bvo = jnp.einsum("lj,ljk->lk", p["bv"], p["wo"]) + p["bo"]       # [L,H]

    small_vecs = jnp.stack([p["wt1"][0], p["bt1"], p["bt2"],
                            p["bp1"], p["lnp_g"], p["lnp_b"], p["bp2"],
                            p["bc"], p["lno_g"], p["lno_b"]], axis=0)            # [10,H] f32
    layer_vecs = jnp.stack([p["lnkv_g"], p["lnkv_b"], bvo,
                            p["lnf_g"], p["lnf_b"], p["bf2"]], axis=1)           # [L,6,H] f32

    bf16 = lambda a: a.astype(jnp.bfloat16)
    return dict(
        small_vecs=small_vecs,
        wt2=bf16(p["wt2"]), wp1=bf16(p["wp1"]), wp2=bf16(p["wp2"]), wc=bf16(p["wc"]),
        wout=bf16(p["wout"]), bout=p["bout"].reshape(1, -1),
        layer_vecs=layer_vecs, bf1=p["bf1"][:, None, :],
        wvo=bf16(wvo), wf1=bf16(p["wf1"]), wf2=bf16(p["wf2"]),
    )


def make_scheduler(num_timesteps, beta_start=1e-4, beta_end=0.02):
    betas = jnp.linspace(beta_start, beta_end, num_timesteps, dtype=jnp.float32)
    alphas = 1.0 - betas
    acp = jnp.cumprod(alphas)
    return {
        "num_timesteps": num_timesteps,
        "sqrt_alphas_cumprod": jnp.sqrt(acp),
        "sqrt_one_minus_alphas_cumprod": jnp.sqrt(1.0 - acp),
    }


# ------------------------------------------------------------------------------
# Wrapper: mirrors ProteinLigandDiffusion.forward -> (noise, predicted_noise, t)
# ------------------------------------------------------------------------------
def protein_ligand_diffusion_forward(x_start, protein_condition, kparams, sched, key,
                                     *, batch_tile=64):
    B, C = x_start.shape
    P = protein_condition.shape[1]
    H = kparams["wt2"].shape[0]
    L = kparams["wvo"].shape[0]
    F4 = kparams["wf1"].shape[2]
    assert B % batch_tile == 0 and batch_tile % 8 == 0
    TB = batch_tile
    nb = B // TB

    k_t, k_noise = jax.random.split(key)
    t = jax.random.randint(k_t, (B,), 0, sched["num_timesteps"])
    noise = jax.random.normal(k_noise, x_start.shape, x_start.dtype)

    sa = sched["sqrt_alphas_cumprod"][t]
    s1ma = sched["sqrt_one_minus_alphas_cumprod"][t]
    coefs = jnp.stack([sa, s1ma, t.astype(jnp.float32)], axis=1)      # [B, 3]

    batch_map = lambda b, l: (b, 0)
    const_map = lambda b, l: (0, 0)
    layer_map = lambda b, l: (l, 0, 0)

    in_specs = [
        pl.BlockSpec((TB, C), batch_map),          # x_start
        pl.BlockSpec((TB, C), batch_map),          # noise
        pl.BlockSpec((TB, 3), batch_map),          # packed sa / s1ma / t_float
        pl.BlockSpec((TB, P), batch_map),          # protein_condition
        pl.BlockSpec((10, H), const_map),          # packed small vectors (f32)
        pl.BlockSpec((H, H), const_map),           # wt2 (bf16)
        pl.BlockSpec((P, H), const_map),           # wp1 (bf16)
        pl.BlockSpec((H, H), const_map),           # wp2 (bf16)
        pl.BlockSpec((C, H), const_map),           # wc  (bf16)
        pl.BlockSpec((H, C), const_map),           # wout (bf16)
        pl.BlockSpec((1, C), const_map),           # bout (f32)
        pl.BlockSpec((1, 6, H), layer_map),        # per-layer packed vectors (f32)
        pl.BlockSpec((1, 1, F4), layer_map),       # bf1 (f32)
        pl.BlockSpec((1, H, H), layer_map),        # wvo (bf16, folded V@O)
        pl.BlockSpec((1, H, F4), layer_map),       # wf1 (bf16)
        pl.BlockSpec((1, F4, H), layer_map),       # wf2 (bf16)
    ]
    out_specs = pl.BlockSpec((TB, C), batch_map)

    pred = pl.pallas_call(
        unet_kernel,
        out_shape=jax.ShapeDtypeStruct((B, C), jnp.float32),
        grid_spec=pltpu.PrefetchScalarGridSpec(
            num_scalar_prefetch=0,
            grid=(nb, L),
            in_specs=in_specs,
            out_specs=out_specs,
            scratch_shapes=[pltpu.VMEM((TB, H), jnp.float32),   # h (carried across layers)
                            pltpu.VMEM((TB, H), jnp.float32)],  # protein_emb
        ),
        compiler_params=pltpu.CompilerParams(
            dimension_semantics=("parallel", "arbitrary"),
            # working set is ~2 MiB at these shapes; budget kept well under v7x's 64 MiB.
            vmem_limit_bytes=48 * 1024 * 1024,
        ),
    )(x_start, noise, coefs, protein_condition,
      kparams["small_vecs"], kparams["wt2"], kparams["wp1"], kparams["wp2"],
      kparams["wc"], kparams["wout"], kparams["bout"],
      kparams["layer_vecs"], kparams["bf1"],
      kparams["wvo"], kparams["wf1"], kparams["wf2"])

    return noise, pred, t


# ------------------------------------------------------------------------------
# Pure-JAX reference (same packed bf16/folded params) for correctness checking
# ------------------------------------------------------------------------------
def unet_reference(x_start, noise, coefs, pc, kp):
    def ln(x, g, b, eps=1e-5):
        mu = jnp.mean(x, axis=-1, keepdims=True)
        var = jnp.mean(jnp.square(x - mu), axis=-1, keepdims=True)
        return (x - mu) * jax.lax.rsqrt(var + eps) * g + b

    silu = lambda x: x * jax.nn.sigmoid(x)
    gelu = lambda x: 0.5 * x * (1.0 + jax.lax.erf(x * _INV_SQRT2))
    mm = lambda a, w: jnp.dot(a.astype(jnp.bfloat16), w, preferred_element_type=jnp.float32)

    sv = kp["small_vecs"]
    sa, s1ma, tf = coefs[:, 0:1], coefs[:, 1:2], coefs[:, 2:3]
    x_t = sa * x_start + s1ma * noise
    t_emb = mm(silu(tf * sv[0:1] + sv[1:2]), kp["wt2"]) + sv[2:3]
    p_h = ln(mm(pc, kp["wp1"]) + sv[3:4], sv[4:5], sv[5:6])
    pe = mm(silu(p_h), kp["wp2"]) + sv[6:7]
    h = mm(x_t, kp["wc"]) + sv[7:8] + t_emb
    L = kp["wvo"].shape[0]
    for i in range(L):
        lv = kp["layer_vecs"][i]
        kv_in = pe if i % 2 == 0 else h
        h = h + mm(ln(kv_in, lv[0:1], lv[1:2]), kp["wvo"][i]) + lv[2:3]
        f = gelu(mm(ln(h, lv[3:4], lv[4:5]), kp["wf1"][i]) + kp["bf1"][i])
        h = h + mm(f, kp["wf2"][i]) + lv[5:6]
    return mm(silu(ln(h, sv[8:9], sv[9:10])), kp["wout"]) + kp["bout"]


if __name__ == "__main__":
    # Small shapes consistent with the module (scaled down from the defaults),
    # but with a batch large enough to amortize weight streaming and tile over 2 cores.
    B = 128        # batch
    TB = 64        # batch tile per grid step (multiple of 8 sublanes)
    C = 128        # compound_dim
    H = 128        # hidden_dim (8 heads -> head_dim 16)
    PB, PS = 192, 64
    P = PB + PS    # protbert_dim + pseq2sites_dim
    L = 6          # num_layers (3 cross + 3 self, alternating)
    T = 50         # num_timesteps

    key = jax.random.PRNGKey(0)
    kp_key, kx, kc, kf = jax.random.split(key, 4)

    raw_params = init_params(kp_key, H, C, P, L)
    kparams = pack_params(raw_params)
    sched = make_scheduler(T)

    x_start = jax.random.normal(kx, (B, C), jnp.float32)
    protein_condition = jax.random.normal(kc, (B, P), jnp.float32)

    noise, pred_noise, t = protein_ligand_diffusion_forward(
        x_start, protein_condition, kparams, sched, kf, batch_tile=TB)
    jax.block_until_ready(pred_noise)

    assert pred_noise.shape == (B, C)
    assert noise.shape == (B, C)
    assert t.shape == (B,)
    assert jnp.all(jnp.isfinite(pred_noise))

    # Cross-check against a pure-JAX reference using the same packed params.
    sa = sched["sqrt_alphas_cumprod"][t]
    s1ma = sched["sqrt_one_minus_alphas_cumprod"][t]
    coefs = jnp.stack([sa, s1ma, t.astype(jnp.float32)], axis=1)
    ref = unet_reference(x_start, noise, coefs, protein_condition, kparams)
    err = float(jnp.max(jnp.abs(pred_noise - ref)))
    scale = float(jnp.max(jnp.abs(ref)))
    assert err <= 1e-3 * scale + 1e-4, f"kernel/reference mismatch: {err} vs scale {scale}"

    print("KERNEL_OK")
</pallas_src>

<mosaic_0001>
module attributes {stable_mosaic.version = 11 : i64} {
  func.func @unet_kernel(%arg0: i32, %arg1: i32, %arg2: memref<64x128xf32, #tpu.memory_space<vmem>>, %arg3: memref<64x128xf32, #tpu.memory_space<vmem>>, %arg4: memref<64x3xf32, #tpu.memory_space<vmem>>, %arg5: memref<64x256xf32, #tpu.memory_space<vmem>>, %arg6: memref<10x128xf32, #tpu.memory_space<vmem>>, %arg7: memref<128x128xbf16, #tpu.memory_space<vmem>>, %arg8: memref<256x128xbf16, #tpu.memory_space<vmem>>, %arg9: memref<128x128xbf16, #tpu.memory_space<vmem>>, %arg10: memref<128x128xbf16, #tpu.memory_space<vmem>>, %arg11: memref<128x128xbf16, #tpu.memory_space<vmem>>, %arg12: memref<1x128xf32, #tpu.memory_space<vmem>>, %arg13: memref<1x6x128xf32, #tpu.memory_space<vmem>>, %arg14: memref<1x1x512xf32, #tpu.memory_space<vmem>>, %arg15: memref<1x128x128xbf16, #tpu.memory_space<vmem>>, %arg16: memref<1x128x512xbf16, #tpu.memory_space<vmem>>, %arg17: memref<1x512x128xbf16, #tpu.memory_space<vmem>>, %arg18: memref<64x128xf32, #tpu.memory_space<vmem>>, %arg19: memref<64x128xf32, #tpu.memory_space<vmem>>, %arg20: memref<64x128xf32, #tpu.memory_space<vmem>>) attributes {dimension_semantics = [#tpu.dimension_semantics<parallel>, #tpu.dimension_semantics<arbitrary>], iteration_bounds = array<i64: 2, 6>, scalar_prefetch = 0 : i64, scratch_operands = 2 : i64, tpu.core_type = #tpu.core_type<tc>, window_params = [{transform_indices = @transform_0, window_bounds = array<i64: 64, 128>}, {transform_indices = @transform_1, window_bounds = array<i64: 64, 128>}, {transform_indices = @transform_2, window_bounds = array<i64: 64, 3>}, {transform_indices = @transform_3, window_bounds = array<i64: 64, 256>}, {pipeline_mode = #tpu.pipeline_mode<synchronous>, transform_indices = @transform_4, window_bounds = array<i64: 10, 128>}, {pipeline_mode = #tpu.pipeline_mode<synchronous>, transform_indices = @transform_5, window_bounds = array<i64: 128, 128>}, {pipeline_mode = #tpu.pipeline_mode<synchronous>, transform_indices = @transform_6, window_bounds = array<i64: 256, 128>}, {pipeline_mode = #tpu.pipeline_mode<synchronous>, transform_indices = @transform_7, window_bounds = array<i64: 128, 128>}, {pipeline_mode = #tpu.pipeline_mode<synchronous>, transform_indices = @transform_8, window_bounds = array<i64: 128, 128>}, {pipeline_mode = #tpu.pipeline_mode<synchronous>, transform_indices = @transform_9, window_bounds = array<i64: 128, 128>}, {pipeline_mode = #tpu.pipeline_mode<synchronous>, transform_indices = @transform_10, window_bounds = array<i64: 1, 128>}, {transform_indices = @transform_11, window_bounds = array<i64: 1, 6, 128>}, {transform_indices = @transform_12, window_bounds = array<i64: 1, 1, 512>}, {transform_indices = @transform_13, window_bounds = array<i64: 1, 128, 128>}, {transform_indices = @transform_14, window_bounds = array<i64: 1, 128, 512>}, {transform_indices = @transform_15, window_bounds = array<i64: 1, 512, 128>}, {transform_indices = @transform_16, window_bounds = array<i64: 64, 128>}]} {
    %c0_i32 = arith.constant 0 : i32
    %0 = arith.cmpi eq, %arg1, %c0_i32 : i32
    %1 = arith.extui %0 : i1 to i32
    %c0_i32_0 = arith.constant 0 : i32
    %2 = arith.cmpi ne, %1, %c0_i32_0 : i32
    scf.if %2 {
      %c0_43 = arith.constant 0 : index
      %c0_44 = arith.constant 0 : index
      %110 = vector.load %arg6[%c0_43, %c0_44] : memref<10x128xf32, #tpu.memory_space<vmem>>, vector<10x128xf32>
      %c0_45 = arith.constant 0 : index
      %c0_46 = arith.constant 0 : index
      %111 = vector.load %arg4[%c0_45, %c0_46] : memref<64x3xf32, #tpu.memory_space<vmem>>, vector<64x3xf32>
      %112 = vector.extract_strided_slice %111 {offsets = [0, 0], sizes = [64, 1], strides = [1, 1]} : vector<64x3xf32> to vector<64x1xf32>
      %113 = vector.extract_strided_slice %111 {offsets = [0, 1], sizes = [64, 1], strides = [1, 1]} : vector<64x3xf32> to vector<64x1xf32>
      %114 = vector.extract_strided_slice %111 {offsets = [0, 2], sizes = [64, 1], strides = [1, 1]} : vector<64x3xf32> to vector<64x1xf32>
      %c0_47 = arith.constant 0 : index
      %c0_48 = arith.constant 0 : index
      %115 = vector.load %arg2[%c0_47, %c0_48] : memref<64x128xf32, #tpu.memory_space<vmem>>, vector<64x128xf32>
      %116 = vector.broadcast %112 : vector<64x1xf32> to vector<64x128xf32>
      %117 = arith.mulf %116, %115 : vector<64x128xf32>
      %c0_49 = arith.constant 0 : index
      %c0_50 = arith.constant 0 : index
      %118 = vector.load %arg3[%c0_49, %c0_50] : memref<64x128xf32, #tpu.memory_space<vmem>>, vector<64x128xf32>
      %119 = vector.broadcast %113 : vector<64x1xf32> to vector<64x128xf32>
      %120 = arith.mulf %119, %118 : vector<64x128xf32>
      %121 = arith.addf %117, %120 : vector<64x128xf32>
      %122 = vector.extract_strided_slice %110 {offsets = [0, 0], sizes = [1, 128], strides = [1, 1]} : vector<10x128xf32> to vector<1x128xf32>
      %123 = vector.broadcast %114 : vector<64x1xf32> to vector<64x128xf32>
      %124 = vector.broadcast %122 : vector<1x128xf32> to vector<64x128xf32>
      %125 = arith.mulf %123, %124 : vector<64x128xf32>
      %126 = vector.extract_strided_slice %110 {offsets = [1, 0], sizes = [1, 128], strides = [1, 1]} : vector<10x128xf32> to vector<1x128xf32>
      %127 = vector.broadcast %126 : vector<1x128xf32> to vector<64x128xf32>
      %128 = arith.addf %125, %127 : vector<64x128xf32>
      %129 = arith.negf %128 : vector<64x128xf32>
      %130 = math.exp %129 : vector<64x128xf32>
      %cst_51 = arith.constant 1.000000e+00 : f32
      %131 = vector.broadcast %cst_51 : f32 to vector<64x128xf32>
      %132 = arith.addf %131, %130 : vector<64x128xf32>
      %133 = arith.divf %131, %132 : vector<64x128xf32>
      %134 = arith.mulf %128, %133 : vector<64x128xf32>
      %c0_52 = arith.constant 0 : index
      %c0_53 = arith.constant 0 : index
      %135 = vector.load %arg7[%c0_52, %c0_53] : memref<128x128xbf16, #tpu.memory_space<vmem>>, vector<128x128xbf16>
      %136 = arith.truncf %134 : vector<64x128xf32> to vector<64x128xbf16>
      %cst_54 = arith.constant dense<0.000000e+00> : vector<64x128xf32>
      %137 = tpu.matmul %136, %135, %cst_54 {dimension_numbers = #tpu.dot_dimension_numbers<[1], [0], [0], [1], [0, 0, 1, 1], [], []>} : vector<64x128xbf16>, vector<128x128xbf16>, vector<64x128xf32> -> vector<64x128xf32>
      %138 = vector.extract_strided_slice %110 {offsets = [2, 0], sizes = [1, 128], strides = [1, 1]} : vector<10x128xf32> to vector<1x128xf32>
      %139 = vector.broadcast %138 : vector<1x128xf32> to vector<64x128xf32>
      %140 = arith.addf %137, %139 : vector<64x128xf32>
      %c0_55 = arith.constant 0 : index
      %c0_56 = arith.constant 0 : index
      %141 = vector.load %arg5[%c0_55, %c0_56] : memref<64x256xf32, #tpu.memory_space<vmem>>, vector<64x256xf32>
      %c0_57 = arith.constant 0 : index
      %c0_58 = arith.constant 0 : index
      %142 = vector.load %arg8[%c0_57, %c0_58] : memref<256x128xbf16, #tpu.memory_space<vmem>>, vector<256x128xbf16>
      %143 = arith.truncf %141 : vector<64x256xf32> to vector<64x256xbf16>
      %cst_59 = arith.constant dense<0.000000e+00> : vector<64x128xf32>
      %144 = tpu.matmul %143, %142, %cst_59 {dimension_numbers = #tpu.dot_dimension_numbers<[1], [0], [0], [1], [0, 0, 1, 1], [], []>} : vector<64x256xbf16>, vector<256x128xbf16>, vector<64x128xf32> -> vector<64x128xf32>
      %145 = vector.extract_strided_slice %110 {offsets = [3, 0], sizes = [1, 128], strides = [1, 1]} : vector<10x128xf32> to vector<1x128xf32>
      %146 = vector.broadcast %145 : vector<1x128xf32> to vector<64x128xf32>
      %147 = arith.addf %144, %146 : vector<64x128xf32>
      %148 = vector.extract_strided_slice %110 {offsets = [4, 0], sizes = [1, 128], strides = [1, 1]} : vector<10x128xf32> to vector<1x128xf32>
      %149 = vector.extract_strided_slice %110 {offsets = [5, 0], sizes = [1, 128], strides = [1, 1]} : vector<10x128xf32> to vector<1x128xf32>
      %cst_60 = arith.constant dense<0.000000e+00> : vector<64xf32>
      %150 = vector.multi_reduction <add>, %147, %cst_60 [1] : vector<64x128xf32> to vector<64xf32>
      %151 = vector.shape_cast %150 : vector<64xf32> to vector<64x1xf32>
      %cst_61 = arith.constant 1.280000e+02 : f32
      %152 = vector.broadcast %cst_61 : f32 to vector<64x1xf32>
      %153 = arith.divf %151, %152 : vector<64x1xf32>
      %154 = vector.broadcast %153 : vector<64x1xf32> to vector<64x128xf32>
      %155 = arith.subf %147, %154 : vector<64x128xf32>
      %156 = arith.mulf %155, %155 : vector<64x128xf32>
      %cst_62 = arith.constant dense<0.000000e+00> : vector<64xf32>
      %157 = vector.multi_reduction <add>, %156, %cst_62 [1] : vector<64x128xf32> to vector<64xf32>
      %158 = vector.shape_cast %157 : vector<64xf32> to vector<64x1xf32>
      %cst_63 = arith.constant 1.280000e+02 : f32
      %159 = vector.broadcast %cst_63 : f32 to vector<64x1xf32>
      %160 = arith.divf %158, %159 : vector<64x1xf32>
      %161 = vector.broadcast %153 : vector<64x1xf32> to vector<64x128xf32>
      %162 = arith.subf %147, %161 : vector<64x128xf32>
      %cst_64 = arith.constant 9.99999974E-6 : f32
      %163 = vector.broadcast %cst_64 : f32 to vector<64x1xf32>
      %164 = arith.addf %160, %163 : vector<64x1xf32>
      %165 = math.rsqrt %164 : vector<64x1xf32>
      %166 = vector.broadcast %165 : vector<64x1xf32> to vector<64x128xf32>
      %167 = arith.mulf %162, %166 : vector<64x128xf32>
      %168 = vector.broadcast %148 : vector<1x128xf32> to vector<64x128xf32>
      %169 = arith.mulf %167, %168 : vector<64x128xf32>
      %170 = vector.broadcast %149 : vector<1x128xf32> to vector<64x128xf32>
      %171 = arith.addf %169, %170 : vector<64x128xf32>
      %172 = arith.negf %171 : vector<64x128xf32>
      %173 = math.exp %172 : vector<64x128xf32>
      %cst_65 = arith.constant 1.000000e+00 : f32
      %174 = vector.broadcast %cst_65 : f32 to vector<64x128xf32>
      %175 = arith.addf %174, %173 : vector<64x128xf32>
      %176 = arith.divf %174, %175 : vector<64x128xf32>
      %177 = arith.mulf %171, %176 : vector<64x128xf32>
      %c0_66 = arith.constant 0 : index
      %c0_67 = arith.constant 0 : index
      %178 = vector.load %arg9[%c0_66, %c0_67] : memref<128x128xbf16, #tpu.memory_space<vmem>>, vector<128x128xbf16>
      %179 = arith.truncf %177 : vector<64x128xf32> to vector<64x128xbf16>
      %cst_68 = arith.constant dense<0.000000e+00> : vector<64x128xf32>
      %180 = tpu.matmul %179, %178, %cst_68 {dimension_numbers = #tpu.dot_dimension_numbers<[1], [0], [0], [1], [0, 0, 1, 1], [], []>} : vector<64x128xbf16>, vector<128x128xbf16>, vector<64x128xf32> -> vector<64x128xf32>
      %181 = vector.extract_strided_slice %110 {offsets = [6, 0], sizes = [1, 128], strides = [1, 1]} : vector<10x128xf32> to vector<1x128xf32>
      %182 = vector.broadcast %181 : vector<1x128xf32> to vector<64x128xf32>
      %183 = arith.addf %180, %182 : vector<64x128xf32>
      %c0_69 = arith.constant 0 : index
      %c0_70 = arith.constant 0 : index
      %184 = vector.load %arg20[%c0_69, %c0_70] : memref<64x128xf32, #tpu.memory_space<vmem>>, vector<64x128xf32>
      tpu.vector_store %arg20[%c0_69, %c0_70], %183 {strides = array<i32>} : memref<64x128xf32, #tpu.memory_space<vmem>>, vector<64x128xf32>,
      %c0_71 = arith.constant 0 : index
      %c0_72 = arith.constant 0 : index
      %185 = vector.load %arg10[%c0_71, %c0_72] : memref<128x128xbf16, #tpu.memory_space<vmem>>, vector<128x128xbf16>
      %186 = arith.truncf %121 : vector<64x128xf32> to vector<64x128xbf16>
      %cst_73 = arith.constant dense<0.000000e+00> : vector<64x128xf32>
      %187 = tpu.matmul %186, %185, %cst_73 {dimension_numbers = #tpu.dot_dimension_numbers<[1], [0], [0], [1], [0, 0, 1, 1], [], []>} : vector<64x128xbf16>, vector<128x128xbf16>, vector<64x128xf32> -> vector<64x128xf32>
      %188 = vector.extract_strided_slice %110 {offsets = [7, 0], sizes = [1, 128], strides = [1, 1]} : vector<10x128xf32> to vector<1x128xf32>
      %189 = vector.broadcast %188 : vector<1x128xf32> to vector<64x128xf32>
      %190 = arith.addf %187, %189 : vector<64x128xf32>
      %191 = arith.addf %190, %140 : vector<64x128xf32>
      %c0_74 = arith.constant 0 : index
      %c0_75 = arith.constant 0 : index
      %192 = vector.load %arg19[%c0_74, %c0_75] : memref<64x128xf32, #tpu.memory_space<vmem>>, vector<64x128xf32>
      tpu.vector_store %arg19[%c0_74, %c0_75], %191 {strides = array<i32>} : memref<64x128xf32, #tpu.memory_space<vmem>>, vector<64x128xf32>,
    } else {
    }
    %c0 = arith.constant 0 : index
    %c0_1 = arith.constant 0 : index
    %c0_2 = arith.constant 0 : index
    %3 = vector.load %arg13[%c0, %c0_1, %c0_2] : memref<1x6x128xf32, #tpu.memory_space<vmem>>, vector<1x6x128xf32>
    %4 = vector.shape_cast %3 : vector<1x6x128xf32> to vector<6x128xf32>
    %5 = vector.extract_strided_slice %4 {offsets = [0, 0], sizes = [1, 128], strides = [1, 1]} : vector<6x128xf32> to vector<1x128xf32>
    %6 = vector.extract_strided_slice %4 {offsets = [1, 0], sizes = [1, 128], strides = [1, 1]} : vector<6x128xf32> to vector<1x128xf32>
    %7 = vector.extract_strided_slice %4 {offsets = [2, 0], sizes = [1, 128], strides = [1, 1]} : vector<6x128xf32> to vector<1x128xf32>
    %8 = vector.extract_strided_slice %4 {offsets = [3, 0], sizes = [1, 128], strides = [1, 1]} : vector<6x128xf32> to vector<1x128xf32>
    %9 = vector.extract_strided_slice %4 {offsets = [4, 0], sizes = [1, 128], strides = [1, 1]} : vector<6x128xf32> to vector<1x128xf32>
    %10 = vector.extract_strided_slice %4 {offsets = [5, 0], sizes = [1, 128], strides = [1, 1]} : vector<6x128xf32> to vector<1x128xf32>
    %c0_3 = arith.constant 0 : index
    %c0_4 = arith.constant 0 : index
    %11 = vector.load %arg19[%c0_3, %c0_4] : memref<64x128xf32, #tpu.memory_space<vmem>>, vector<64x128xf32>
    %c2_i32 = arith.constant 2 : i32
    %c0_i32_5 = arith.constant 0 : i32
    %12 = arith.cmpi eq, %c2_i32, %c0_i32_5 : i32
    %c1_i32 = arith.constant 1 : i32
    %13 = arith.select %12, %c1_i32, %c2_i32 : i32
    %14 = arith.remsi %arg1, %13 : i32
    %c0_i32_6 = arith.constant 0 : i32
    %15 = arith.cmpi ne, %14, %c0_i32_6 : i32
    %c0_i32_7 = arith.constant 0 : i32
    %16 = arith.cmpi slt, %14, %c0_i32_7 : i32
    %c0_i32_8 = arith.constant 0 : i32
    %17 = arith.cmpi slt, %13, %c0_i32_8 : i32
    %18 = arith.xori %16, %17 : i1
    %19 = arith.andi %18, %15 : i1
    %20 = arith.addi %14, %13 : i32
    %21 = arith.select %19, %20, %14 : i32
    %c0_i32_9 = arith.constant 0 : i32
    %22 = arith.cmpi eq, %21, %c0_i32_9 : i32
    %23 = arith.extui %22 : i1 to i32
    %24 = arith.sitofp %23 : i32 to f32
    %c0_10 = arith.constant 0 : index
    %c0_11 = arith.constant 0 : index
    %25 = vector.load %arg20[%c0_10, %c0_11] : memref<64x128xf32, #tpu.memory_space<vmem>>, vector<64x128xf32>
    %26 = vector.broadcast %24 : f32 to vector<64x128xf32>
    %27 = arith.mulf %26, %25 : vector<64x128xf32>
    %cst = arith.constant 1.000000e+00 : f32
    %28 = arith.subf %cst, %24 : f32
    %29 = vector.broadcast %28 : f32 to vector<64x128xf32>
    %30 = arith.mulf %29, %11 : vector<64x128xf32>
    %31 = arith.addf %27, %30 : vector<64x128xf32>
    %cst_12 = arith.constant dense<0.000000e+00> : vector<64xf32>
    %32 = vector.multi_reduction <add>, %31, %cst_12 [1] : vector<64x128xf32> to vector<64xf32>
    %33 = vector.shape_cast %32 : vector<64xf32> to vector<64x1xf32>
    %cst_13 = arith.constant 1.280000e+02 : f32
    %34 = vector.broadcast %cst_13 : f32 to vector<64x1xf32>
    %35 = arith.divf %33, %34 : vector<64x1xf32>
    %36 = vector.broadcast %35 : vector<64x1xf32> to vector<64x128xf32>
    %37 = arith.subf %31, %36 : vector<64x128xf32>
    %38 = arith.mulf %37, %37 : vector<64x128xf32>
    %cst_14 = arith.constant dense<0.000000e+00> : vector<64xf32>
    %39 = vector.multi_reduction <add>, %38, %cst_14 [1] : vector<64x128xf32> to vector<64xf32>
    %40 = vector.shape_cast %39 : vector<64xf32> to vector<64x1xf32>
    %cst_15 = arith.constant 1.280000e+02 : f32
    %41 = vector.broadcast %cst_15 : f32 to vector<64x1xf32>
    %42 = arith.divf %40, %41 : vector<64x1xf32>
    %43 = vector.broadcast %35 : vector<64x1xf32> to vector<64x128xf32>
    %44 = arith.subf %31, %43 : vector<64x128xf32>
    %cst_16 = arith.constant 9.99999974E-6 : f32
    %45 = vector.broadcast %cst_16 : f32 to vector<64x1xf32>
    %46 = arith.addf %42, %45 : vector<64x1xf32>
    %47 = math.rsqrt %46 : vector<64x1xf32>
    %48 = vector.broadcast %47 : vector<64x1xf32> to vector<64x128xf32>
    %49 = arith.mulf %44, %48 : vector<64x128xf32>
    %50 = vector.broadcast %5 : vector<1x128xf32> to vector<64x128xf32>
    %51 = arith.mulf %49, %50 : vector<64x128xf32>
    %52 = vector.broadcast %6 : vector<1x128xf32> to vector<64x128xf32>
    %53 = arith.addf %51, %52 : vector<64x128xf32>
    %c0_17 = arith.constant 0 : index
    %c0_18 = arith.constant 0 : index
    %c0_19 = arith.constant 0 : index
    %54 = vector.load %arg15[%c0_17, %c0_18, %c0_19] : memref<1x128x128xbf16, #tpu.memory_space<vmem>>, vector<1x128x128xbf16>
    %55 = vector.shape_cast %54 : vector<1x128x128xbf16> to vector<128x128xbf16>
    %56 = arith.truncf %53 : vector<64x128xf32> to vector<64x128xbf16>
    %cst_20 = arith.constant dense<0.000000e+00> : vector<64x128xf32>
    %57 = tpu.matmul %56, %55, %cst_20 {dimension_numbers = #tpu.dot_dimension_numbers<[1], [0], [0], [1], [0, 0, 1, 1], [], []>} : vector<64x128xbf16>, vector<128x128xbf16>, vector<64x128xf32> -> vector<64x128xf32>
    %58 = arith.addf %11, %57 : vector<64x128xf32>
    %59 = vector.broadcast %7 : vector<1x128xf32> to vector<64x128xf32>
    %60 = arith.addf %58, %59 : vector<64x128xf32>
    %cst_21 = arith.constant dense<0.000000e+00> : vector<64xf32>
    %61 = vector.multi_reduction <add>, %60, %cst_21 [1] : vector<64x128xf32> to vector<64xf32>
    %62 = vector.shape_cast %61 : vector<64xf32> to vector<64x1xf32>
    %cst_22 = arith.constant 1.280000e+02 : f32
    %63 = vector.broadcast %cst_22 : f32 to vector<64x1xf32>
    %64 = arith.divf %62, %63 : vector<64x1xf32>
    %65 = vector.broadcast %64 : vector<64x1xf32> to vector<64x128xf32>
    %66 = arith.subf %60, %65 : vector<64x128xf32>
    %67 = arith.mulf %66, %66 : vector<64x128xf32>
    %cst_23 = arith.constant dense<0.000000e+00> : vector<64xf32>
    %68 = vector.multi_reduction <add>, %67, %cst_23 [1] : vector<64x128xf32> to vector<64xf32>
    %69 = vector.shape_cast %68 : vector<64xf32> to vector<64x1xf32>
    %cst_24 = arith.constant 1.280000e+02 : f32
    %70 = vector.broadcast %cst_24 : f32 to vector<64x1xf32>
    %71 = arith.divf %69, %70 : vector<64x1xf32>
    %72 = vector.broadcast %64 : vector<64x1xf32> to vector<64x128xf32>
    %73 = arith.subf %60, %72 : vector<64x128xf32>
    %cst_25 = arith.constant 9.99999974E-6 : f32
    %74 = vector.broadcast %cst_25 : f32 to vector<64x1xf32>
    %75 = arith.addf %71, %74 : vector<64x1xf32>
    %76 = math.rsqrt %75 : vector<64x1xf32>
    %77 = vector.broadcast %76 : vector<64x1xf32> to vector<64x128xf32>
    %78 = arith.mulf %73, %77 : vector<64x128xf32>
    %79 = vector.broadcast %8 : vector<1x128xf32> to vector<64x128xf32>
    %80 = arith.mulf %78, %79 : vector<64x128xf32>
    %81 = vector.broadcast %9 : vector<1x128xf32> to vector<64x128xf32>
    %82 = arith.addf %80, %81 : vector<64x128xf32>
    %c0_26 = arith.constant 0 : index
    %c0_27 = arith.constant 0 : index
    %c0_28 = arith.constant 0 : index
    %83 = vector.load %arg16[%c0_26, %c0_27, %c0_28] : memref<1x128x512xbf16, #tpu.memory_space<vmem>>, vector<1x128x512xbf16>
    %84 = vector.shape_cast %83 : vector<1x128x512xbf16> to vector<128x512xbf16>
    %85 = arith.truncf %82 : vector<64x128xf32> to vector<64x128xbf16>
    %cst_29 = arith.constant dense<0.000000e+00> : vector<64x512xf32>
    %86 = tpu.matmul %85, %84, %cst_29 {dimension_numbers = #tpu.dot_dimension_numbers<[1], [0], [0], [1], [0, 0, 1, 1], [], []>} : vector<64x128xbf16>, vector<128x512xbf16>, vector<64x512xf32> -> vector<64x512xf32>
    %c0_30 = arith.constant 0 : index
    %c0_31 = arith.constant 0 : index
    %c0_32 = arith.constant 0 : index
    %87 = vector.load %arg14[%c0_30, %c0_31, %c0_32] : memref<1x1x512xf32, #tpu.memory_space<vmem>>, vector<1x1x512xf32>
    %88 = vector.shape_cast %87 : vector<1x1x512xf32> to vector<1x512xf32>
    %89 = vector.broadcast %88 : vector<1x512xf32> to vector<64x512xf32>
    %90 = arith.addf %86, %89 : vector<64x512xf32>
    %cst_33 = arith.constant 5.000000e-01 : f32
    %91 = vector.broadcast %cst_33 : f32 to vector<64x512xf32>
    %92 = arith.mulf %91, %90 : vector<64x512xf32>
    %cst_34 = arith.constant 0.707106769 : f32
    %93 = vector.broadcast %cst_34 : f32 to vector<64x512xf32>
    %94 = arith.mulf %90, %93 : vector<64x512xf32>
    %95 = math.erf %94 : vector<64x512xf32>
    %cst_35 = arith.constant 1.000000e+00 : f32
    %96 = vector.broadcast %cst_35 : f32 to vector<64x512xf32>
    %97 = arith.addf %96, %95 : vector<64x512xf32>
    %98 = arith.mulf %92, %97 : vector<64x512xf32>
    %c0_36 = arith.constant 0 : index
    %c0_37 = arith.constant 0 : index
    %c0_38 = arith.constant 0 : index
    %99 = vector.load %arg17[%c0_36, %c0_37, %c0_38] : memref<1x512x128xbf16, #tpu.memory_space<vmem>>, vector<1x512x128xbf16>
    %100 = vector.shape_cast %99 : vector<1x512x128xbf16> to vector<512x128xbf16>
    %101 = arith.truncf %98 : vector<64x512xf32> to vector<64x512xbf16>
    %cst_39 = arith.constant dense<0.000000e+00> : vector<64x128xf32>
    %102 = tpu.matmul %101, %100, %cst_39 {dimension_numbers = #tpu.dot_dimension_numbers<[1], [0], [0], [1], [0, 0, 1, 1], [], []>} : vector<64x512xbf16>, vector<512x128xbf16>, vector<64x128xf32> -> vector<64x128xf32>
    %103 = arith.addf %60, %102 : vector<64x128xf32>
    %104 = vector.broadcast %10 : vector<1x128xf32> to vector<64x128xf32>
    %105 = arith.addf %103, %104 : vector<64x128xf32>
    %c0_40 = arith.constant 0 : index
    %c0_41 = arith.constant 0 : index
    %106 = vector.load %arg19[%c0_40, %c0_41] : memref<64x128xf32, #tpu.memory_space<vmem>>, vector<64x128xf32>
    tpu.vector_store %arg19[%c0_40, %c0_41], %105 {strides = array<i32>} : memref<64x128xf32, #tpu.memory_space<vmem>>, vector<64x128xf32>,
    %c5_i32 = arith.constant 5 : i32
    %107 = arith.cmpi eq, %arg1, %c5_i32 : i32
    %108 = arith.extui %107 : i1 to i32
    %c0_i32_42 = arith.constant 0 : i32
    %109 = arith.cmpi ne, %108, %c0_i32_42 : i32
    scf.if %109 {
      %c0_43 = arith.constant 0 : index
      %c0_44 = arith.constant 0 : index
      %110 = vector.load %arg6[%c0_43, %c0_44] : memref<10x128xf32, #tpu.memory_space<vmem>>, vector<10x128xf32>
      %c0_45 = arith.constant 0 : index
      %c0_46 = arith.constant 0 : index
      %111 = vector.load %arg19[%c0_45, %c0_46] : memref<64x128xf32, #tpu.memory_space<vmem>>, vector<64x128xf32>
      %112 = vector.extract_strided_slice %110 {offsets = [8, 0], sizes = [1, 128], strides = [1, 1]} : vector<10x128xf32> to vector<1x128xf32>
      %113 = vector.extract_strided_slice %110 {offsets = [9, 0], sizes = [1, 128], strides = [1, 1]} : vector<10x128xf32> to vector<1x128xf32>
      %cst_47 = arith.constant dense<0.000000e+00> : vector<64xf32>
      %114 = vector.multi_reduction <add>, %111, %cst_47 [1] : vector<64x128xf32> to vector<64xf32>
      %115 = vector.shape_cast %114 : vector<64xf32> to vector<64x1xf32>
      %cst_48 = arith.constant 1.280000e+02 : f32
      %116 = vector.broadcast %cst_48 : f32 to vector<64x1xf32>
      %117 = arith.divf %115, %116 : vector<64x1xf32>
      %118 = vector.broadcast %117 : vector<64x1xf32> to vector<64x128xf32>
      %119 = arith.subf %111, %118 : vector<64x128xf32>
      %120 = arith.mulf %119, %119 : vector<64x128xf32>
      %cst_49 = arith.constant dense<0.000000e+00> : vector<64xf32>
      %121 = vector.multi_reduction <add>, %120, %cst_49 [1] : vector<64x128xf32> to vector<64xf32>
      %122 = vector.shape_cast %121 : vector<64xf32> to vector<64x1xf32>
      %cst_50 = arith.constant 1.280000e+02 : f32
      %123 = vector.broadcast %cst_50 : f32 to vector<64x1xf32>
      %124 = arith.divf %122, %123 : vector<64x1xf32>
      %125 = vector.broadcast %117 : vector<64x1xf32> to vector<64x128xf32>
      %126 = arith.subf %111, %125 : vector<64x128xf32>
      %cst_51 = arith.constant 9.99999974E-6 : f32
      %127 = vector.broadcast %cst_51 : f32 to vector<64x1xf32>
      %128 = arith.addf %124, %127 : vector<64x1xf32>
      %129 = math.rsqrt %128 : vector<64x1xf32>
      %130 = vector.broadcast %129 : vector<64x1xf32> to vector<64x128xf32>
      %131 = arith.mulf %126, %130 : vector<64x128xf32>
      %132 = vector.broadcast %112 : vector<1x128xf32> to vector<64x128xf32>
      %133 = arith.mulf %131, %132 : vector<64x128xf32>
      %134 = vector.broadcast %113 : vector<1x128xf32> to vector<64x128xf32>
      %135 = arith.addf %133, %134 : vector<64x128xf32>
      %136 = arith.negf %135 : vector<64x128xf32>
      %137 = math.exp %136 : vector<64x128xf32>
      %cst_52 = arith.constant 1.000000e+00 : f32
      %138 = vector.broadcast %cst_52 : f32 to vector<64x128xf32>
      %139 = arith.addf %138, %137 : vector<64x128xf32>
      %140 = arith.divf %138, %139 : vector<64x128xf32>
      %141 = arith.mulf %135, %140 : vector<64x128xf32>
      %c0_53 = arith.constant 0 : index
      %c0_54 = arith.constant 0 : index
      %142 = vector.load %arg11[%c0_53, %c0_54] : memref<128x128xbf16, #tpu.memory_space<vmem>>, vector<128x128xbf16>
      %143 = arith.truncf %141 : vector<64x128xf32> to vector<64x128xbf16>
      %cst_55 = arith.constant dense<0.000000e+00> : vector<64x128xf32>
      %144 = tpu.matmul %143, %142, %cst_55 {dimension_numbers = #tpu.dot_dimension_numbers<[1], [0], [0], [1], [0, 0, 1, 1], [], []>} : vector<64x128xbf16>, vector<128x128xbf16>, vector<64x128xf32> -> vector<64x128xf32>
      %c0_56 = arith.constant 0 : index
      %c0_57 = arith.constant 0 : index
      %145 = vector.load %arg12[%c0_56, %c0_57] : memref<1x128xf32, #tpu.memory_space<vmem>>, vector<1x128xf32>
      %146 = vector.broadcast %145 : vector<1x128xf32> to vector<64x128xf32>
      %147 = arith.addf %144, %146 : vector<64x128xf32>
      %c0_58 = arith.constant 0 : index
      %c0_59 = arith.constant 0 : index
      %148 = vector.load %arg18[%c0_58, %c0_59] : memref<64x128xf32, #tpu.memory_space<vmem>>, vector<64x128xf32>
      tpu.vector_store %arg18[%c0_58, %c0_59], %147 {strides = array<i32>} : memref<64x128xf32, #tpu.memory_space<vmem>>, vector<64x128xf32>,
    } else {
    }
    return
  }
  func.func @transform_0(%arg0: i32, %arg1: i32) -> (i32, i32) {
    %c0_i32 = arith.constant 0 : i32
    %c0_i32_0 = arith.constant 0 : i32
    return %arg0, %c0_i32 : i32, i32
  }
  func.func @transform_1(%arg0: i32, %arg1: i32) -> (i32, i32) {
    %c0_i32 = arith.constant 0 : i32
    %c0_i32_0 = arith.constant 0 : i32
    return %arg0, %c0_i32 : i32, i32
  }
  func.func @transform_2(%arg0: i32, %arg1: i32) -> (i32, i32) {
    %c0_i32 = arith.constant 0 : i32
    %c0_i32_0 = arith.constant 0 : i32
    return %arg0, %c0_i32 : i32, i32
  }
  func.func @transform_3(%arg0: i32, %arg1: i32) -> (i32, i32) {
    %c0_i32 = arith.constant 0 : i32
    %c0_i32_0 = arith.constant 0 : i32
    return %arg0, %c0_i32 : i32, i32
  }
  func.func @transform_4(%arg0: i32, %arg1: i32) -> (i32, i32) {
    %c0_i32 = arith.constant 0 : i32
    %c0_i32_0 = arith.constant 0 : i32
    %c0_i32_1 = arith.constant 0 : i32
    return %c0_i32, %c0_i32_0 : i32, i32
  }
  func.func @transform_5(%arg0: i32, %arg1: i32) -> (i32, i32) {
    %c0_i32 = arith.constant 0 : i32
    %c0_i32_0 = arith.constant 0 : i32
    %c0_i32_1 = arith.constant 0 : i32
    return %c0_i32, %c0_i32_0 : i32, i32
  }
  func.func @transform_6(%arg0: i32, %arg1: i32) -> (i32, i32) {
    %c0_i32 = arith.constant 0 : i32
    %c0_i32_0 = arith.constant 0 : i32
    %c0_i32_1 = arith.constant 0 : i32
    return %c0_i32, %c0_i32_0 : i32, i32
  }
  func.func @transform_7(%arg0: i32, %arg1: i32) -> (i32, i32) {
    %c0_i32 = arith.constant 0 : i32
    %c0_i32_0 = arith.constant 0 : i32
    %c0_i32_1 = arith.constant 0 : i32
    return %c0_i32, %c0_i32_0 : i32, i32
  }
  func.func @transform_8(%arg0: i32, %arg1: i32) -> (i32, i32) {
    %c0_i32 = arith.constant 0 : i32
    %c0_i32_0 = arith.constant 0 : i32
    %c0_i32_1 = arith.constant 0 : i32
    return %c0_i32, %c0_i32_0 : i32, i32
  }
  func.func @transform_9(%arg0: i32, %arg1: i32) -> (i32, i32) {
    %c0_i32 = arith.constant 0 : i32
    %c0_i32_0 = arith.constant 0 : i32
    %c0_i32_1 = arith.constant 0 : i32
    return %c0_i32, %c0_i32_0 : i32, i32
  }
  func.func @transform_10(%arg0: i32, %arg1: i32) -> (i32, i32) {
    %c0_i32 = arith.constant 0 : i32
    %c0_i32_0 = arith.constant 0 : i32
    %c0_i32_1 = arith.constant 0 : i32
    return %c0_i32, %c0_i32_0 : i32, i32
  }
  func.func @transform_11(%arg0: i32, %arg1: i32) -> (i32, i32, i32) {
    %c0_i32 = arith.constant 0 : i32
    %c0_i32_0 = arith.constant 0 : i32
    %c0_i32_1 = arith.constant 0 : i32
    return %arg1, %c0_i32, %c0_i32_0 : i32, i32, i32
  }
  func.func @transform_12(%arg0: i32, %arg1: i32) -> (i32, i32, i32) {
    %c0_i32 = arith.constant 0 : i32
    %c0_i32_0 = arith.constant 0 : i32
    %c0_i32_1 = arith.constant 0 : i32
    return %arg1, %c0_i32, %c0_i32_0 : i32, i32, i32
  }
  func.func @transform_13(%arg0: i32, %arg1: i32) -> (i32, i32, i32) {
    %c0_i32 = arith.constant 0 : i32
    %c0_i32_0 = arith.constant 0 : i32
    %c0_i32_1 = arith.constant 0 : i32
    return %arg1, %c0_i32, %c0_i32_0 : i32, i32, i32
  }
  func.func @transform_14(%arg0: i32, %arg1: i32) -> (i32, i32, i32) {
    %c0_i32 = arith.constant 0 : i32
    %c0_i32_0 = arith.constant 0 : i32
    %c0_i32_1 = arith.constant 0 : i32
    return %arg1, %c0_i32, %c0_i32_0 : i32, i32, i32
  }
  func.func @transform_15(%arg0: i32, %arg1: i32) -> (i32, i32, i32) {
    %c0_i32 = arith.constant 0 : i32
    %c0_i32_0 = arith.constant 0 : i32
    %c0_i32_1 = arith.constant 0 : i32
    return %arg1, %c0_i32, %c0_i32_0 : i32, i32, i32
  }
  func.func @transform_16(%arg0: i32, %arg1: i32) -> (i32, i32) {
    %c0_i32 = arith.constant 0 : i32
    %c0_i32_0 = arith.constant 0 : i32
    return %arg0, %c0_i32 : i32, i32
  }
}

</mosaic_0001>

<llo_original>
// kernel: tpu_custom_call.1
$region0: #{tpu_custom_call.1}
  #allocation0 [shape = 'u32[]', space=smem, size = 0x4, offset = 0x4, fixed_abs, tag = 'smem constant byte address 0x4 - core index']
  #allocation1 [shape = 'u32[144,128]{1,0:T(1,128)}', space=vmem, size = 0x12000, scoped, tag = 'internal scratch']
  #allocation2 [shape = 'f32[64,128]{1,0:T(8,128)}', space=vmem, size = 0x8000, scoped, tag = 'scratch operand']
  #allocation3 [shape = 'f32[64,128]{1,0:T(8,128)}', space=vmem, size = 0x8000, scoped, tag = 'scratch operand']
  %s0 = inlined_call_operand.vmem [shape: f32[128,128], index: 0, kind: input, shape index: {}]
  %s1 = inlined_call_operand.hbm [shape: f32[128,128], index: 1, kind: input, shape index: {}]
  %s2 = inlined_call_operand.vmem [shape: f32[128,3], index: 2, kind: input, shape index: {}]
  %s3 = inlined_call_operand.hbm [shape: f32[128,256], index: 3, kind: input, shape index: {}]
  %s4 = inlined_call_operand.hbm [shape: f32[10,128], index: 4, kind: input, shape index: {}]
  %s5 = inlined_call_operand.hbm [shape: bf16[128,128], index: 5, kind: input, shape index: {}]
  %s6 = inlined_call_operand.hbm [shape: bf16[256,128], index: 6, kind: input, shape index: {}]
  %s7 = inlined_call_operand.hbm [shape: bf16[128,128], index: 7, kind: input, shape index: {}]
  %s8 = inlined_call_operand.hbm [shape: bf16[128,128], index: 8, kind: input, shape index: {}]
  %s9 = inlined_call_operand.hbm [shape: bf16[128,128], index: 9, kind: input, shape index: {}]
  %s10 = inlined_call_operand.vmem [shape: f32[1,128], index: 10, kind: input, shape index: {}]
  %s11 = inlined_call_operand.hbm [shape: f32[6,6,128], index: 11, kind: input, shape index: {}]
  %s12 = inlined_call_operand.vmem [shape: f32[6,1,512], index: 12, kind: input, shape index: {}]
  %s13 = inlined_call_operand.hbm [shape: bf16[6,128,128], index: 13, kind: input, shape index: {}]
  %s14 = inlined_call_operand.hbm [shape: bf16[6,128,512], index: 14, kind: input, shape index: {}]
  %s15 = inlined_call_operand.hbm [shape: bf16[6,512,128], index: 15, kind: input, shape index: {}]
  %s16 = inlined_call_operand.hbm [shape: f32[128,128], index: 16, kind: output, shape index: {}]
  %s17 = sld [smem:[#allocation0]]
  $region153: #{tpu_custom_call.1} parent=0
    _
  %s19 = ssub.s32 1, %s17
  %s20 = scalar_select 0, %s19, %s17
  $region1: #{tpu_custom_call.1} parent=0
    #allocation4 [shape = 'u8[65536]{0}', space=vmem, size = 0x10000, scoped, tag = 'input window, operand 1']
    #allocation5 [shape = 's32[2]{0}', space=sflag, size = 0x8, scoped, tag = 'scoped memory for tpu_custom_call.1']
    #allocation6 [shape = 's32[2]{0}', space=sflag, size = 0x8, scoped, tag = 'scoped memory for tpu_custom_call.1']
    #allocation7 [shape = 'u8[131072]{0}', space=vmem, size = 0x20000, scoped, tag = 'input window, operand 3']
    #allocation8 [shape = 's32[2]{0}', space=sflag, size = 0x8, scoped, tag = 'scoped memory for tpu_custom_call.1']
    #allocation9 [shape = 'u8[8192]{0}', space=vmem, size = 0x2000, scoped, tag = 'input window, operand 4, single buffered']
    #allocation10 [shape = 'u8[32768]{0}', space=vmem, size = 0x8000, scoped, tag = 'input window, operand 5, single buffered']
    #allocation11 [shape = 's32[1]{0}', space=sflag, size = 0x4, scoped, tag = 'scoped memory for tpu_custom_call.1']
    #allocation12 [shape = 'u8[65536]{0}', space=vmem, size = 0x10000, scoped, tag = 'input window, operand 6, single buffered']
    #allocation13 [shape = 'u8[32768]{0}', space=vmem, size = 0x8000, scoped, tag = 'input window, operand 7, single buffered']
    #allocation14 [shape = 's32[1]{0}', space=sflag, size = 0x4, scoped, tag = 'scoped memory for tpu_custom_call.1']
    #allocation15 [shape = 'u8[32768]{0}', space=vmem, size = 0x8000, scoped, tag = 'input window, operand 8, single buffered']
    #allocation16 [shape = 'u8[32768]{0}', space=vmem, size = 0x8000, scoped, tag = 'input window, operand 9, single buffered']
    #allocation17 [shape = 's32[1]{0}', space=sflag, size = 0x4, scoped, tag = 'scoped memory for tpu_custom_call.1']
    #allocation18 [shape = 'u8[8192]{0}', space=vmem, size = 0x2000, scoped, tag = 'input window, operand 11']
    #allocation19 [shape = 'u8[65536]{0}', space=vmem, size = 0x10000, scoped, tag = 'input window, operand 13']
    #allocation20 [shape = 'u8[262144]{0}', space=vmem, size = 0x40000, scoped, tag = 'input window, operand 14']
    #allocation21 [shape = 'u8[262144]{0}', space=vmem, size = 0x40000, scoped, tag = 'input window, operand 15']
    #allocation22 [shape = 'u8[65536]{0}', space=vmem, size = 0x10000, scoped, tag = 'output window, operand 0']
    %21 = vsyncpa [#allocation5], 0
    %s22 = scalar_lea.sflag [#allocation5], 1
    %23 = vsyncpa %s22, 0
    %24 = vsyncpa [#allocation8], 0
    %s25 = scalar_lea.sflag [#allocation8], 1
    %26 = vsyncpa %s25, 0
    %27 = vsyncpa [#allocation11], 0
    %28 = vsyncpa [#allocation14], 0
    %29 = vsyncpa [#allocation17], 0
    %30 = vsyncpa [#allocation6], 0
    %s31 = scalar_lea.sflag [#allocation6], 1
    %32 = vsyncpa %s31, 0
    loop: start=0, step=1, limit=14
    $region2: #{tpu_custom_call.1} parent=1 // loop_pre_header
      _
    $region3: #{tpu_custom_call.1} parent=1 // loop_header
      %s34 = sphi 0, %s38
      %p35 = scmp.ge.s32.totalorder %s34, 14
      %s41 = sphi 0, %s53
      %s42 = sphi 0, %s49
      %s43 = sphi 0, %s41
      %s44 = sphi 0, %s42
      %s45 = sphi 0, %s43
      %s46 = sphi 0, %s44
      %s56 = sphi 0, %s58
      %s59 = sphi 0, %s56
      %s60 = sphi 0, %s59
      %s76 = sphi 0, %s60
      %s82 = sphi 0, %s84
      %s85 = sphi 0, %s82
      %s86 = sphi 0, %s85
      %s102 = sphi 0, %s86
      %s108 = sphi 0, %s110
      %s111 = sphi 0, %s108
      %s112 = sphi 0, %s111
      %s128 = sphi 0, %s112
      %s134 = sphi 0, %s136
      %s137 = sphi 0, %s134
      %s138 = sphi 0, %s137
      %s154 = sphi 0, %s138
      %s158 = sphi 0, %s158
      %s160 = sphi 0, %s158
      %s161 = sphi 0, %s160
      %s175 = sphi 0, %s161
      %s179 = sphi 0, %s179
      %s181 = sphi 0, %s179
      %s182 = sphi 0, %s181
      %s196 = sphi 0, %s182
      %s200 = sphi 0, %s200
      %s202 = sphi 0, %s200
      %s203 = sphi 0, %s202
      %s217 = sphi 0, %s203
      %s221 = sphi 0, %s221
      %s223 = sphi 0, %s221
      %s224 = sphi 0, %s223
      %s238 = sphi 0, %s224
      %s242 = sphi 0, %s242
      %s244 = sphi 0, %s242
      %s245 = sphi 0, %s244
      %s259 = sphi 0, %s245
      %s263 = sphi 0, %s263
      %s265 = sphi 0, %s263
      %s266 = sphi 0, %s265
      %s280 = sphi 0, %s266
      %s284 = sphi 0, %s284
      %s286 = sphi 0, %s284
      %s287 = sphi 0, %s286
      %s301 = sphi 0, %s287
      %s307 = sphi 0, %s309
      %s310 = sphi 0, %s307
      %s311 = sphi 0, %s310
      %s327 = sphi 0, %s311
      %s333 = sphi 0, %s335
      %s336 = sphi 0, %s333
      %s337 = sphi 0, %s336
      %s353 = sphi 0, %s337
      %s359 = sphi 0, %s361
      %s362 = sphi 0, %s359
      %s363 = sphi 0, %s362
      %s379 = sphi 0, %s363
      %s385 = sphi 0, %s387
      %s388 = sphi 0, %s385
      %s389 = sphi 0, %s388
      %s405 = sphi 0, %s389
      %s411 = sphi 0, %s413
      %s414 = sphi 0, %s411
      %s415 = sphi 0, %s414
      %s431 = sphi 0, %s415
      %s437 = sphi 0, %s439
      %s440 = sphi 0, %s437
      %s441 = sphi 0, %s440
      %s457 = sphi 0, %s441
    $region4: #{tpu_custom_call.1} parent=1 // loop_header_branch
      %37 = sbr.rel (%p35) target = $region8
    $region5: #{tpu_custom_call.1} parent=1 // loop_body
      %s39 = ssub.s32 %s34, 1
      %s40 = ssub.s32 %s34, 2
      %s47 = sadd.s32 1, %s42
      %p48 = scmp.ge.s32.totalorder %s47, 6
      %s49 = scalar_select %p48, 0, %s47
      %s50 = sadd.s32 1, %s41
      %s51 = scalar_select %p48, %s50, %s41
      %p52 = scmp.ge.s32.totalorder %s51, 2
      %s53 = scalar_select %p52, 0, %s51
      %s54 = ssub.s32 %s41, %s53
      %p55 = scmp.eq.s32.totalorder %s54, 0
      %s57 = sadd.s32 %s56, 1
      %s58 = scalar_select %p55, %s56, %s57
      %p61 = pneg %p55
      %p62 = scmp.eq.s32.totalorder %s34, 11
      %p63 = por %p61, %p62
      %p64 = scmp.ne.s32.totalorder %s56, %s59
      %p65 = scmp.eq.s32.totalorder %s34, 0
      %p66 = por %p64, %p65
      %p67 = scmp.ne.s32.totalorder %s56, %s59
      %p68 = scmp.eq.s32.totalorder %s39, 11
      %p69 = por %p67, %p68
      %p70 = scmp.ne.s32.totalorder %s59, %s60
      %p71 = scmp.eq.s32.totalorder %s39, 0
      %p72 = por %p70, %p71
      %p73 = scmp.ne.s32.totalorder %s59, %s60
      %p74 = scmp.eq.s32.totalorder %s40, 11
      %p75 = por %p73, %p74
      %p77 = scmp.ne.s32.totalorder %s60, %s76
      %p78 = scmp.eq.s32.totalorder %s40, 0
      %p79 = por %p77, %p78
      %s80 = ssub.s32 %s41, %s53
      %p81 = scmp.eq.s32.totalorder %s80, 0
      %s83 = sadd.s32 %s82, 1
      %s84 = scalar_select %p81, %s82, %s83
      %p87 = pneg %p81
      %p88 = scmp.eq.s32.totalorder %s34, 11
      %p89 = por %p87, %p88
      %p90 = scmp.ne.s32.totalorder %s82, %s85
      %p91 = scmp.eq.s32.totalorder %s34, 0
      %p92 = por %p90, %p91
      %p93 = scmp.ne.s32.totalorder %s82, %s85
      %p94 = scmp.eq.s32.totalorder %s39, 11
      %p95 = por %p93, %p94
      %p96 = scmp.ne.s32.totalorder %s85, %s86
      %p97 = scmp.eq.s32.totalorder %s39, 0
      %p98 = por %p96, %p97
      %p99 = scmp.ne.s32.totalorder %s85, %s86
      %p100 = scmp.eq.s32.totalorder %s40, 11
      %p101 = por %p99, %p100
      %p103 = scmp.ne.s32.totalorder %s86, %s102
      %p104 = scmp.eq.s32.totalorder %s40, 0
      %p105 = por %p103, %p104
      %s106 = ssub.s32 %s41, %s53
      %p107 = scmp.eq.s32.totalorder %s106, 0
      %s109 = sadd.s32 %s108, 1
      %s110 = scalar_select %p107, %s108, %s109
      %p113 = pneg %p107
      %p114 = scmp.eq.s32.totalorder %s34, 11
      %p115 = por %p113, %p114
      %p116 = scmp.ne.s32.totalorder %s108, %s111
      %p117 = scmp.eq.s32.totalorder %s34, 0
      %p118 = por %p116, %p117
      %p119 = scmp.ne.s32.totalorder %s108, %s111
      %p120 = scmp.eq.s32.totalorder %s39, 11
      %p121 = por %p119, %p120
      %p122 = scmp.ne.s32.totalorder %s111, %s112
      %p123 = scmp.eq.s32.totalorder %s39, 0
      %p124 = por %p122, %p123
      %p125 = scmp.ne.s32.totalorder %s111, %s112
      %p126 = scmp.eq.s32.totalorder %s40, 11
      %p127 = por %p125, %p126
      %p129 = scmp.ne.s32.totalorder %s112, %s128
      %p130 = scmp.eq.s32.totalorder %s40, 0
      %p131 = por %p129, %p130
      %s132 = ssub.s32 %s41, %s53
      %p133 = scmp.eq.s32.totalorder %s132, 0
      %s135 = sadd.s32 %s134, 1
      %s136 = scalar_select %p133, %s134, %s135
      %p139 = pneg %p133
      %p140 = scmp.eq.s32.totalorder %s34, 11
      %p141 = por %p139, %p140
      %p142 = scmp.ne.s32.totalorder %s134, %s137
      %p143 = scmp.eq.s32.totalorder %s34, 0
      %p144 = por %p142, %p143
      %p145 = scmp.ne.s32.totalorder %s134, %s137
      %p146 = scmp.eq.s32.totalorder %s39, 11
      %p147 = por %p145, %p146
      %p148 = scmp.ne.s32.totalorder %s137, %s138
      %p149 = scmp.eq.s32.totalorder %s39, 0
      %p150 = por %p148, %p149
      %p151 = scmp.ne.s32.totalorder %s137, %s138
      %p152 = scmp.eq.s32.totalorder %s40, 11
      %p153 = por %p151, %p152
      %p155 = scmp.ne.s32.totalorder %s138, %s154
      %p156 = scmp.eq.s32.totalorder %s40, 0
      %p157 = por %p155, %p156
      %s159 = sadd.s32 %s158, 1
      %p162 = scmp.eq.s32.totalorder %s34, 11
      %p163 = scmp.ne.s32.totalorder %s158, %s160
      %p164 = scmp.eq.s32.totalorder %s34, 0
      %p165 = por %p163, %p164
      %p166 = scmp.ne.s32.totalorder %s158, %s160
      %p167 = scmp.eq.s32.totalorder %s39, 11
      %p168 = por %p166, %p167
      %p169 = scmp.ne.s32.totalorder %s160, %s161
      %p170 = scmp.eq.s32.totalorder %s39, 0
      %p171 = por %p169, %p170
      %p172 = scmp.ne.s32.totalorder %s160, %s161
      %p173 = scmp.eq.s32.totalorder %s40, 11
      %p174 = por %p172, %p173
      %p176 = scmp.ne.s32.totalorder %s161, %s175
      %p177 = scmp.eq.s32.totalorder %s40, 0
      %p178 = por %p176, %p177
      %s180 = sadd.s32 %s179, 1
      %p183 = scmp.eq.s32.totalorder %s34, 11
      %p184 = scmp.ne.s32.totalorder %s179, %s181
      %p185 = scmp.eq.s32.totalorder %s34, 0
      %p186 = por %p184, %p185
      %p187 = scmp.ne.s32.totalorder %s179, %s181
      %p188 = scmp.eq.s32.totalorder %s39, 11
      %p189 = por %p187, %p188
      %p190 = scmp.ne.s32.totalorder %s181, %s182
      %p191 = scmp.eq.s32.totalorder %s39, 0
      %p192 = por %p190, %p191
      %p193 = scmp.ne.s32.totalorder %s181, %s182
      %p194 = scmp.eq.s32.totalorder %s40, 11
      %p195 = por %p193, %p194
      %p197 = scmp.ne.s32.totalorder %s182, %s196
      %p198 = scmp.eq.s32.totalorder %s40, 0
      %p199 = por %p197, %p198
      %s201 = sadd.s32 %s200, 1
      %p204 = scmp.eq.s32.totalorder %s34, 11
      %p205 = scmp.ne.s32.totalorder %s200, %s202
      %p206 = scmp.eq.s32.totalorder %s34, 0
      %p207 = por %p205, %p206
      %p208 = scmp.ne.s32.totalorder %s200, %s202
      %p209 = scmp.eq.s32.totalorder %s39, 11
      %p210 = por %p208, %p209
      %p211 = scmp.ne.s32.totalorder %s202, %s203
      %p212 = scmp.eq.s32.totalorder %s39, 0
      %p213 = por %p211, %p212
      %p214 = scmp.ne.s32.totalorder %s202, %s203
      %p215 = scmp.eq.s32.totalorder %s40, 11
      %p216 = por %p214, %p215
      %p218 = scmp.ne.s32.totalorder %s203, %s217
      %p219 = scmp.eq.s32.totalorder %s40, 0
      %p220 = por %p218, %p219
      %s222 = sadd.s32 %s221, 1
      %p225 = scmp.eq.s32.totalorder %s34, 11
      %p226 = scmp.ne.s32.totalorder %s221, %s223
      %p227 = scmp.eq.s32.totalorder %s34, 0
      %p228 = por %p226, %p227
      %p229 = scmp.ne.s32.totalorder %s221, %s223
      %p230 = scmp.eq.s32.totalorder %s39, 11
      %p231 = por %p229, %p230
      %p232 = scmp.ne.s32.totalorder %s223, %s224
      %p233 = scmp.eq.s32.totalorder %s39, 0
      %p234 = por %p232, %p233
      %p235 = scmp.ne.s32.totalorder %s223, %s224
      %p236 = scmp.eq.s32.totalorder %s40, 11
      %p237 = por %p235, %p236
      %p239 = scmp.ne.s32.totalorder %s224, %s238
      %p240 = scmp.eq.s32.totalorder %s40, 0
      %p241 = por %p239, %p240
      %s243 = sadd.s32 %s242, 1
      %p246 = scmp.eq.s32.totalorder %s34, 11
      %p247 = scmp.ne.s32.totalorder %s242, %s244
      %p248 = scmp.eq.s32.totalorder %s34, 0
      %p249 = por %p247, %p248
      %p250 = scmp.ne.s32.totalorder %s242, %s244
      %p251 = scmp.eq.s32.totalorder %s39, 11
      %p252 = por %p250, %p251
      %p253 = scmp.ne.s32.totalorder %s244, %s245
      %p254 = scmp.eq.s32.totalorder %s39, 0
      %p255 = por %p253, %p254
      %p256 = scmp.ne.s32.totalorder %s244, %s245
      %p257 = scmp.eq.s32.totalorder %s40, 11
      %p258 = por %p256, %p257
      %p260 = scmp.ne.s32.totalorder %s245, %s259
      %p261 = scmp.eq.s32.totalorder %s40, 0
      %p262 = por %p260, %p261
      %s264 = sadd.s32 %s263, 1
      %p267 = scmp.eq.s32.totalorder %s34, 11
      %p268 = scmp.ne.s32.totalorder %s263, %s265
      %p269 = scmp.eq.s32.totalorder %s34, 0
      %p270 = por %p268, %p269
      %p271 = scmp.ne.s32.totalorder %s263, %s265
      %p272 = scmp.eq.s32.totalorder %s39, 11
      %p273 = por %p271, %p272
      %p274 = scmp.ne.s32.totalorder %s265, %s266
      %p275 = scmp.eq.s32.totalorder %s39, 0
      %p276 = por %p274, %p275
      %p277 = scmp.ne.s32.totalorder %s265, %s266
      %p278 = scmp.eq.s32.totalorder %s40, 11
      %p279 = por %p277, %p278
      %p281 = scmp.ne.s32.totalorder %s266, %s280
      %p282 = scmp.eq.s32.totalorder %s40, 0
      %p283 = por %p281, %p282
      %s285 = sadd.s32 %s284, 1
      %p288 = scmp.eq.s32.totalorder %s34, 11
      %p289 = scmp.ne.s32.totalorder %s284, %s286
      %p290 = scmp.eq.s32.totalorder %s34, 0
      %p291 = por %p289, %p290
      %p292 = scmp.ne.s32.totalorder %s284, %s286
      %p293 = scmp.eq.s32.totalorder %s39, 11
      %p294 = por %p292, %p293
      %p295 = scmp.ne.s32.totalorder %s286, %s287
      %p296 = scmp.eq.s32.totalorder %s39, 0
      %p297 = por %p295, %p296
      %p298 = scmp.ne.s32.totalorder %s286, %s287
      %p299 = scmp.eq.s32.totalorder %s40, 11
      %p300 = por %p298, %p299
      %p302 = scmp.ne.s32.totalorder %s287, %s301
      %p303 = scmp.eq.s32.totalorder %s40, 0
      %p304 = por %p302, %p303
      %s305 = ssub.s32 %s42, %s49
      %p306 = scmp.eq.s32.totalorder %s305, 0
      %s308 = sadd.s32 %s307, 1
      %s309 = scalar_select %p306, %s307, %s308
      %p312 = pneg %p306
      %p313 = scmp.eq.s32.totalorder %s34, 11
      %p314 = por %p312, %p313
      %p315 = scmp.ne.s32.totalorder %s307, %s310
      %p316 = scmp.eq.s32.totalorder %s34, 0
      %p317 = por %p315, %p316
      %p318 = scmp.ne.s32.totalorder %s307, %s310
      %p319 = scmp.eq.s32.totalorder %s39, 11
      %p320 = por %p318, %p319
      %p321 = scmp.ne.s32.totalorder %s310, %s311
      %p322 = scmp.eq.s32.totalorder %s39, 0
      %p323 = por %p321, %p322
      %p324 = scmp.ne.s32.totalorder %s310, %s311
      %p325 = scmp.eq.s32.totalorder %s40, 11
      %p326 = por %p324, %p325
      %p328 = scmp.ne.s32.totalorder %s311, %s327
      %p329 = scmp.eq.s32.totalorder %s40, 0
      %p330 = por %p328, %p329
      %s331 = ssub.s32 %s42, %s49
      %p332 = scmp.eq.s32.totalorder %s331, 0
      %s334 = sadd.s32 %s333, 1
      %s335 = scalar_select %p332, %s333, %s334
      %p338 = pneg %p332
      %p339 = scmp.eq.s32.totalorder %s34, 11
      %p340 = por %p338, %p339
      %p341 = scmp.ne.s32.totalorder %s333, %s336
      %p342 = scmp.eq.s32.totalorder %s34, 0
      %p343 = por %p341, %p342
      %p344 = scmp.ne.s32.totalorder %s333, %s336
      %p345 = scmp.eq.s32.totalorder %s39, 11
      %p346 = por %p344, %p345
      %p347 = scmp.ne.s32.totalorder %s336, %s337
      %p348 = scmp.eq.s32.totalorder %s39, 0
      %p349 = por %p347, %p348
      %p350 = scmp.ne.s32.totalorder %s336, %s337
      %p351 = scmp.eq.s32.totalorder %s40, 11
      %p352 = por %p350, %p351
      %p354 = scmp.ne.s32.totalorder %s337, %s353
      %p355 = scmp.eq.s32.totalorder %s40, 0
      %p356 = por %p354, %p355
      %s357 = ssub.s32 %s42, %s49
      %p358 = scmp.eq.s32.totalorder %s357, 0
      %s360 = sadd.s32 %s359, 1
      %s361 = scalar_select %p358, %s359, %s360
      %p364 = pneg %p358
      %p365 = scmp.eq.s32.totalorder %s34, 11
      %p366 = por %p364, %p365
      %p367 = scmp.ne.s32.totalorder %s359, %s362
      %p368 = scmp.eq.s32.totalorder %s34, 0
      %p369 = por %p367, %p368
      %p370 = scmp.ne.s32.totalorder %s359, %s362
      %p371 = scmp.eq.s32.totalorder %s39, 11
      %p372 = por %p370, %p371
      %p373 = scmp.ne.s32.totalorder %s362, %s363
      %p374 = scmp.eq.s32.totalorder %s39, 0
      %p375 = por %p373, %p374
      %p376 = scmp.ne.s32.totalorder %s362, %s363
      %p377 = scmp.eq.s32.totalorder %s40, 11
      %p378 = por %p376, %p377
      %p380 = scmp.ne.s32.totalorder %s363, %s379
      %p381 = scmp.eq.s32.totalorder %s40, 0
      %p382 = por %p380, %p381
      %s383 = ssub.s32 %s42, %s49
      %p384 = scmp.eq.s32.totalorder %s383, 0
      %s386 = sadd.s32 %s385, 1
      %s387 = scalar_select %p384, %s385, %s386
      %p390 = pneg %p384
      %p391 = scmp.eq.s32.totalorder %s34, 11
      %p392 = por %p390, %p391
      %p393 = scmp.ne.s32.totalorder %s385, %s388
      %p394 = scmp.eq.s32.totalorder %s34, 0
      %p395 = por %p393, %p394
      %p396 = scmp.ne.s32.totalorder %s385, %s388
      %p397 = scmp.eq.s32.totalorder %s39, 11
      %p398 = por %p396, %p397
      %p399 = scmp.ne.s32.totalorder %s388, %s389
      %p400 = scmp.eq.s32.totalorder %s39, 0
      %p401 = por %p399, %p400
      %p402 = scmp.ne.s32.totalorder %s388, %s389
      %p403 = scmp.eq.s32.totalorder %s40, 11
      %p404 = por %p402, %p403
      %p406 = scmp.ne.s32.totalorder %s389, %s405
      %p407 = scmp.eq.s32.totalorder %s40, 0
      %p408 = por %p406, %p407
      %s409 = ssub.s32 %s42, %s49
      %p410 = scmp.eq.s32.totalorder %s409, 0
      %s412 = sadd.s32 %s411, 1
      %s413 = scalar_select %p410, %s411, %s412
      %p416 = pneg %p410
      %p417 = scmp.eq.s32.totalorder %s34, 11
      %p418 = por %p416, %p417
      %p419 = scmp.ne.s32.totalorder %s411, %s414
      %p420 = scmp.eq.s32.totalorder %s34, 0
      %p421 = por %p419, %p420
      %p422 = scmp.ne.s32.totalorder %s411, %s414
      %p423 = scmp.eq.s32.totalorder %s39, 11
      %p424 = por %p422, %p423
      %p425 = scmp.ne.s32.totalorder %s414, %s415
      %p426 = scmp.eq.s32.totalorder %s39, 0
      %p427 = por %p425, %p426
      %p428 = scmp.ne.s32.totalorder %s414, %s415
      %p429 = scmp.eq.s32.totalorder %s40, 11
      %p430 = por %p428, %p429
      %p432 = scmp.ne.s32.totalorder %s415, %s431
      %p433 = scmp.eq.s32.totalorder %s40, 0
      %p434 = por %p432, %p433
      %s435 = ssub.s32 %s41, %s53
      %p436 = scmp.eq.s32.totalorder %s435, 0
      %s438 = sadd.s32 %s437, 1
      %s439 = scalar_select %p436, %s437, %s438
      %p442 = pneg %p436
      %p443 = scmp.eq.s32.totalorder %s34, 11
      %p444 = por %p442, %p443
      %p445 = scmp.ne.s32.totalorder %s437, %s440
      %p446 = scmp.eq.s32.totalorder %s34, 0
      %p447 = por %p445, %p446
      %p448 = scmp.ne.s32.totalorder %s437, %s440
      %p449 = scmp.eq.s32.totalorder %s39, 11
      %p450 = por %p448, %p449
      %p451 = scmp.ne.s32.totalorder %s440, %s441
      %p452 = scmp.eq.s32.totalorder %s39, 0
      %p453 = por %p451, %p452
      %p454 = scmp.ne.s32.totalorder %s440, %s441
      %p455 = scmp.eq.s32.totalorder %s40, 11
      %p456 = por %p454, %p455
      %p458 = scmp.ne.s32.totalorder %s441, %s457
      %p459 = scmp.eq.s32.totalorder %s40, 0
      %p460 = por %p458, %p459
      %p461 = scmp.le.s32.totalorder 1, %s34
      %p462 = scmp.lt.s32.totalorder %s34, 13
      %p463 = pnand %p461, %p462
      %p464 = pneg %p463
      // Predicated region
      $region9: #{tpu_custom_call.1} parent=5 // pred_check
        _
      $region10: #{tpu_custom_call.1} parent=5 // pred_check_branch
        %466 = sbr.rel (%p463) target = $region12
      $region11: #{tpu_custom_call.1} parent=5 // pred_region
        %s467 = ssub.s32 %s34, 1
        // Predicated region
        $region13: #{tpu_custom_call.1} parent=11 // pred_check
          %p468 = pneg %p171
        $region14: #{tpu_custom_call.1} parent=11 // pred_check_branch
          %470 = sbr.rel (%p468) target = $region16
        $region15: #{tpu_custom_call.1} parent=11 // pred_region
          %s472 = ssub.s32 256, 256
          %473 = vsyncadd [#allocation8], %s472
          %s474 = sshll.u32 [#allocation9], 4
          %s475 = int_to_ptr.vmem [resolvable:$true] %s474
          %480 = dma.hbm_to_vmem [thread:$0]  %s4, 256, %s475, [#allocation8], 128, 128, 8
        $region16: #{tpu_custom_call.1} parent=11 // pred_fallthru
          _
        // Predicated region
        $region17: #{tpu_custom_call.1} parent=11 // pred_check
          %p481 = pneg %p192
        $region18: #{tpu_custom_call.1} parent=11 // pred_check_branch
          %483 = sbr.rel (%p481) target = $region20
        $region19: #{tpu_custom_call.1} parent=11 // pred_region
          %s485 = ssub.s32 1024, 1024
          %486 = vsyncadd [#allocation11], %s485
          %s487 = sshll.u32 [#allocation10], 4
          %s488 = int_to_ptr.vmem [resolvable:$true] %s487
          %493 = dma.hbm_to_vmem [thread:$0]  %s5, 1024, %s488, [#allocation11], 64, 64, 4
        $region20: #{tpu_custom_call.1} parent=11 // pred_fallthru
          _
        // Predicated region
        $region21: #{tpu_custom_call.1} parent=11 // pred_check
          %p494 = pneg %p213
        $region22: #{tpu_custom_call.1} parent=11 // pred_check_branch
          %496 = sbr.rel (%p494) target = $region24
        $region23: #{tpu_custom_call.1} parent=11 // pred_region
          %s498 = ssub.s32 2048, 2048
          %499 = vsyncadd [#allocation11], %s498
          %s500 = sshll.u32 [#allocation12], 4
          %s501 = int_to_ptr.vmem [resolvable:$true] %s500
          %506 = dma.hbm_to_vmem [thread:$0]  %s6, 2048, %s501, [#allocation11], 64, 64, 4
        $region24: #{tpu_custom_call.1} parent=11 // pred_fallthru
          _
        // Predicated region
        $region25: #{tpu_custom_call.1} parent=11 // pred_check
          %p507 = pneg %p234
        $region26: #{tpu_custom_call.1} parent=11 // pred_check_branch
          %509 = sbr.rel (%p507) target = $region28
        $region27: #{tpu_custom_call.1} parent=11 // pred_region
          %s511 = ssub.s32 1024, 1024
          %512 = vsyncadd [#allocation14], %s511
          %s513 = sshll.u32 [#allocation13], 4
          %s514 = int_to_ptr.vmem [resolvable:$true] %s513
          %519 = dma.hbm_to_vmem [thread:$0]  %s7, 1024, %s514, [#allocation14], 64, 64, 4
        $region28: #{tpu_custom_call.1} parent=11 // pred_fallthru
          _
        // Predicated region
        $region29: #{tpu_custom_call.1} parent=11 // pred_check
          %p520 = pneg %p255
        $region30: #{tpu_custom_call.1} parent=11 // pred_check_branch
          %522 = sbr.rel (%p520) target = $region32
        $region31: #{tpu_custom_call.1} parent=11 // pred_region
          %s524 = ssub.s32 1024, 1024
          %525 = vsyncadd [#allocation14], %s524
          %s526 = sshll.u32 [#allocation15], 4
          %s527 = int_to_ptr.vmem [resolvable:$true] %s526
          %532 = dma.hbm_to_vmem [thread:$0]  %s8, 1024, %s527, [#allocation14], 64, 64, 4
        $region32: #{tpu_custom_call.1} parent=11 // pred_fallthru
          _
        // Predicated region
        $region33: #{tpu_custom_call.1} parent=11 // pred_check
          %p533 = pneg %p276
        $region34: #{tpu_custom_call.1} parent=11 // pred_check_branch
          %535 = sbr.rel (%p533) target = $region36
        $region35: #{tpu_custom_call.1} parent=11 // pred_region
          %s537 = ssub.s32 1024, 1024
          %538 = vsyncadd [#allocation17], %s537
          %s539 = sshll.u32 [#allocation16], 4
          %s540 = int_to_ptr.vmem [resolvable:$true] %s539
          %545 = dma.hbm_to_vmem [thread:$0]  %s9, 1024, %s540, [#allocation17], 64, 64, 4
        $region36: #{tpu_custom_call.1} parent=11 // pred_fallthru
          _
        // Predicated region
        $region37: #{tpu_custom_call.1} parent=11 // pred_check
          %p546 = pneg %p297
        $region38: #{tpu_custom_call.1} parent=11 // pred_check_branch
          %548 = sbr.rel (%p546) target = $region40
        $region39: #{tpu_custom_call.1} parent=11 // pred_region
          _
        $region40: #{tpu_custom_call.1} parent=11 // pred_fallthru
          _
      $region12: #{tpu_custom_call.1} parent=5 // pred_fallthru
        _
      %p549 = scmp.lt.s32.totalorder %s34, 12
      // Predicated region
      $region41: #{tpu_custom_call.1} parent=5 // pred_check
        %p550 = pneg %p549
      $region42: #{tpu_custom_call.1} parent=5 // pred_check_branch
        %552 = sbr.rel (%p550) target = $region44
      $region43: #{tpu_custom_call.1} parent=5 // pred_region
        // Predicated region
        $region45: #{tpu_custom_call.1} parent=43 // pred_check
          %p553 = pneg %p66
        $region46: #{tpu_custom_call.1} parent=43 // pred_check_branch
          %555 = sbr.rel (%p553) target = $region48
        $region47: #{tpu_custom_call.1} parent=43 // pred_region
          %s556 = smul.u32 8, %s41
          %p557 = scmp.lt.s32.totalorder %s556, 15
          %s558 = scalar_select %p557, %s556, 15
          %s559 = smul.addr %s558, 8
          %s560 = scalar_lea.vmem %s0, %s559
          %s561 = smul.u32 8, %s41
        $region48: #{tpu_custom_call.1} parent=43 // pred_fallthru
          _
        // Predicated region
        $region49: #{tpu_custom_call.1} parent=43 // pred_check
          %p562 = pneg %p92
        $region50: #{tpu_custom_call.1} parent=43 // pred_check_branch
          %564 = sbr.rel (%p562) target = $region52
        $region51: #{tpu_custom_call.1} parent=43 // pred_region
          %s565 = sand.u32 %s34, 1
          %s566 = scalar_lea.sflag [#allocation5], %s565
          %s567 = sand.u32 %s82, 1
          %s568 = smul.addr %s567, 64
          %s569 = scalar_lea.vmem [#allocation4], %s568
          %s570 = smul.u32 8, %s41
          %s572 = ssub.s32 1024, 1024
          %573 = vsyncadd %s566, %s572
          %s574 = smul.addr %s570, 128
          %s575 = scalar_lea.hbm %s1, %s574
          %s576 = sshll.u32 %s569, 4
          %s577 = int_to_ptr.vmem [resolvable:$true] %s576
          %582 = dma.hbm_to_vmem [thread:$0]  %s575, 1024, %s577, %s566, 128, 128, 8
        $region52: #{tpu_custom_call.1} parent=43 // pred_fallthru
          _
        // Predicated region
        $region53: #{tpu_custom_call.1} parent=43 // pred_check
          %p583 = pneg %p118
        $region54: #{tpu_custom_call.1} parent=43 // pred_check_branch
          %585 = sbr.rel (%p583) target = $region56
        $region55: #{tpu_custom_call.1} parent=43 // pred_region
          %s586 = smul.u32 8, %s41
          %p587 = scmp.lt.s32.totalorder %s586, 15
          %s588 = scalar_select %p587, %s586, 15
          %s589 = smul.addr %s588, 8
          %s590 = scalar_lea.vmem %s2, %s589
          %s591 = smul.u32 8, %s41
        $region56: #{tpu_custom_call.1} parent=43 // pred_fallthru
          _
        // Predicated region
        $region57: #{tpu_custom_call.1} parent=43 // pred_check
          %p592 = pneg %p144
        $region58: #{tpu_custom_call.1} parent=43 // pred_check_branch
          %594 = sbr.rel (%p592) target = $region60
        $region59: #{tpu_custom_call.1} parent=43 // pred_region
          %s595 = sand.u32 %s34, 1
          %s596 = scalar_lea.sflag [#allocation8], %s595
          %s597 = sand.u32 %s134, 1
          %s598 = smul.addr %s597, 128
          %s599 = scalar_lea.vmem [#allocation7], %s598
          %s600 = smul.u32 8, %s41
          %s602 = ssub.s32 2048, 2048
          %603 = vsyncadd %s596, %s602
          %s604 = smul.addr %s600, 2
          %s605 = smul.addr %s604, 128
          %s606 = scalar_lea.hbm %s3, %s605
          %s607 = sshll.u32 %s599, 4
          %s608 = int_to_ptr.vmem [resolvable:$true] %s607
          %613 = dma.hbm_to_vmem [thread:$0]  %s606, 2048, %s608, %s596, 256, 256, 16
        $region60: #{tpu_custom_call.1} parent=43 // pred_fallthru
          _
        // Predicated region
        $region61: #{tpu_custom_call.1} parent=43 // pred_check
          %p614 = pneg %p317
        $region62: #{tpu_custom_call.1} parent=43 // pred_check_branch
          %616 = sbr.rel (%p614) target = $region64
        $region63: #{tpu_custom_call.1} parent=43 // pred_region
          %s617 = sand.u32 %s34, 1
          %s618 = scalar_lea.sflag [#allocation5], %s617
          %s619 = sand.u32 %s307, 1
          %s620 = smul.addr %s619, 8
          %s621 = scalar_lea.vmem [#allocation18], %s620
          %s623 = ssub.s32 128, 128
          %624 = vsyncadd %s618, %s623
          %s625 = smul.addr %s42, 128
          %s626 = scalar_lea.hbm %s11, %s625
          %s628 = sshll.u32 %s621, 4
          %s629 = int_to_ptr.vmem [resolvable:$true] %s628
          %631 = dma.hbm_to_vmem [thread:$0]  %s626, 128, %s629, %s618
        $region64: #{tpu_custom_call.1} parent=43 // pred_fallthru
          _
        // Predicated region
        $region65: #{tpu_custom_call.1} parent=43 // pred_check
          %p632 = pneg %p343
        $region66: #{tpu_custom_call.1} parent=43 // pred_check_branch
          %634 = sbr.rel (%p632) target = $region68
        $region67: #{tpu_custom_call.1} parent=43 // pred_region
          %p635 = scmp.lt.s32.totalorder %s42, 5
          %s636 = scalar_select %p635, %s42, 5
          %s637 = smul.addr %s636, 4
          %s638 = scalar_lea.vmem %s12, %s637
        $region68: #{tpu_custom_call.1} parent=43 // pred_fallthru
          _
        // Predicated region
        $region69: #{tpu_custom_call.1} parent=43 // pred_check
          %p639 = pneg %p369
        $region70: #{tpu_custom_call.1} parent=43 // pred_check_branch
          %641 = sbr.rel (%p639) target = $region72
        $region71: #{tpu_custom_call.1} parent=43 // pred_region
          %s642 = sand.u32 %s34, 1
          %s643 = scalar_lea.sflag [#allocation8], %s642
          %s644 = sand.u32 %s359, 1
          %s645 = smul.addr %s644, 64
          %s646 = scalar_lea.vmem [#allocation19], %s645
          %s648 = ssub.s32 1024, 1024
          %649 = vsyncadd %s643, %s648
          %s650 = smul.addr %s42, 16
          %s651 = smul.addr %s650, 64
          %s652 = scalar_lea.hbm %s13, %s651
          %s653 = sshll.u32 %s646, 4
          %s654 = int_to_ptr.vmem [resolvable:$true] %s653
          %659 = dma.hbm_to_vmem [thread:$0]  %s652, 1024, %s654, %s643, 64, 64, 4
        $region72: #{tpu_custom_call.1} parent=43 // pred_fallthru
          _
        // Predicated region
        $region73: #{tpu_custom_call.1} parent=43 // pred_check
          %p660 = pneg %p395
        $region74: #{tpu_custom_call.1} parent=43 // pred_check_branch
          %662 = sbr.rel (%p660) target = $region76
        $region75: #{tpu_custom_call.1} parent=43 // pred_region
          %s663 = sand.u32 %s34, 1
          %s664 = scalar_lea.sflag [#allocation5], %s663
          %s665 = sand.u32 %s385, 1
          %s666 = smul.addr %s665, 256
          %s667 = scalar_lea.vmem [#allocation20], %s666
          %s669 = ssub.s32 4096, 4096
          %670 = vsyncadd %s664, %s669
          %s671 = smul.addr %s42, 64
          %s672 = smul.addr %s671, 64
          %s673 = scalar_lea.hbm %s14, %s672
          %s674 = sshll.u32 %s667, 4
          %s675 = int_to_ptr.vmem [resolvable:$true] %s674
          %680 = dma.hbm_to_vmem [thread:$0]  %s673, 4096, %s675, %s664, 256, 256, 16
        $region76: #{tpu_custom_call.1} parent=43 // pred_fallthru
          _
        // Predicated region
        $region77: #{tpu_custom_call.1} parent=43 // pred_check
          %p681 = pneg %p421
        $region78: #{tpu_custom_call.1} parent=43 // pred_check_branch
          %683 = sbr.rel (%p681) target = $region80
        $region79: #{tpu_custom_call.1} parent=43 // pred_region
          %s684 = sand.u32 %s34, 1
          %s685 = scalar_lea.sflag [#allocation8], %s684
          %s686 = sand.u32 %s411, 1
          %s687 = smul.addr %s686, 256
          %s688 = scalar_lea.vmem [#allocation21], %s687
          %s690 = ssub.s32 4096, 4096
          %691 = vsyncadd %s685, %s690
          %s692 = smul.addr %s42, 64
          %s693 = smul.addr %s692, 64
          %s694 = scalar_lea.hbm %s15, %s693
          %s695 = sshll.u32 %s688, 4
          %s696 = int_to_ptr.vmem [resolvable:$true] %s695
          %701 = dma.hbm_to_vmem [thread:$0]  %s694, 4096, %s696, %s685, 64, 64, 4
        $region80: #{tpu_custom_call.1} parent=43 // pred_fallthru
          _
      $region44: #{tpu_custom_call.1} parent=5 // pred_fallthru
        _
      %p702 = scmp.le.s32.totalorder 1, %s34
      %p703 = scmp.lt.s32.totalorder %s34, 13
      %p704 = pnand %p702, %p703
      %p705 = pneg %p704
      // Predicated region
      $region81: #{tpu_custom_call.1} parent=5 // pred_check
        _
      $region82: #{tpu_custom_call.1} parent=5 // pred_check_branch
        %707 = sbr.rel (%p704) target = $region84
      $region83: #{tpu_custom_call.1} parent=5 // pred_region
        %s708 = ssub.s32 %s34, 1
        %s709 = sand.u32 %s39, 1
        %s710 = scalar_lea.sflag [#allocation5], %s709
        %s711 = sand.u32 %s85, 1
        %s712 = smul.addr %s711, 64
        %s713 = scalar_lea.vmem [#allocation4], %s712
        // Predicated region
        $region85: #{tpu_custom_call.1} parent=83 // pred_check
          %p714 = pneg %p98
        $region86: #{tpu_custom_call.1} parent=83 // pred_check_branch
          %716 = sbr.rel (%p714) target = $region88
        $region87: #{tpu_custom_call.1} parent=83 // pred_region
          %717 = dma.done %s710, 1024
        $region88: #{tpu_custom_call.1} parent=83 // pred_fallthru
          _
        %s718 = sand.u32 %s39, 1
        %s719 = scalar_lea.sflag [#allocation8], %s718
        %s720 = sand.u32 %s137, 1
        %s721 = smul.addr %s720, 128
        %s722 = scalar_lea.vmem [#allocation7], %s721
        // Predicated region
        $region89: #{tpu_custom_call.1} parent=83 // pred_check
          %p723 = pneg %p150
        $region90: #{tpu_custom_call.1} parent=83 // pred_check_branch
          %725 = sbr.rel (%p723) target = $region92
        $region91: #{tpu_custom_call.1} parent=83 // pred_region
          %726 = dma.done %s719, 2048
        $region92: #{tpu_custom_call.1} parent=83 // pred_fallthru
          _
        // Predicated region
        $region93: #{tpu_custom_call.1} parent=83 // pred_check
          %p727 = pneg %p171
        $region94: #{tpu_custom_call.1} parent=83 // pred_check_branch
          %729 = sbr.rel (%p727) target = $region96
        $region95: #{tpu_custom_call.1} parent=83 // pred_region
          %730 = dma.done [#allocation8], 256
        $region96: #{tpu_custom_call.1} parent=83 // pred_fallthru
          _
        // Predicated region
        $region97: #{tpu_custom_call.1} parent=83 // pred_check
          %p731 = pneg %p192
        $region98: #{tpu_custom_call.1} parent=83 // pred_check_branch
          %733 = sbr.rel (%p731) target = $region100
        $region99: #{tpu_custom_call.1} parent=83 // pred_region
          %734 = dma.done [#allocation11], 1024
        $region100: #{tpu_custom_call.1} parent=83 // pred_fallthru
          _
        // Predicated region
        $region101: #{tpu_custom_call.1} parent=83 // pred_check
          %p735 = pneg %p213
        $region102: #{tpu_custom_call.1} parent=83 // pred_check_branch
          %737 = sbr.rel (%p735) target = $region104
        $region103: #{tpu_custom_call.1} parent=83 // pred_region
          %738 = dma.done [#allocation11], 2048
        $region104: #{tpu_custom_call.1} parent=83 // pred_fallthru
          _
        // Predicated region
        $region105: #{tpu_custom_call.1} parent=83 // pred_check
          %p739 = pneg %p234
        $region106: #{tpu_custom_call.1} parent=83 // pred_check_branch
          %741 = sbr.rel (%p739) target = $region108
        $region107: #{tpu_custom_call.1} parent=83 // pred_region
          %742 = dma.done [#allocation14], 1024
        $region108: #{tpu_custom_call.1} parent=83 // pred_fallthru
          _
        // Predicated region
        $region109: #{tpu_custom_call.1} parent=83 // pred_check
          %p743 = pneg %p255
        $region110: #{tpu_custom_call.1} parent=83 // pred_check_branch
          %745 = sbr.rel (%p743) target = $region112
        $region111: #{tpu_custom_call.1} parent=83 // pred_region
          %746 = dma.done [#allocation14], 1024
        $region112: #{tpu_custom_call.1} parent=83 // pred_fallthru
          _
        // Predicated region
        $region113: #{tpu_custom_call.1} parent=83 // pred_check
          %p747 = pneg %p276
        $region114: #{tpu_custom_call.1} parent=83 // pred_check_branch
          %749 = sbr.rel (%p747) target = $region116
        $region115: #{tpu_custom_call.1} parent=83 // pred_region
          %750 = dma.done [#allocation17], 1024
        $region116: #{tpu_custom_call.1} parent=83 // pred_fallthru
          _
        %s751 = sand.u32 %s39, 1
        %s752 = scalar_lea.sflag [#allocation5], %s751
        %s753 = sand.u32 %s310, 1
        %s754 = smul.addr %s753, 8
        %s755 = scalar_lea.vmem [#allocation18], %s754
        // Predicated region
        $region117: #{tpu_custom_call.1} parent=83 // pred_check
          %p756 = pneg %p323
        $region118: #{tpu_custom_call.1} parent=83 // pred_check_branch
          %758 = sbr.rel (%p756) target = $region120
        $region119: #{tpu_custom_call.1} parent=83 // pred_region
          %759 = dma.done %s752, 128
        $region120: #{tpu_custom_call.1} parent=83 // pred_fallthru
          _
        %s760 = sand.u32 %s39, 1
        %s761 = scalar_lea.sflag [#allocation8], %s760
        %s762 = sand.u32 %s362, 1
        %s763 = smul.addr %s762, 64
        %s764 = scalar_lea.vmem [#allocation19], %s763
        // Predicated region
        $region121: #{tpu_custom_call.1} parent=83 // pred_check
          %p765 = pneg %p375
        $region122: #{tpu_custom_call.1} parent=83 // pred_check_branch
          %767 = sbr.rel (%p765) target = $region124
        $region123: #{tpu_custom_call.1} parent=83 // pred_region
          %768 = dma.done %s761, 1024
        $region124: #{tpu_custom_call.1} parent=83 // pred_fallthru
          _
        %s769 = sand.u32 %s39, 1
        %s770 = scalar_lea.sflag [#allocation5], %s769
        %s771 = sand.u32 %s388, 1
        %s772 = smul.addr %s771, 256
        %s773 = scalar_lea.vmem [#allocation20], %s772
        // Predicated region
        $region125: #{tpu_custom_call.1} parent=83 // pred_check
          %p774 = pneg %p401
        $region126: #{tpu_custom_call.1} parent=83 // pred_check_branch
          %776 = sbr.rel (%p774) target = $region128
        $region127: #{tpu_custom_call.1} parent=83 // pred_region
          %777 = dma.done %s770, 4096
        $region128: #{tpu_custom_call.1} parent=83 // pred_fallthru
          _
        %s778 = sand.u32 %s39, 1
        %s779 = scalar_lea.sflag [#allocation8], %s778
        %s780 = sand.u32 %s414, 1
        %s781 = smul.addr %s780, 256
        %s782 = scalar_lea.vmem [#allocation21], %s781
        // Predicated region
        $region129: #{tpu_custom_call.1} parent=83 // pred_check
          %p783 = pneg %p427
        $region130: #{tpu_custom_call.1} parent=83 // pred_check_branch
          %785 = sbr.rel (%p783) target = $region132
        $region131: #{tpu_custom_call.1} parent=83 // pred_region
          %786 = dma.done %s779, 4096
        $region132: #{tpu_custom_call.1} parent=83 // pred_fallthru
          _
        %s787 = smul.u32 8, %s43
        %p788 = scmp.lt.s32.totalorder %s787, 15
        %s789 = scalar_select %p788, %s787, 15
        %s790 = smul.addr %s789, 8
        %s791 = scalar_lea.vmem %s0, %s790
        %p792 = pneg %p72
        %p793 = pneg %p69
        %s794 = sand.u32 %s39, 1
        %s795 = scalar_lea.sflag [#allocation5], %s794
        %s796 = sand.u32 %s85, 1
        %s797 = smul.addr %s796, 64
        %s798 = scalar_lea.vmem [#allocation4], %s797
        %p799 = pneg %p98
        %p800 = pneg %p95
        %s801 = smul.u32 8, %s43
        %p802 = scmp.lt.s32.totalorder %s801, 15
        %s803 = scalar_select %p802, %s801, 15
        %s804 = smul.addr %s803, 8
        %s805 = scalar_lea.vmem %s2, %s804
        %p806 = pneg %p124
        %p807 = pneg %p121
        %s808 = sand.u32 %s39, 1
        %s809 = scalar_lea.sflag [#allocation8], %s808
        %s810 = sand.u32 %s137, 1
        %s811 = smul.addr %s810, 128
        %s812 = scalar_lea.vmem [#allocation7], %s811
        %p813 = pneg %p150
        %p814 = pneg %p147
        %p815 = pneg %p171
        %p816 = pneg %p168
        %p817 = pneg %p192
        %p818 = pneg %p189
        %p819 = pneg %p213
        %p820 = pneg %p210
        %p821 = pneg %p234
        %p822 = pneg %p231
        %p823 = pneg %p255
        %p824 = pneg %p252
        %p825 = pneg %p276
        %p826 = pneg %p273
        %p827 = pneg %p297
        %p828 = pneg %p294
        %s829 = sand.u32 %s39, 1
        %s830 = scalar_lea.sflag [#allocation5], %s829
        %s831 = sand.u32 %s310, 1
        %s832 = smul.addr %s831, 8
        %s833 = scalar_lea.vmem [#allocation18], %s832
        %p834 = pneg %p323
        %p835 = pneg %p320
        %p836 = scmp.lt.s32.totalorder %s44, 5
        %s837 = scalar_select %p836, %s44, 5
        %s838 = smul.addr %s837, 4
        %s839 = scalar_lea.vmem %s12, %s838
        %p840 = pneg %p349
        %p841 = pneg %p346
        %s842 = sand.u32 %s39, 1
        %s843 = scalar_lea.sflag [#allocation8], %s842
        %s844 = sand.u32 %s362, 1
        %s845 = smul.addr %s844, 64
        %s846 = scalar_lea.vmem [#allocation19], %s845
        %p847 = pneg %p375
        %p848 = pneg %p372
        %s849 = sand.u32 %s39, 1
        %s850 = scalar_lea.sflag [#allocation5], %s849
        %s851 = sand.u32 %s388, 1
        %s852 = smul.addr %s851, 256
        %s853 = scalar_lea.vmem [#allocation20], %s852
        %p854 = pneg %p401
        %p855 = pneg %p398
        %s856 = sand.u32 %s39, 1
        %s857 = scalar_lea.sflag [#allocation8], %s856
        %s858 = sand.u32 %s414, 1
        %s859 = smul.addr %s858, 256
        %s860 = scalar_lea.vmem [#allocation21], %s859
        %p861 = pneg %p427
        %p862 = pneg %p424
        %p863 = pneg %p453
        %p864 = pneg %p450
        %s865 = sand.u32 %s440, 1
        %s866 = scalar_lea.sflag [#allocation6], %s865
        %s867 = sand.u32 %s440, 1
        %s868 = smul.addr %s867, 64
        %s869 = scalar_lea.vmem [#allocation22], %s868
        %s870 = smul.u32 8, %s43
        %p871 = scmp.lt.s32.totalorder %s870, 15
        %s872 = scalar_select %p871, %s870, 15
        %s873 = smul.addr %s872, 8
        %s874 = scalar_lea.vmem %s0, %s873
        %s875 = smul.u32 8, %s43
        %s876 = smul.u32 8, %s43
        %s877 = smul.u32 8, %s43
        %p878 = scmp.lt.s32.totalorder %s877, 15
        %s879 = scalar_select %p878, %s877, 15
        %s880 = smul.addr %s879, 8
        %s881 = scalar_lea.vmem %s2, %s880
        %s882 = smul.u32 8, %s43
        %s883 = smul.u32 8, %s43
        %p884 = scmp.lt.s32.totalorder %s44, 5
        %s885 = scalar_select %p884, %s44, 5
        %s886 = smul.addr %s885, 4
        %s887 = scalar_lea.vmem %s12, %s886
        %s888 = smul.u32 8, %s43
        %p890 = scmp.eq.s32.totalorder %s44, 0
        // Predicated region
        $region133: #{tpu_custom_call.1} parent=83 // pred_check
          %p891 = pneg %p890
        $region134: #{tpu_custom_call.1} parent=83 // pred_check_branch
          %893 = sbr.rel (%p891) target = $region136
        $region135: #{tpu_custom_call.1} parent=83 // pred_region
          %v894 = vld [vmem:[#allocation9] sm:$0xff]
          %v895 = vld [vmem:[%s881] sm:$0xff]
          %v896 = vld [vmem:[%s881 + $0x8] sm:$0xff]
          %v897 = vld [vmem:[%s881 + $0x10] sm:$0xff]
          %v898 = vld [vmem:[%s881 + $0x18] sm:$0xff]
          %v899 = vld [vmem:[%s881 + $0x20] sm:$0xff]
          %v900 = vld [vmem:[%s881 + $0x28] sm:$0xff]
          %v901 = vld [vmem:[%s881 + $0x30] sm:$0xff]
          %v902 = vld [vmem:[%s881 + $0x38] sm:$0xff]
          %v903 = vld [vmem:[%s874] sm:$0xff]
          %v904 = vld [vmem:[%s874 + $0x8] sm:$0xff]
          %v905 = vld [vmem:[%s874 + $0x10] sm:$0xff]
          %v906 = vld [vmem:[%s874 + $0x18] sm:$0xff]
          %v907 = vld [vmem:[%s874 + $0x20] sm:$0xff]
          %v908 = vld [vmem:[%s874 + $0x28] sm:$0xff]
          %v909 = vld [vmem:[%s874 + $0x30] sm:$0xff]
          %v910 = vld [vmem:[%s874 + $0x38] sm:$0xff]
          %912 = vset.pattern.permute.xlu0 0
          %913 = vperm.xlu0 %912, %v895
          %v914 = vpop.permute.xlu0 %913
          %917 = vset.pattern.permute.xlu0 0
          %918 = vperm.xlu0 %917, %v896
          %v919 = vpop.permute.xlu0 %918
          %922 = vset.pattern.permute.xlu0 0
          %923 = vperm.xlu0 %922, %v897
          %v924 = vpop.permute.xlu0 %923
          %927 = vset.pattern.permute.xlu0 0
          %928 = vperm.xlu0 %927, %v898
          %v929 = vpop.permute.xlu0 %928
          %932 = vset.pattern.permute.xlu0 0
          %933 = vperm.xlu0 %932, %v899
          %v934 = vpop.permute.xlu0 %933
          %937 = vset.pattern.permute.xlu0 0
          %938 = vperm.xlu0 %937, %v900
          %v939 = vpop.permute.xlu0 %938
          %942 = vset.pattern.permute.xlu0 0
          %943 = vperm.xlu0 %942, %v901
          %v944 = vpop.permute.xlu0 %943
          %947 = vset.pattern.permute.xlu0 0
          %948 = vperm.xlu0 %947, %v902
          %v949 = vpop.permute.xlu0 %948
          %v951 = vmul.f32 %v914, %v903
          %v952 = vmul.f32 %v919, %v904
          %v953 = vmul.f32 %v924, %v905
          %v954 = vmul.f32 %v929, %v906
          %v955 = vmul.f32 %v934, %v907
          %v956 = vmul.f32 %v939, %v908
          %v957 = vmul.f32 %v944, %v909
          %v958 = vmul.f32 %v949, %v910
          %v959 = vld [vmem:[%s713] sm:$0xff]
          %v960 = vld [vmem:[%s713 + $0x8] sm:$0xff]
          %v961 = vld [vmem:[%s713 + $0x10] sm:$0xff]
          %v962 = vld [vmem:[%s713 + $0x18] sm:$0xff]
          %v963 = vld [vmem:[%s713 + $0x20] sm:$0xff]
          %v964 = vld [vmem:[%s713 + $0x28] sm:$0xff]
          %v965 = vld [vmem:[%s713 + $0x30] sm:$0xff]
          %v966 = vld [vmem:[%s713 + $0x38] sm:$0xff]
          %967 = vset.pattern.permute.xlu0 1
          %968 = vperm.xlu0 %967, %v895
          %v969 = vpop.permute.xlu0 %968
          %971 = vset.pattern.permute.xlu0 1
          %972 = vperm.xlu0 %971, %v896
          %v973 = vpop.permute.xlu0 %972
          %975 = vset.pattern.permute.xlu0 1
          %976 = vperm.xlu0 %975, %v897
          %v977 = vpop.permute.xlu0 %976
          %979 = vset.pattern.permute.xlu0 1
          %980 = vperm.xlu0 %979, %v898
          %v981 = vpop.permute.xlu0 %980
          %983 = vset.pattern.permute.xlu0 1
          %984 = vperm.xlu0 %983, %v899
          %v985 = vpop.permute.xlu0 %984
          %987 = vset.pattern.permute.xlu0 1
          %988 = vperm.xlu0 %987, %v900
          %v989 = vpop.permute.xlu0 %988
          %991 = vset.pattern.permute.xlu0 1
          %992 = vperm.xlu0 %991, %v901
          %v993 = vpop.permute.xlu0 %992
          %995 = vset.pattern.permute.xlu0 1
          %996 = vperm.xlu0 %995, %v902
          %v997 = vpop.permute.xlu0 %996
          %v999 = vmul.f32 %v969, %v959
          %v1000 = vmul.f32 %v973, %v960
          %v1001 = vmul.f32 %v977, %v961
          %v1002 = vmul.f32 %v981, %v962
          %v1003 = vmul.f32 %v985, %v963
          %v1004 = vmul.f32 %v989, %v964
          %v1005 = vmul.f32 %v993, %v965
          %v1006 = vmul.f32 %v997, %v966
          %v1007 = vadd.f32 %v951, %v999
          %v1008 = vadd.f32 %v952, %v1000
          %v1009 = vadd.f32 %v953, %v1001
          %v1010 = vadd.f32 %v954, %v1002
          %v1011 = vadd.f32 %v955, %v1003
          %v1012 = vadd.f32 %v956, %v1004
          %v1013 = vadd.f32 %v957, %v1005
          %v1014 = vadd.f32 %v958, %v1006
          %1015 = vset.pattern.permute.xlu0 2
          %1016 = vperm.xlu0 %1015, %v895
          %v1017 = vpop.permute.xlu0 %1016
          %1019 = vset.pattern.permute.xlu0 2
          %1020 = vperm.xlu0 %1019, %v896
          %v1021 = vpop.permute.xlu0 %1020
          %1023 = vset.pattern.permute.xlu0 2
          %1024 = vperm.xlu0 %1023, %v897
          %v1025 = vpop.permute.xlu0 %1024
          %1027 = vset.pattern.permute.xlu0 2
          %1028 = vperm.xlu0 %1027, %v898
          %v1029 = vpop.permute.xlu0 %1028
          %1031 = vset.pattern.permute.xlu0 2
          %1032 = vperm.xlu0 %1031, %v899
          %v1033 = vpop.permute.xlu0 %1032
          %1035 = vset.pattern.permute.xlu0 2
          %1036 = vperm.xlu0 %1035, %v900
          %v1037 = vpop.permute.xlu0 %1036
          %1039 = vset.pattern.permute.xlu0 2
          %1040 = vperm.xlu0 %1039, %v901
          %v1041 = vpop.permute.xlu0 %1040
          %1043 = vset.pattern.permute.xlu0 2
          %1044 = vperm.xlu0 %1043, %v902
          %v1045 = vpop.permute.xlu0 %1044
          %v1047 = vlaneseq
          %v1048 = vshrl.u32 %v1047, 7
          %v1049 = vsub.s32 0, %v1048
          %v1050 = vrot.slane %v894, %v1049
          %v1051 = vmul.f32 %v1017, %v1050
          %v1052 = vmul.f32 %v1021, %v1050
          %v1053 = vmul.f32 %v1025, %v1050
          %v1054 = vmul.f32 %v1029, %v1050
          %v1055 = vmul.f32 %v1033, %v1050
          %v1056 = vmul.f32 %v1037, %v1050
          %v1057 = vmul.f32 %v1041, %v1050
          %v1058 = vmul.f32 %v1045, %v1050
          %v1059 = vlaneseq
          %v1060 = vshrl.u32 %v1059, 7
          %v1061 = vsub.s32 1, %v1060
          %v1062 = vrot.slane %v894, %v1061
          %v1063 = vadd.f32 %v1051, %v1062
          %v1064 = vadd.f32 %v1052, %v1062
          %v1065 = vadd.f32 %v1053, %v1062
          %v1066 = vadd.f32 %v1054, %v1062
          %v1067 = vadd.f32 %v1055, %v1062
          %v1068 = vadd.f32 %v1056, %v1062
          %v1069 = vadd.f32 %v1057, %v1062
          %v1070 = vadd.f32 %v1058, %v1062
          %v1071 = vxor.u32 %v1063, 2147483648
          %v1072 = vxor.u32 %v1064, 2147483648
          %v1073 = vxor.u32 %v1065, 2147483648
          %v1074 = vxor.u32 %v1066, 2147483648
          %v1075 = vxor.u32 %v1067, 2147483648
          %v1076 = vxor.u32 %v1068, 2147483648
          %v1077 = vxor.u32 %v1069, 2147483648
          %v1078 = vxor.u32 %v1070, 2147483648
          %v1079 = vmul.f32 %v1071, 1.442695
          %v1080 = vpow.pop %v1079
          %v1081 = vmul.f32 %v1072, 1.442695
          %v1082 = vpow.pop %v1081
          %v1083 = vmul.f32 %v1073, 1.442695
          %v1084 = vpow.pop %v1083
          %v1085 = vmul.f32 %v1074, 1.442695
          %v1086 = vpow.pop %v1085
          %v1087 = vmul.f32 %v1075, 1.442695
          %v1088 = vpow.pop %v1087
          %v1089 = vmul.f32 %v1076, 1.442695
          %v1090 = vpow.pop %v1089
          %v1091 = vmul.f32 %v1077, 1.442695
          %v1092 = vpow.pop %v1091
          %v1093 = vmul.f32 %v1078, 1.442695
          %v1094 = vpow.pop %v1093
          %v1095 = vadd.f32 %v1080, 1.0
          %v1096 = vadd.f32 %v1082, 1.0
          %v1097 = vadd.f32 %v1084, 1.0
          %v1098 = vadd.f32 %v1086, 1.0
          %v1099 = vadd.f32 %v1088, 1.0
          %v1100 = vadd.f32 %v1090, 1.0
          %v1101 = vadd.f32 %v1092, 1.0
          %v1102 = vadd.f32 %v1094, 1.0
          %v1103 = vrcp.pop %v1095
          %v1104 = vmul.f32 1.0, %v1103
          %v1105 = vrcp.pop %v1096
          %v1106 = vmul.f32 1.0, %v1105
          %v1107 = vrcp.pop %v1097
          %v1108 = vmul.f32 1.0, %v1107
          %v1109 = vrcp.pop %v1098
          %v1110 = vmul.f32 1.0, %v1109
          %v1111 = vrcp.pop %v1099
          %v1112 = vmul.f32 1.0, %v1111
          %v1113 = vrcp.pop %v1100
          %v1114 = vmul.f32 1.0, %v1113
          %v1115 = vrcp.pop %v1101
          %v1116 = vmul.f32 1.0, %v1115
          %v1117 = vrcp.pop %v1102
          %v1118 = vmul.f32 1.0, %v1117
          %v1119 = vmul.f32 %v1063, %v1104
          %v1120 = vmul.f32 %v1064, %v1106
          %v1121 = vmul.f32 %v1065, %v1108
          %v1122 = vmul.f32 %v1066, %v1110
          %v1123 = vmul.f32 %v1067, %v1112
          %v1124 = vmul.f32 %v1068, %v1114
          %v1125 = vmul.f32 %v1069, %v1116
          %v1126 = vmul.f32 %v1070, %v1118
          %v1127 = vld [vmem:[#allocation10] sm:$0xf]
          %v1128 = vld [vmem:[#allocation10 + $0x4] sm:$0xf]
          %v1129 = vld [vmem:[#allocation10 + $0x8] sm:$0xf]
          %v1130 = vld [vmem:[#allocation10 + $0xc] sm:$0xf]
          %v1131 = vld [vmem:[#allocation10 + $0x10] sm:$0xf]
          %v1132 = vld [vmem:[#allocation10 + $0x14] sm:$0xf]
          %v1133 = vld [vmem:[#allocation10 + $0x18] sm:$0xf]
          %v1134 = vld [vmem:[#allocation10 + $0x1c] sm:$0xf]
          %v1135 = vld [vmem:[#allocation10 + $0x20] sm:$0xf]
          %v1136 = vld [vmem:[#allocation10 + $0x24] sm:$0xf]
          %v1137 = vld [vmem:[#allocation10 + $0x28] sm:$0xf]
          %v1138 = vld [vmem:[#allocation10 + $0x2c] sm:$0xf]
          %v1139 = vld [vmem:[#allocation10 + $0x30] sm:$0xf]
          %v1140 = vld [vmem:[#allocation10 + $0x34] sm:$0xf]
          %v1141 = vld [vmem:[#allocation10 + $0x38] sm:$0xf]
          %v1142 = vld [vmem:[#allocation10 + $0x3c] sm:$0xf]
          %v1143 = vpack.c.bf16 %v1120, %v1119
          %v1144 = vpack.c.bf16 %v1122, %v1121
          %v1145 = vpack.c.bf16 %v1124, %v1123
          %v1146 = vpack.c.bf16 %v1126, %v1125
          %v1147 = vlaneseq
          %v1148 = vshrl.u32 %v1147, 7
          %v1149 = vsub.s32 2, %v1148
          %v1150 = vrot.slane %v894, %v1149
          %v1167 = vunpack.c.l.b16 %v1127
          %v1168 = vunpack.c.l.b16 %v1128
          %v1169 = vunpack.c.l.b16 %v1129
          %v1170 = vunpack.c.l.b16 %v1130
          %v1171 = vunpack.c.l.b16 %v1131
          %v1172 = vunpack.c.l.b16 %v1132
          %v1173 = vunpack.c.l.b16 %v1133
          %v1174 = vunpack.c.l.b16 %v1134
          %v1175 = vunpack.c.l.b16 %v1135
          %v1176 = vunpack.c.l.b16 %v1136
          %v1177 = vunpack.c.l.b16 %v1137
          %v1178 = vunpack.c.l.b16 %v1138
          %v1179 = vunpack.c.l.b16 %v1139
          %v1180 = vunpack.c.l.b16 %v1140
          %v1181 = vunpack.c.l.b16 %v1141
          %v1182 = vunpack.c.l.b16 %v1142
          %v1183 = vpack.c.b16 %v1168, %v1167
          %v1184 = vpack.c.b16 %v1170, %v1169
          %v1185 = vpack.c.b16 %v1172, %v1171
          %v1186 = vpack.c.b16 %v1174, %v1173
          %v1187 = vpack.c.b16 %v1176, %v1175
          %v1188 = vpack.c.b16 %v1178, %v1177
          %v1189 = vpack.c.b16 %v1180, %v1179
          %v1190 = vpack.c.b16 %v1182, %v1181
          %1199 = vmatprep.subr.bf16.mxu0 0
          %1200 = vmatpush1.bf16.msra.mxu0 %v1183
          %1201 = vmatprep.subr.bf16.mxu0 0
          %1202 = vmatpush1.bf16.msra.mxu0 %v1184
          %1203 = vmatprep.subr.bf16.mxu0 0
          %1204 = vmatpush1.bf16.msra.mxu0 %v1185
          %1205 = vmatprep.subr.bf16.mxu0 0
          %1206 = vmatpush1.bf16.msra.mxu0 %v1186
          %1207 = vmatprep.subr.bf16.mxu0 0
          %1208 = vmatpush1.bf16.msra.mxu0 %v1187
          %1209 = vmatprep.subr.bf16.mxu0 0
          %1210 = vmatpush1.bf16.msra.mxu0 %v1188
          %1211 = vmatprep.subr.bf16.mxu0 0
          %1212 = vmatpush1.bf16.msra.mxu0 %v1189
          %1213 = vmatprep.subr.bf16.mxu0 0
          %1214 = vmatpush1.bf16.msra.mxu0 %v1190
          %1215 = vmatprep.subr.bf16.mxu0 0
          %1216 = vmatpush1.bf16.msra.mxu0 0
          %1217 = vmatprep.subr.bf16.mxu0 0
          %1218 = vmatpush1.bf16.msra.mxu0 0
          %1219 = vmatprep.subr.bf16.mxu0 0
          %1220 = vmatpush1.bf16.msra.mxu0 0
          %1221 = vmatprep.subr.bf16.mxu0 0
          %1222 = vmatpush1.bf16.msra.mxu0 0
          %1223 = vmatprep.subr.bf16.mxu0 0
          %1224 = vmatpush1.bf16.msra.mxu0 0
          %1225 = vmatprep.subr.bf16.mxu0 0
          %1226 = vmatpush1.bf16.msra.mxu0 0
          %1227 = vmatprep.subr.bf16.mxu0 0
          %1228 = vmatpush1.bf16.msra.mxu0 0
          %1229 = vmatprep.subr.bf16.mxu0 0
          %1230 = vmatpush1.bf16.msra.mxu0 0
          %1231 = vmatprep.mubr.bf16.mxu0 0
          %1232 = vmatmul.mubr.bf16.gmra.mrb[0].mxu0 %v1143
          %v1233 = vpop.f32.mrb[0].mxu0
          %v1234 = vadd.f32 %v1150, %v1233
          %v1235 = vpop.f32.mrb[0].mxu0
          %v1236 = vpop.f32.mrb[0].mxu0
          %v1237 = vadd.f32 %v1150, %v1236
          %v1238 = vpop.f32.mrb[0].mxu0
          %1239 = vmatprep.mubr.bf16.mxu0 0
          %1240 = vmatmul.mubr.bf16.gmra.mrb[0].mxu0 %v1144
          %v1241 = vpop.f32.mrb[0].mxu0
          %v1242 = vadd.f32 %v1150, %v1241
          %v1243 = vpop.f32.mrb[0].mxu0
          %v1244 = vpop.f32.mrb[0].mxu0
          %v1245 = vadd.f32 %v1150, %v1244
          %v1246 = vpop.f32.mrb[0].mxu0
          %1247 = vmatprep.mubr.bf16.mxu0 0
          %1248 = vmatmul.mubr.bf16.gmra.mrb[0].mxu0 %v1145
          %v1249 = vpop.f32.mrb[0].mxu0
          %v1250 = vadd.f32 %v1150, %v1249
          %v1251 = vpop.f32.mrb[0].mxu0
          %v1252 = vpop.f32.mrb[0].mxu0
          %v1253 = vadd.f32 %v1150, %v1252
          %v1254 = vpop.f32.mrb[0].mxu0
          %1255 = vmatprep.mubr.bf16.mxu0 0
          %1256 = vmatmul.mubr.bf16.gmra.mrb[0].mxu0 %v1146
          %v1257 = vpop.f32.mrb[0].mxu0
          %v1258 = vadd.f32 %v1150, %v1257
          %v1259 = vpop.f32.mrb[0].mxu0
          %v1260 = vpop.f32.mrb[0].mxu0
          %v1261 = vadd.f32 %v1150, %v1260
          %v1262 = vpop.f32.mrb[0].mxu0
          %1263 = vdwg.mxu0
          %v1264 = vld [vmem:[%s722] sm:$0xff]
          %v1265 = vld [vmem:[%s722 + $0x8] sm:$0xff]
          %v1266 = vld [vmem:[%s722 + $0x10] sm:$0xff]
          %v1267 = vld [vmem:[%s722 + $0x18] sm:$0xff]
          %v1268 = vld [vmem:[%s722 + $0x20] sm:$0xff]
          %v1269 = vld [vmem:[%s722 + $0x28] sm:$0xff]
          %v1270 = vld [vmem:[%s722 + $0x30] sm:$0xff]
          %v1271 = vld [vmem:[%s722 + $0x38] sm:$0xff]
          %v1272 = vld [vmem:[%s722 + $0x40] sm:$0xff]
          %v1273 = vld [vmem:[%s722 + $0x48] sm:$0xff]
          %v1274 = vld [vmem:[%s722 + $0x50] sm:$0xff]
          %v1275 = vld [vmem:[%s722 + $0x58] sm:$0xff]
          %v1276 = vld [vmem:[%s722 + $0x60] sm:$0xff]
          %v1277 = vld [vmem:[%s722 + $0x68] sm:$0xff]
          %v1278 = vld [vmem:[%s722 + $0x70] sm:$0xff]
          %v1279 = vld [vmem:[%s722 + $0x78] sm:$0xff]
          %v1280 = vld [vmem:[#allocation12] sm:$0xf]
          %v1281 = vld [vmem:[#allocation12 + $0x4] sm:$0xf]
          %v1282 = vld [vmem:[#allocation12 + $0x8] sm:$0xf]
          %v1283 = vld [vmem:[#allocation12 + $0xc] sm:$0xf]
          %v1284 = vld [vmem:[#allocation12 + $0x10] sm:$0xf]
          %v1285 = vld [vmem:[#allocation12 + $0x14] sm:$0xf]
          %v1286 = vld [vmem:[#allocation12 + $0x18] sm:$0xf]
          %v1287 = vld [vmem:[#allocation12 + $0x1c] sm:$0xf]
          %v1288 = vld [vmem:[#allocation12 + $0x20] sm:$0xf]
          %v1289 = vld [vmem:[#allocation12 + $0x24] sm:$0xf]
          %v1290 = vld [vmem:[#allocation12 + $0x28] sm:$0xf]
          %v1291 = vld [vmem:[#allocation12 + $0x2c] sm:$0xf]
          %v1292 = vld [vmem:[#allocation12 + $0x30] sm:$0xf]
          %v1293 = vld [vmem:[#allocation12 + $0x34] sm:$0xf]
          %v1294 = vld [vmem:[#allocation12 + $0x38] sm:$0xf]
          %v1295 = vld [vmem:[#allocation12 + $0x3c] sm:$0xf]
          %v1296 = vld [vmem:[#allocation12 + $0x40] sm:$0xf]
          %v1297 = vld [vmem:[#allocation12 + $0x44] sm:$0xf]
          %v1298 = vld [vmem:[#allocation12 + $0x48] sm:$0xf]
          %v1299 = vld [vmem:[#allocation12 + $0x4c] sm:$0xf]
          %v1300 = vld [vmem:[#allocation12 + $0x50] sm:$0xf]
          %v1301 = vld [vmem:[#allocation12 + $0x54] sm:$0xf]
          %v1302 = vld [vmem:[#allocation12 + $0x58] sm:$0xf]
          %v1303 = vld [vmem:[#allocation12 + $0x5c] sm:$0xf]
          %v1304 = vld [vmem:[#allocation12 + $0x60] sm:$0xf]
          %v1305 = vld [vmem:[#allocation12 + $0x64] sm:$0xf]
          %v1306 = vld [vmem:[#allocation12 + $0x68] sm:$0xf]
          %v1307 = vld [vmem:[#allocation12 + $0x6c] sm:$0xf]
          %v1308 = vld [vmem:[#allocation12 + $0x70] sm:$0xf]
          %v1309 = vld [vmem:[#allocation12 + $0x74] sm:$0xf]
          %v1310 = vld [vmem:[#allocation12 + $0x78] sm:$0xf]
          %v1311 = vld [vmem:[#allocation12 + $0x7c] sm:$0xf]
          %v1312 = vpack.c.bf16 %v1266, %v1264
          %v1313 = vpack.c.bf16 %v1267, %v1265
          %v1314 = vpack.c.bf16 %v1270, %v1268
          %v1315 = vpack.c.bf16 %v1271, %v1269
          %v1316 = vpack.c.bf16 %v1274, %v1272
          %v1317 = vpack.c.bf16 %v1275, %v1273
          %v1318 = vpack.c.bf16 %v1278, %v1276
          %v1319 = vpack.c.bf16 %v1279, %v1277
          %v1320 = vlaneseq
          %v1321 = vshrl.u32 %v1320, 7
          %v1322 = vsub.s32 3, %v1321
          %v1323 = vrot.slane %v894, %v1322
          %v1356 = vunpack.c.l.b16 %v1280
          %v1357 = vunpack.c.l.b16 %v1281
          %v1358 = vunpack.c.l.b16 %v1282
          %v1359 = vunpack.c.l.b16 %v1283
          %v1360 = vunpack.c.l.b16 %v1284
          %v1361 = vunpack.c.l.b16 %v1285
          %v1362 = vunpack.c.l.b16 %v1286
          %v1363 = vunpack.c.l.b16 %v1287
          %v1364 = vunpack.c.l.b16 %v1288
          %v1365 = vunpack.c.l.b16 %v1289
          %v1366 = vunpack.c.l.b16 %v1290
          %v1367 = vunpack.c.l.b16 %v1291
          %v1368 = vunpack.c.l.b16 %v1292
          %v1369 = vunpack.c.l.b16 %v1293
          %v1370 = vunpack.c.l.b16 %v1294
          %v1371 = vunpack.c.l.b16 %v1295
          %v1372 = vunpack.c.l.b16 %v1296
          %v1373 = vunpack.c.l.b16 %v1297
          %v1374 = vunpack.c.l.b16 %v1298
          %v1375 = vunpack.c.l.b16 %v1299
          %v1376 = vunpack.c.l.b16 %v1300
          %v1377 = vunpack.c.l.b16 %v1301
          %v1378 = vunpack.c.l.b16 %v1302
          %v1379 = vunpack.c.l.b16 %v1303
          %v1380 = vunpack.c.l.b16 %v1304
          %v1381 = vunpack.c.l.b16 %v1305
          %v1382 = vunpack.c.l.b16 %v1306
          %v1383 = vunpack.c.l.b16 %v1307
          %v1384 = vunpack.c.l.b16 %v1308
          %v1385 = vunpack.c.l.b16 %v1309
          %v1386 = vunpack.c.l.b16 %v1310
          %v1387 = vunpack.c.l.b16 %v1311
          %v1388 = vpack.c.b16 %v1357, %v1356
          %v1389 = vpack.c.b16 %v1359, %v1358
          %v1390 = vpack.c.b16 %v1361, %v1360
          %v1391 = vpack.c.b16 %v1363, %v1362
          %v1392 = vpack.c.b16 %v1365, %v1364
          %v1393 = vpack.c.b16 %v1367, %v1366
          %v1394 = vpack.c.b16 %v1369, %v1368
          %v1395 = vpack.c.b16 %v1371, %v1370
          %v1396 = vpack.c.b16 %v1373, %v1372
          %v1397 = vpack.c.b16 %v1375, %v1374
          %v1398 = vpack.c.b16 %v1377, %v1376
          %v1399 = vpack.c.b16 %v1379, %v1378
          %v1400 = vpack.c.b16 %v1381, %v1380
          %v1401 = vpack.c.b16 %v1383, %v1382
          %v1402 = vpack.c.b16 %v1385, %v1384
          %v1403 = vpack.c.b16 %v1387, %v1386
          %1420 = vmatprep.subr.bf16.mxu0 0
          %1421 = vmatpush1.bf16.msra.mxu0 %v1388
          %1422 = vmatprep.subr.bf16.mxu0 0
          %1423 = vmatpush1.bf16.msra.mxu0 %v1389
          %1424 = vmatprep.subr.bf16.mxu0 0
          %1425 = vmatpush1.bf16.msra.mxu0 %v1390
          %1426 = vmatprep.subr.bf16.mxu0 0
          %1427 = vmatpush1.bf16.msra.mxu0 %v1391
          %1428 = vmatprep.subr.bf16.mxu0 0
          %1429 = vmatpush1.bf16.msra.mxu0 %v1392
          %1430 = vmatprep.subr.bf16.mxu0 0
          %1431 = vmatpush1.bf16.msra.mxu0 %v1393
          %1432 = vmatprep.subr.bf16.mxu0 0
          %1433 = vmatpush1.bf16.msra.mxu0 %v1394
          %1434 = vmatprep.subr.bf16.mxu0 0
          %1435 = vmatpush1.bf16.msra.mxu0 %v1395
          %1436 = vmatprep.subr.bf16.mxu0 0
          %1437 = vmatpush1.bf16.msra.mxu0 %v1396
          %1438 = vmatprep.subr.bf16.mxu0 0
          %1439 = vmatpush1.bf16.msra.mxu0 %v1397
          %1440 = vmatprep.subr.bf16.mxu0 0
          %1441 = vmatpush1.bf16.msra.mxu0 %v1398
          %1442 = vmatprep.subr.bf16.mxu0 0
          %1443 = vmatpush1.bf16.msra.mxu0 %v1399
          %1444 = vmatprep.subr.bf16.mxu0 0
          %1445 = vmatpush1.bf16.msra.mxu0 %v1400
          %1446 = vmatprep.subr.bf16.mxu0 0
          %1447 = vmatpush1.bf16.msra.mxu0 %v1401
          %1448 = vmatprep.subr.bf16.mxu0 0
          %1449 = vmatpush1.bf16.msra.mxu0 %v1402
          %1450 = vmatprep.subr.bf16.mxu0 0
          %1451 = vmatpush1.bf16.msra.mxu0 %v1403
          %1452 = vmatprep.mubr.bf16.mxu0 %v1313
          %1453 = vmatmul.mubr.bf16.gmra.mrb[0].mxu0 %v1312
          %v1454 = vpop.f32.mrb[0].mxu0
          %v1455 = vadd.f32 %v1323, %v1454
          %v1456 = vpop.f32.mrb[0].mxu0
          %v1457 = vpop.f32.mrb[0].mxu0
          %v1458 = vadd.f32 %v1323, %v1457
          %v1459 = vpop.f32.mrb[0].mxu0
          %1460 = vmatprep.mubr.bf16.mxu0 %v1315
          %1461 = vmatmul.mubr.bf16.gmra.mrb[0].mxu0 %v1314
          %v1462 = vpop.f32.mrb[0].mxu0
          %v1463 = vadd.f32 %v1323, %v1462
          %v1464 = vpop.f32.mrb[0].mxu0
          %v1465 = vpop.f32.mrb[0].mxu0
          %v1466 = vadd.f32 %v1323, %v1465
          %v1467 = vpop.f32.mrb[0].mxu0
          %1468 = vmatprep.mubr.bf16.mxu0 %v1317
          %1469 = vmatmul.mubr.bf16.gmra.mrb[0].mxu0 %v1316
          %v1470 = vpop.f32.mrb[0].mxu0
          %v1471 = vadd.f32 %v1323, %v1470
          %v1472 = vpop.f32.mrb[0].mxu0
          %v1473 = vpop.f32.mrb[0].mxu0
          %v1474 = vadd.f32 %v1323, %v1473
          %v1475 = vpop.f32.mrb[0].mxu0
          %1476 = vmatprep.mubr.bf16.mxu0 %v1319
          %1477 = vmatmul.mubr.bf16.gmra.mrb[0].mxu0 %v1318
          %v1478 = vpop.f32.mrb[0].mxu0
          %v1479 = vadd.f32 %v1323, %v1478
          %v1480 = vpop.f32.mrb[0].mxu0
          %v1481 = vpop.f32.mrb[0].mxu0
          %v1482 = vadd.f32 %v1323, %v1481
          %v1483 = vpop.f32.mrb[0].mxu0
          %1484 = vdwg.mxu0
          %1485 = vadd.xlane.f32.xlu0 %v1455
          %v1486 = vpop.xlane.xlu0 %1485
          %1487 = vadd.xlane.f32.xlu0 %v1458
          %v1488 = vpop.xlane.xlu0 %1487
          %1489 = vadd.xlane.f32.xlu0 %v1463
          %v1490 = vpop.xlane.xlu0 %1489
          %1491 = vadd.xlane.f32.xlu0 %v1466
          %v1492 = vpop.xlane.xlu0 %1491
          %1493 = vadd.xlane.f32.xlu0 %v1471
          %v1494 = vpop.xlane.xlu0 %1493
          %1495 = vadd.xlane.f32.xlu0 %v1474
          %v1496 = vpop.xlane.xlu0 %1495
          %1497 = vadd.xlane.f32.xlu0 %v1479
          %v1498 = vpop.xlane.xlu0 %1497
          %1499 = vadd.xlane.f32.xlu0 %v1482
          %v1500 = vpop.xlane.xlu0 %1499
          %v1501 = vrcp.pop 128.0
          %v1502 = vmul.f32 %v1486, %v1501
          %v1503 = vmul.f32 %v1488, %v1501
          %v1504 = vmul.f32 %v1490, %v1501
          %v1505 = vmul.f32 %v1492, %v1501
          %v1506 = vmul.f32 %v1494, %v1501
          %v1507 = vmul.f32 %v1496, %v1501
          %v1508 = vmul.f32 %v1498, %v1501
          %v1509 = vmul.f32 %v1500, %v1501
          %v1510 = vsub.f32 %v1455, %v1502
          %v1511 = vsub.f32 %v1458, %v1503
          %v1512 = vsub.f32 %v1463, %v1504
          %v1513 = vsub.f32 %v1466, %v1505
          %v1514 = vsub.f32 %v1471, %v1506
          %v1515 = vsub.f32 %v1474, %v1507
          %v1516 = vsub.f32 %v1479, %v1508
          %v1517 = vsub.f32 %v1482, %v1509
          %v1518 = vmul.f32 %v1510, %v1510
          %v1519 = vmul.f32 %v1511, %v1511
          %v1520 = vmul.f32 %v1512, %v1512
          %v1521 = vmul.f32 %v1513, %v1513
          %v1522 = vmul.f32 %v1514, %v1514
          %v1523 = vmul.f32 %v1515, %v1515
          %v1524 = vmul.f32 %v1516, %v1516
          %v1525 = vmul.f32 %v1517, %v1517
          %1526 = vadd.xlane.f32.xlu0 %v1518
          %v1527 = vpop.xlane.xlu0 %1526
          %1528 = vadd.xlane.f32.xlu0 %v1519
          %v1529 = vpop.xlane.xlu0 %1528
          %1530 = vadd.xlane.f32.xlu0 %v1520
          %v1531 = vpop.xlane.xlu0 %1530
          %1532 = vadd.xlane.f32.xlu0 %v1521
          %v1533 = vpop.xlane.xlu0 %1532
          %1534 = vadd.xlane.f32.xlu0 %v1522
          %v1535 = vpop.xlane.xlu0 %1534
          %1536 = vadd.xlane.f32.xlu0 %v1523
          %v1537 = vpop.xlane.xlu0 %1536
          %1538 = vadd.xlane.f32.xlu0 %v1524
          %v1539 = vpop.xlane.xlu0 %1538
          %1540 = vadd.xlane.f32.xlu0 %v1525
          %v1541 = vpop.xlane.xlu0 %1540
          %v1542 = vmul.f32 %v1527, %v1501
          %v1543 = vmul.f32 %v1529, %v1501
          %v1544 = vmul.f32 %v1531, %v1501
          %v1545 = vmul.f32 %v1533, %v1501
          %v1546 = vmul.f32 %v1535, %v1501
          %v1547 = vmul.f32 %v1537, %v1501
          %v1548 = vmul.f32 %v1539, %v1501
          %v1549 = vmul.f32 %v1541, %v1501
          %v1550 = vadd.f32 %v1542, 1e-05
          %v1551 = vadd.f32 %v1543, 1e-05
          %v1552 = vadd.f32 %v1544, 1e-05
          %v1553 = vadd.f32 %v1545, 1e-05
          %v1554 = vadd.f32 %v1546, 1e-05
          %v1555 = vadd.f32 %v1547, 1e-05
          %v1556 = vadd.f32 %v1548, 1e-05
          %v1557 = vadd.f32 %v1549, 1e-05
          %v1558 = vrsqrt.pop %v1550
          %v1559 = vrsqrt.pop %v1551
          %v1560 = vrsqrt.pop %v1552
          %v1561 = vrsqrt.pop %v1553
          %v1562 = vrsqrt.pop %v1554
          %v1563 = vrsqrt.pop %v1555
          %v1564 = vrsqrt.pop %v1556
          %v1565 = vrsqrt.pop %v1557
          %v1566 = vmul.f32 %v1510, %v1558
          %v1567 = vmul.f32 %v1511, %v1559
          %v1568 = vmul.f32 %v1512, %v1560
          %v1569 = vmul.f32 %v1513, %v1561
          %v1570 = vmul.f32 %v1514, %v1562
          %v1571 = vmul.f32 %v1515, %v1563
          %v1572 = vmul.f32 %v1516, %v1564
          %v1573 = vmul.f32 %v1517, %v1565
          %v1574 = vlaneseq
          %v1575 = vshrl.u32 %v1574, 7
          %v1576 = vsub.s32 4, %v1575
          %v1577 = vrot.slane %v894, %v1576
          %v1578 = vmul.f32 %v1566, %v1577
          %v1579 = vmul.f32 %v1567, %v1577
          %v1580 = vmul.f32 %v1568, %v1577
          %v1581 = vmul.f32 %v1569, %v1577
          %v1582 = vmul.f32 %v1570, %v1577
          %v1583 = vmul.f32 %v1571, %v1577
          %v1584 = vmul.f32 %v1572, %v1577
          %v1585 = vmul.f32 %v1573, %v1577
          %v1586 = vlaneseq
          %v1587 = vshrl.u32 %v1586, 7
          %v1588 = vsub.s32 5, %v1587
          %v1589 = vrot.slane %v894, %v1588
          %v1590 = vadd.f32 %v1578, %v1589
          %v1591 = vadd.f32 %v1579, %v1589
          %v1592 = vadd.f32 %v1580, %v1589
          %v1593 = vadd.f32 %v1581, %v1589
          %v1594 = vadd.f32 %v1582, %v1589
          %v1595 = vadd.f32 %v1583, %v1589
          %v1596 = vadd.f32 %v1584, %v1589
          %v1597 = vadd.f32 %v1585, %v1589
          %v1598 = vxor.u32 %v1590, 2147483648
          %v1599 = vxor.u32 %v1591, 2147483648
          %v1600 = vxor.u32 %v1592, 2147483648
          %v1601 = vxor.u32 %v1593, 2147483648
          %v1602 = vxor.u32 %v1594, 2147483648
          %v1603 = vxor.u32 %v1595, 2147483648
          %v1604 = vxor.u32 %v1596, 2147483648
          %v1605 = vxor.u32 %v1597, 2147483648
          %v1606 = vmul.f32 %v1598, 1.442695
          %v1607 = vpow.pop %v1606
          %v1608 = vmul.f32 %v1599, 1.442695
          %v1609 = vpow.pop %v1608
          %v1610 = vmul.f32 %v1600, 1.442695
          %v1611 = vpow.pop %v1610
          %v1612 = vmul.f32 %v1601, 1.442695
          %v1613 = vpow.pop %v1612
          %v1614 = vmul.f32 %v1602, 1.442695
          %v1615 = vpow.pop %v1614
          %v1616 = vmul.f32 %v1603, 1.442695
          %v1617 = vpow.pop %v1616
          %v1618 = vmul.f32 %v1604, 1.442695
          %v1619 = vpow.pop %v1618
          %v1620 = vmul.f32 %v1605, 1.442695
          %v1621 = vpow.pop %v1620
          %v1622 = vadd.f32 %v1607, 1.0
          %v1623 = vadd.f32 %v1609, 1.0
          %v1624 = vadd.f32 %v1611, 1.0
          %v1625 = vadd.f32 %v1613, 1.0
          %v1626 = vadd.f32 %v1615, 1.0
          %v1627 = vadd.f32 %v1617, 1.0
          %v1628 = vadd.f32 %v1619, 1.0
          %v1629 = vadd.f32 %v1621, 1.0
          %v1630 = vrcp.pop %v1622
          %v1631 = vmul.f32 1.0, %v1630
          %v1632 = vrcp.pop %v1623
          %v1633 = vmul.f32 1.0, %v1632
          %v1634 = vrcp.pop %v1624
          %v1635 = vmul.f32 1.0, %v1634
          %v1636 = vrcp.pop %v1625
          %v1637 = vmul.f32 1.0, %v1636
          %v1638 = vrcp.pop %v1626
          %v1639 = vmul.f32 1.0, %v1638
          %v1640 = vrcp.pop %v1627
          %v1641 = vmul.f32 1.0, %v1640
          %v1642 = vrcp.pop %v1628
          %v1643 = vmul.f32 1.0, %v1642
          %v1644 = vrcp.pop %v1629
          %v1645 = vmul.f32 1.0, %v1644
          %v1646 = vmul.f32 %v1590, %v1631
          %v1647 = vmul.f32 %v1591, %v1633
          %v1648 = vmul.f32 %v1592, %v1635
          %v1649 = vmul.f32 %v1593, %v1637
          %v1650 = vmul.f32 %v1594, %v1639
          %v1651 = vmul.f32 %v1595, %v1641
          %v1652 = vmul.f32 %v1596, %v1643
          %v1653 = vmul.f32 %v1597, %v1645
          %v1654 = vld [vmem:[#allocation13] sm:$0xf]
          %v1655 = vld [vmem:[#allocation13 + $0x4] sm:$0xf]
          %v1656 = vld [vmem:[#allocation13 + $0x8] sm:$0xf]
          %v1657 = vld [vmem:[#allocation13 + $0xc] sm:$0xf]
          %v1658 = vld [vmem:[#allocation13 + $0x10] sm:$0xf]
          %v1659 = vld [vmem:[#allocation13 + $0x14] sm:$0xf]
          %v1660 = vld [vmem:[#allocation13 + $0x18] sm:$0xf]
          %v1661 = vld [vmem:[#allocation13 + $0x1c] sm:$0xf]
          %v1662 = vld [vmem:[#allocation13 + $0x20] sm:$0xf]
          %v1663 = vld [vmem:[#allocation13 + $0x24] sm:$0xf]
          %v1664 = vld [vmem:[#allocation13 + $0x28] sm:$0xf]
          %v1665 = vld [vmem:[#allocation13 + $0x2c] sm:$0xf]
          %v1666 = vld [vmem:[#allocation13 + $0x30] sm:$0xf]
          %v1667 = vld [vmem:[#allocation13 + $0x34] sm:$0xf]
          %v1668 = vld [vmem:[#allocation13 + $0x38] sm:$0xf]
          %v1669 = vld [vmem:[#allocation13 + $0x3c] sm:$0xf]
          %v1670 = vpack.c.bf16 %v1647, %v1646
          %v1671 = vpack.c.bf16 %v1649, %v1648
          %v1672 = vpack.c.bf16 %v1651, %v1650
          %v1673 = vpack.c.bf16 %v1653, %v1652
          %v1674 = vlaneseq
          %v1675 = vshrl.u32 %v1674, 7
          %v1676 = vsub.s32 6, %v1675
          %v1677 = vrot.slane %v894, %v1676
          %v1694 = vunpack.c.l.b16 %v1654
          %v1695 = vunpack.c.l.b16 %v1655
          %v1696 = vunpack.c.l.b16 %v1656
          %v1697 = vunpack.c.l.b16 %v1657
          %v1698 = vunpack.c.l.b16 %v1658
          %v1699 = vunpack.c.l.b16 %v1659
          %v1700 = vunpack.c.l.b16 %v1660
          %v1701 = vunpack.c.l.b16 %v1661
          %v1702 = vunpack.c.l.b16 %v1662
          %v1703 = vunpack.c.l.b16 %v1663
          %v1704 = vunpack.c.l.b16 %v1664
          %v1705 = vunpack.c.l.b16 %v1665
          %v1706 = vunpack.c.l.b16 %v1666
          %v1707 = vunpack.c.l.b16 %v1667
          %v1708 = vunpack.c.l.b16 %v1668
          %v1709 = vunpack.c.l.b16 %v1669
          %v1710 = vpack.c.b16 %v1695, %v1694
          %v1711 = vpack.c.b16 %v1697, %v1696
          %v1712 = vpack.c.b16 %v1699, %v1698
          %v1713 = vpack.c.b16 %v1701, %v1700
          %v1714 = vpack.c.b16 %v1703, %v1702
          %v1715 = vpack.c.b16 %v1705, %v1704
          %v1716 = vpack.c.b16 %v1707, %v1706
          %v1717 = vpack.c.b16 %v1709, %v1708
          %1726 = vmatprep.subr.bf16.mxu0 0
          %1727 = vmatpush1.bf16.msra.mxu0 %v1710
          %1728 = vmatprep.subr.bf16.mxu0 0
          %1729 = vmatpush1.bf16.msra.mxu0 %v1711
          %1730 = vmatprep.subr.bf16.mxu0 0
          %1731 = vmatpush1.bf16.msra.mxu0 %v1712
          %1732 = vmatprep.subr.bf16.mxu0 0
          %1733 = vmatpush1.bf16.msra.mxu0 %v1713
          %1734 = vmatprep.subr.bf16.mxu0 0
          %1735 = vmatpush1.bf16.msra.mxu0 %v1714
          %1736 = vmatprep.subr.bf16.mxu0 0
          %1737 = vmatpush1.bf16.msra.mxu0 %v1715
          %1738 = vmatprep.subr.bf16.mxu0 0
          %1739 = vmatpush1.bf16.msra.mxu0 %v1716
          %1740 = vmatprep.subr.bf16.mxu0 0
          %1741 = vmatpush1.bf16.msra.mxu0 %v1717
          %1742 = vmatprep.subr.bf16.mxu0 0
          %1743 = vmatpush1.bf16.msra.mxu0 0
          %1744 = vmatprep.subr.bf16.mxu0 0
          %1745 = vmatpush1.bf16.msra.mxu0 0
          %1746 = vmatprep.subr.bf16.mxu0 0
          %1747 = vmatpush1.bf16.msra.mxu0 0
          %1748 = vmatprep.subr.bf16.mxu0 0
          %1749 = vmatpush1.bf16.msra.mxu0 0
          %1750 = vmatprep.subr.bf16.mxu0 0
          %1751 = vmatpush1.bf16.msra.mxu0 0
          %1752 = vmatprep.subr.bf16.mxu0 0
          %1753 = vmatpush1.bf16.msra.mxu0 0
          %1754 = vmatprep.subr.bf16.mxu0 0
          %1755 = vmatpush1.bf16.msra.mxu0 0
          %1756 = vmatprep.subr.bf16.mxu0 0
          %1757 = vmatpush1.bf16.msra.mxu0 0
          %1758 = vmatprep.mubr.bf16.mxu0 0
          %1759 = vmatmul.mubr.bf16.gmra.mrb[0].mxu0 %v1670
          %v1760 = vpop.f32.mrb[0].mxu0
          %v1761 = vadd.f32 %v1677, %v1760
          %v1762 = vpop.f32.mrb[0].mxu0
          %v1763 = vpop.f32.mrb[0].mxu0
          %v1764 = vadd.f32 %v1677, %v1763
          %v1765 = vpop.f32.mrb[0].mxu0
          %1766 = vmatprep.mubr.bf16.mxu0 0
          %1767 = vmatmul.mubr.bf16.gmra.mrb[0].mxu0 %v1671
          %v1768 = vpop.f32.mrb[0].mxu0
          %v1769 = vadd.f32 %v1677, %v1768
          %v1770 = vpop.f32.mrb[0].mxu0
          %v1771 = vpop.f32.mrb[0].mxu0
          %v1772 = vadd.f32 %v1677, %v1771
          %v1773 = vpop.f32.mrb[0].mxu0
          %1774 = vmatprep.mubr.bf16.mxu0 0
          %1775 = vmatmul.mubr.bf16.gmra.mrb[0].mxu0 %v1672
          %v1776 = vpop.f32.mrb[0].mxu0
          %v1777 = vadd.f32 %v1677, %v1776
          %v1778 = vpop.f32.mrb[0].mxu0
          %v1779 = vpop.f32.mrb[0].mxu0
          %v1780 = vadd.f32 %v1677, %v1779
          %v1781 = vpop.f32.mrb[0].mxu0
          %1782 = vmatprep.mubr.bf16.mxu0 0
          %1783 = vmatmul.mubr.bf16.gmra.mrb[0].mxu0 %v1673
          %v1784 = vpop.f32.mrb[0].mxu0
          %v1785 = vadd.f32 %v1677, %v1784
          %v1786 = vpop.f32.mrb[0].mxu0
          %v1787 = vpop.f32.mrb[0].mxu0
          %v1788 = vadd.f32 %v1677, %v1787
          %v1789 = vpop.f32.mrb[0].mxu0
          %1790 = vdwg.mxu0
          %1791 = vst [vmem:[#allocation3] sm:$0xff] %v1761
          %1792 = vst [vmem:[#allocation3 + $0x8] sm:$0xff] %v1764
          %1793 = vst [vmem:[#allocation3 + $0x10] sm:$0xff] %v1769
          %1794 = vst [vmem:[#allocation3 + $0x18] sm:$0xff] %v1772
          %1795 = vst [vmem:[#allocation3 + $0x20] sm:$0xff] %v1777
          %1796 = vst [vmem:[#allocation3 + $0x28] sm:$0xff] %v1780
          %1797 = vst [vmem:[#allocation3 + $0x30] sm:$0xff] %v1785
          %1798 = vst [vmem:[#allocation3 + $0x38] sm:$0xff] %v1788
          %v1799 = vld [vmem:[#allocation15] sm:$0xf]
          %v1800 = vld [vmem:[#allocation15 + $0x4] sm:$0xf]
          %v1801 = vld [vmem:[#allocation15 + $0x8] sm:$0xf]
          %v1802 = vld [vmem:[#allocation15 + $0xc] sm:$0xf]
          %v1803 = vld [vmem:[#allocation15 + $0x10] sm:$0xf]
          %v1804 = vld [vmem:[#allocation15 + $0x14] sm:$0xf]
          %v1805 = vld [vmem:[#allocation15 + $0x18] sm:$0xf]
          %v1806 = vld [vmem:[#allocation15 + $0x1c] sm:$0xf]
          %v1807 = vld [vmem:[#allocation15 + $0x20] sm:$0xf]
          %v1808 = vld [vmem:[#allocation15 + $0x24] sm:$0xf]
          %v1809 = vld [vmem:[#allocation15 + $0x28] sm:$0xf]
          %v1810 = vld [vmem:[#allocation15 + $0x2c] sm:$0xf]
          %v1811 = vld [vmem:[#allocation15 + $0x30] sm:$0xf]
          %v1812 = vld [vmem:[#allocation15 + $0x34] sm:$0xf]
          %v1813 = vld [vmem:[#allocation15 + $0x38] sm:$0xf]
          %v1814 = vld [vmem:[#allocation15 + $0x3c] sm:$0xf]
          %v1815 = vpack.c.bf16 %v1008, %v1007
          %v1816 = vpack.c.bf16 %v1010, %v1009
          %v1817 = vpack.c.bf16 %v1012, %v1011
          %v1818 = vpack.c.bf16 %v1014, %v1013
          %v1819 = vlaneseq
          %v1820 = vshrl.u32 %v1819, 7
          %v1821 = vsub.s32 7, %v1820
          %v1822 = vrot.slane %v894, %v1821
          %v1839 = vunpack.c.l.b16 %v1799
          %v1840 = vunpack.c.l.b16 %v1800
          %v1841 = vunpack.c.l.b16 %v1801
          %v1842 = vunpack.c.l.b16 %v1802
          %v1843 = vunpack.c.l.b16 %v1803
          %v1844 = vunpack.c.l.b16 %v1804
          %v1845 = vunpack.c.l.b16 %v1805
          %v1846 = vunpack.c.l.b16 %v1806
          %v1847 = vunpack.c.l.b16 %v1807
          %v1848 = vunpack.c.l.b16 %v1808
          %v1849 = vunpack.c.l.b16 %v1809
          %v1850 = vunpack.c.l.b16 %v1810
          %v1851 = vunpack.c.l.b16 %v1811
          %v1852 = vunpack.c.l.b16 %v1812
          %v1853 = vunpack.c.l.b16 %v1813
          %v1854 = vunpack.c.l.b16 %v1814
          %v1855 = vpack.c.b16 %v1840, %v1839
          %v1856 = vpack.c.b16 %v1842, %v1841
          %v1857 = vpack.c.b16 %v1844, %v1843
          %v1858 = vpack.c.b16 %v1846, %v1845
          %v1859 = vpack.c.b16 %v1848, %v1847
          %v1860 = vpack.c.b16 %v1850, %v1849
          %v1861 = vpack.c.b16 %v1852, %v1851
          %v1862 = vpack.c.b16 %v1854, %v1853
          %1871 = vmatprep.subr.bf16.mxu0 0
          %1872 = vmatpush1.bf16.msra.mxu0 %v1855
          %1873 = vmatprep.subr.bf16.mxu0 0
          %1874 = vmatpush1.bf16.msra.mxu0 %v1856
          %1875 = vmatprep.subr.bf16.mxu0 0
          %1876 = vmatpush1.bf16.msra.mxu0 %v1857
          %1877 = vmatprep.subr.bf16.mxu0 0
          %1878 = vmatpush1.bf16.msra.mxu0 %v1858
          %1879 = vmatprep.subr.bf16.mxu0 0
          %1880 = vmatpush1.bf16.msra.mxu0 %v1859
          %1881 = vmatprep.subr.bf16.mxu0 0
          %1882 = vmatpush1.bf16.msra.mxu0 %v1860
          %1883 = vmatprep.subr.bf16.mxu0 0
          %1884 = vmatpush1.bf16.msra.mxu0 %v1861
          %1885 = vmatprep.subr.bf16.mxu0 0
          %1886 = vmatpush1.bf16.msra.mxu0 %v1862
          %1887 = vmatprep.subr.bf16.mxu0 0
          %1888 = vmatpush1.bf16.msra.mxu0 0
          %1889 = vmatprep.subr.bf16.mxu0 0
          %1890 = vmatpush1.bf16.msra.mxu0 0
          %1891 = vmatprep.subr.bf16.mxu0 0
          %1892 = vmatpush1.bf16.msra.mxu0 0
          %1893 = vmatprep.subr.bf16.mxu0 0
          %1894 = vmatpush1.bf16.msra.mxu0 0
          %1895 = vmatprep.subr.bf16.mxu0 0
          %1896 = vmatpush1.bf16.msra.mxu0 0
          %1897 = vmatprep.subr.bf16.mxu0 0
          %1898 = vmatpush1.bf16.msra.mxu0 0
          %1899 = vmatprep.subr.bf16.mxu0 0
          %1900 = vmatpush1.bf16.msra.mxu0 0
          %1901 = vmatprep.subr.bf16.mxu0 0
          %1902 = vmatpush1.bf16.msra.mxu0 0
          %1903 = vmatprep.mubr.bf16.mxu0 0
          %1904 = vmatmul.mubr.bf16.gmra.mrb[0].mxu0 %v1815
          %v1905 = vpop.f32.mrb[0].mxu0
          %v1906 = vadd.f32 %v1822, %v1905
          %v1907 = vpop.f32.mrb[0].mxu0
          %v1908 = vpop.f32.mrb[0].mxu0
          %v1909 = vadd.f32 %v1822, %v1908
          %v1910 = vpop.f32.mrb[0].mxu0
          %1911 = vmatprep.mubr.bf16.mxu0 0
          %1912 = vmatmul.mubr.bf16.gmra.mrb[0].mxu0 %v1816
          %v1913 = vpop.f32.mrb[0].mxu0
          %v1914 = vadd.f32 %v1822, %v1913
          %v1915 = vpop.f32.mrb[0].mxu0
          %v1916 = vpop.f32.mrb[0].mxu0
          %v1917 = vadd.f32 %v1822, %v1916
          %v1918 = vpop.f32.mrb[0].mxu0
          %1919 = vmatprep.mubr.bf16.mxu0 0
          %1920 = vmatmul.mubr.bf16.gmra.mrb[0].mxu0 %v1817
          %v1921 = vpop.f32.mrb[0].mxu0
          %v1922 = vadd.f32 %v1822, %v1921
          %v1923 = vpop.f32.mrb[0].mxu0
          %v1924 = vpop.f32.mrb[0].mxu0
          %v1925 = vadd.f32 %v1822, %v1924
          %v1926 = vpop.f32.mrb[0].mxu0
          %1927 = vmatprep.mubr.bf16.mxu0 0
          %1928 = vmatmul.mubr.bf16.gmra.mrb[0].mxu0 %v1818
          %v1929 = vpop.f32.mrb[0].mxu0
          %v1930 = vadd.f32 %v1822, %v1929
          %v1931 = vpop.f32.mrb[0].mxu0
          %v1932 = vpop.f32.mrb[0].mxu0
          %v1933 = vadd.f32 %v1822, %v1932
          %v1934 = vpop.f32.mrb[0].mxu0
          %1935 = vdwg.mxu0
          %v1936 = vadd.f32 %v1906, %v1234
          %v1937 = vadd.f32 %v1909, %v1237
          %v1938 = vadd.f32 %v1914, %v1242
          %v1939 = vadd.f32 %v1917, %v1245
          %v1940 = vadd.f32 %v1922, %v1250
          %v1941 = vadd.f32 %v1925, %v1253
          %v1942 = vadd.f32 %v1930, %v1258
          %v1943 = vadd.f32 %v1933, %v1261
          %1944 = vst [vmem:[#allocation2] sm:$0xff] %v1936
          %1945 = vst [vmem:[#allocation2 + $0x8] sm:$0xff] %v1937
          %1946 = vst [vmem:[#allocation2 + $0x10] sm:$0xff] %v1938
          %1947 = vst [vmem:[#allocation2 + $0x18] sm:$0xff] %v1939
          %1948 = vst [vmem:[#allocation2 + $0x20] sm:$0xff] %v1940
          %1949 = vst [vmem:[#allocation2 + $0x28] sm:$0xff] %v1941
          %1950 = vst [vmem:[#allocation2 + $0x30] sm:$0xff] %v1942
          %1951 = vst [vmem:[#allocation2 + $0x38] sm:$0xff] %v1943
        $region136: #{tpu_custom_call.1} parent=83 // pred_fallthru
          _
        %v1952 = vld [vmem:[%s755] sm:$0x3f]
        %v1953 = vld [vmem:[#allocation2] sm:$0xff]
        %v1954 = vld [vmem:[#allocation2 + $0x8] sm:$0xff]
        %v1955 = vld [vmem:[#allocation2 + $0x10] sm:$0xff]
        %v1956 = vld [vmem:[#allocation2 + $0x18] sm:$0xff]
        %v1957 = vld [vmem:[#allocation2 + $0x20] sm:$0xff]
        %v1958 = vld [vmem:[#allocation2 + $0x28] sm:$0xff]
        %v1959 = vld [vmem:[#allocation2 + $0x30] sm:$0xff]
        %v1960 = vld [vmem:[#allocation2 + $0x38] sm:$0xff]
        %p1961 = scmp.lt.s32.totalorder %s44, 0
        %s1962 = ssub.s32 0, %s44
        %s1963 = scalar_select %p1961, %s1962, %s44
        %s1964 = sand.u32 %s1963, 1
        %s1965 = ssub.s32 0, %s1964
        %s1966 = scalar_select %p1961, %s1965, %s1964
        %p1967 = scmp.ne.s32.totalorder %s1966, 0
        %p1968 = scmp.lt.s32.totalorder %s1966, 0
        %p1969 = pnand %p1968, %p1967
        %p1970 = pneg %p1969
        %s1971 = sadd.s32 %s1966, 2
        %s1972 = scalar_select %p1970, %s1971, %s1966
        %p1973 = scmp.eq.s32.totalorder %s1972, 0
        %s1974 = scalar_select %p1973, 1, 0
        %s1975 = scvt.s32.f32 %s1974
        %v1976 = vld [vmem:[#allocation3] sm:$0xff]
        %v1977 = vld [vmem:[#allocation3 + $0x8] sm:$0xff]
        %v1978 = vld [vmem:[#allocation3 + $0x10] sm:$0xff]
        %v1979 = vld [vmem:[#allocation3 + $0x18] sm:$0xff]
        %v1980 = vld [vmem:[#allocation3 + $0x20] sm:$0xff]
        %v1981 = vld [vmem:[#allocation3 + $0x28] sm:$0xff]
        %v1982 = vld [vmem:[#allocation3 + $0x30] sm:$0xff]
        %v1983 = vld [vmem:[#allocation3 + $0x38] sm:$0xff]
        %v1984 = vstv %s1975
        %v1985 = vmul.f32 %v1984, %v1976
        %v1986 = vmul.f32 %v1984, %v1977
        %v1987 = vmul.f32 %v1984, %v1978
        %v1988 = vmul.f32 %v1984, %v1979
        %v1989 = vmul.f32 %v1984, %v1980
        %v1990 = vmul.f32 %v1984, %v1981
        %v1991 = vmul.f32 %v1984, %v1982
        %v1992 = vmul.f32 %v1984, %v1983
        %s1993 = ssub.f32 1.0, %s1975
        %v1994 = vstv %s1993
        %v1995 = vmul.f32 %v1994, %v1953
        %v1996 = vmul.f32 %v1994, %v1954
        %v1997 = vmul.f32 %v1994, %v1955
        %v1998 = vmul.f32 %v1994, %v1956
        %v1999 = vmul.f32 %v1994, %v1957
        %v2000 = vmul.f32 %v1994, %v1958
        %v2001 = vmul.f32 %v1994, %v1959
        %v2002 = vmul.f32 %v1994, %v1960
        %v2003 = vadd.f32 %v1985, %v1995
        %v2004 = vadd.f32 %v1986, %v1996
        %v2005 = vadd.f32 %v1987, %v1997
        %v2006 = vadd.f32 %v1988, %v1998
        %v2007 = vadd.f32 %v1989, %v1999
        %v2008 = vadd.f32 %v1990, %v2000
        %v2009 = vadd.f32 %v1991, %v2001
        %v2010 = vadd.f32 %v1992, %v2002
        %2011 = vadd.xlane.f32.xlu0 %v2003
        %v2012 = vpop.xlane.xlu0 %2011
        %2013 = vadd.xlane.f32.xlu0 %v2004
        %v2014 = vpop.xlane.xlu0 %2013
        %2015 = vadd.xlane.f32.xlu0 %v2005
        %v2016 = vpop.xlane.xlu0 %2015
        %2017 = vadd.xlane.f32.xlu0 %v2006
        %v2018 = vpop.xlane.xlu0 %2017
        %2019 = vadd.xlane.f32.xlu0 %v2007
        %v2020 = vpop.xlane.xlu0 %2019
        %2021 = vadd.xlane.f32.xlu0 %v2008
        %v2022 = vpop.xlane.xlu0 %2021
        %2023 = vadd.xlane.f32.xlu0 %v2009
        %v2024 = vpop.xlane.xlu0 %2023
        %2025 = vadd.xlane.f32.xlu0 %v2010
        %v2026 = vpop.xlane.xlu0 %2025
        %v2027 = vrcp.pop 128.0
        %v2028 = vmul.f32 %v2012, %v2027
        %v2029 = vmul.f32 %v2014, %v2027
        %v2030 = vmul.f32 %v2016, %v2027
        %v2031 = vmul.f32 %v2018, %v2027
        %v2032 = vmul.f32 %v2020, %v2027
        %v2033 = vmul.f32 %v2022, %v2027
        %v2034 = vmul.f32 %v2024, %v2027
        %v2035 = vmul.f32 %v2026, %v2027
        %v2036 = vsub.f32 %v2003, %v2028
        %v2037 = vsub.f32 %v2004, %v2029
        %v2038 = vsub.f32 %v2005, %v2030
        %v2039 = vsub.f32 %v2006, %v2031
        %v2040 = vsub.f32 %v2007, %v2032
        %v2041 = vsub.f32 %v2008, %v2033
        %v2042 = vsub.f32 %v2009, %v2034
        %v2043 = vsub.f32 %v2010, %v2035
        %v2044 = vmul.f32 %v2036, %v2036
        %v2045 = vmul.f32 %v2037, %v2037
        %v2046 = vmul.f32 %v2038, %v2038
        %v2047 = vmul.f32 %v2039, %v2039
        %v2048 = vmul.f32 %v2040, %v2040
        %v2049 = vmul.f32 %v2041, %v2041
        %v2050 = vmul.f32 %v2042, %v2042
        %v2051 = vmul.f32 %v2043, %v2043
        %2052 = vadd.xlane.f32.xlu0 %v2044
        %v2053 = vpop.xlane.xlu0 %2052
        %2054 = vadd.xlane.f32.xlu0 %v2045
        %v2055 = vpop.xlane.xlu0 %2054
        %2056 = vadd.xlane.f32.xlu0 %v2046
        %v2057 = vpop.xlane.xlu0 %2056
        %2058 = vadd.xlane.f32.xlu0 %v2047
        %v2059 = vpop.xlane.xlu0 %2058
        %2060 = vadd.xlane.f32.xlu0 %v2048
        %v2061 = vpop.xlane.xlu0 %2060
        %2062 = vadd.xlane.f32.xlu0 %v2049
        %v2063 = vpop.xlane.xlu0 %2062
        %2064 = vadd.xlane.f32.xlu0 %v2050
        %v2065 = vpop.xlane.xlu0 %2064
        %2066 = vadd.xlane.f32.xlu0 %v2051
        %v2067 = vpop.xlane.xlu0 %2066
        %v2068 = vmul.f32 %v2053, %v2027
        %v2069 = vmul.f32 %v2055, %v2027
        %v2070 = vmul.f32 %v2057, %v2027
        %v2071 = vmul.f32 %v2059, %v2027
        %v2072 = vmul.f32 %v2061, %v2027
        %v2073 = vmul.f32 %v2063, %v2027
        %v2074 = vmul.f32 %v2065, %v2027
        %v2075 = vmul.f32 %v2067, %v2027
        %v2076 = vadd.f32 %v2068, 1e-05
        %v2077 = vadd.f32 %v2069, 1e-05
        %v2078 = vadd.f32 %v2070, 1e-05
        %v2079 = vadd.f32 %v2071, 1e-05
        %v2080 = vadd.f32 %v2072, 1e-05
        %v2081 = vadd.f32 %v2073, 1e-05
        %v2082 = vadd.f32 %v2074, 1e-05
        %v2083 = vadd.f32 %v2075, 1e-05
        %v2084 = vrsqrt.pop %v2076
        %v2085 = vrsqrt.pop %v2077
        %v2086 = vrsqrt.pop %v2078
        %v2087 = vrsqrt.pop %v2079
        %v2088 = vrsqrt.pop %v2080
        %v2089 = vrsqrt.pop %v2081
        %v2090 = vrsqrt.pop %v2082
        %v2091 = vrsqrt.pop %v2083
        %v2092 = vmul.f32 %v2036, %v2084
        %v2093 = vmul.f32 %v2037, %v2085
        %v2094 = vmul.f32 %v2038, %v2086
        %v2095 = vmul.f32 %v2039, %v2087
        %v2096 = vmul.f32 %v2040, %v2088
        %v2097 = vmul.f32 %v2041, %v2089
        %v2098 = vmul.f32 %v2042, %v2090
        %v2099 = vmul.f32 %v2043, %v2091
        %v2100 = vlaneseq
        %v2101 = vshrl.u32 %v2100, 7
        %v2102 = vsub.s32 0, %v2101
        %v2103 = vrot.slane %v1952, %v2102
        %v2104 = vmul.f32 %v2092, %v2103
        %v2105 = vmul.f32 %v2093, %v2103
        %v2106 = vmul.f32 %v2094, %v2103
        %v2107 = vmul.f32 %v2095, %v2103
        %v2108 = vmul.f32 %v2096, %v2103
        %v2109 = vmul.f32 %v2097, %v2103
        %v2110 = vmul.f32 %v2098, %v2103
        %v2111 = vmul.f32 %v2099, %v2103
        %v2112 = vlaneseq
        %v2113 = vshrl.u32 %v2112, 7
        %v2114 = vsub.s32 1, %v2113
        %v2115 = vrot.slane %v1952, %v2114
        %v2116 = vadd.f32 %v2104, %v2115
        %v2117 = vadd.f32 %v2105, %v2115
        %v2118 = vadd.f32 %v2106, %v2115
        %v2119 = vadd.f32 %v2107, %v2115
        %v2120 = vadd.f32 %v2108, %v2115
        %v2121 = vadd.f32 %v2109, %v2115
        %v2122 = vadd.f32 %v2110, %v2115
        %v2123 = vadd.f32 %v2111, %v2115
        %v2124 = vld [vmem:[%s764] sm:$0xf]
        %v2125 = vld [vmem:[%s764 + $0x4] sm:$0xf]
        %v2126 = vld [vmem:[%s764 + $0x8] sm:$0xf]
        %v2127 = vld [vmem:[%s764 + $0xc] sm:$0xf]
        %v2128 = vld [vmem:[%s764 + $0x10] sm:$0xf]
        %v2129 = vld [vmem:[%s764 + $0x14] sm:$0xf]
        %v2130 = vld [vmem:[%s764 + $0x18] sm:$0xf]
        %v2131 = vld [vmem:[%s764 + $0x1c] sm:$0xf]
        %v2132 = vld [vmem:[%s764 + $0x20] sm:$0xf]
        %v2133 = vld [vmem:[%s764 + $0x24] sm:$0xf]
        %v2134 = vld [vmem:[%s764 + $0x28] sm:$0xf]
        %v2135 = vld [vmem:[%s764 + $0x2c] sm:$0xf]
        %v2136 = vld [vmem:[%s764 + $0x30] sm:$0xf]
        %v2137 = vld [vmem:[%s764 + $0x34] sm:$0xf]
        %v2138 = vld [vmem:[%s764 + $0x38] sm:$0xf]
        %v2139 = vld [vmem:[%s764 + $0x3c] sm:$0xf]
        %v2140 = vpack.c.bf16 %v2117, %v2116
        %v2141 = vpack.c.bf16 %v2119, %v2118
        %v2142 = vpack.c.bf16 %v2121, %v2120
        %v2143 = vpack.c.bf16 %v2123, %v2122
        %v2160 = vunpack.c.l.b16 %v2124
        %v2161 = vunpack.c.l.b16 %v2125
        %v2162 = vunpack.c.l.b16 %v2126
        %v2163 = vunpack.c.l.b16 %v2127
        %v2164 = vunpack.c.l.b16 %v2128
        %v2165 = vunpack.c.l.b16 %v2129
        %v2166 = vunpack.c.l.b16 %v2130
        %v2167 = vunpack.c.l.b16 %v2131
        %v2168 = vunpack.c.l.b16 %v2132
        %v2169 = vunpack.c.l.b16 %v2133
        %v2170 = vunpack.c.l.b16 %v2134
        %v2171 = vunpack.c.l.b16 %v2135
        %v2172 = vunpack.c.l.b16 %v2136
        %v2173 = vunpack.c.l.b16 %v2137
        %v2174 = vunpack.c.l.b16 %v2138
        %v2175 = vunpack.c.l.b16 %v2139
        %v2176 = vpack.c.b16 %v2161, %v2160
        %v2177 = vpack.c.b16 %v2163, %v2162
        %v2178 = vpack.c.b16 %v2165, %v2164
        %v2179 = vpack.c.b16 %v2167, %v2166
        %v2180 = vpack.c.b16 %v2169, %v2168
        %v2181 = vpack.c.b16 %v2171, %v2170
        %v2182 = vpack.c.b16 %v2173, %v2172
        %v2183 = vpack.c.b16 %v2175, %v2174
        %2192 = vmatprep.subr.bf16.mxu0 0
        %2193 = vmatpush1.bf16.msra.mxu0 %v2176
        %2194 = vmatprep.subr.bf16.mxu0 0
        %2195 = vmatpush1.bf16.msra.mxu0 %v2177
        %2196 = vmatprep.subr.bf16.mxu0 0
        %2197 = vmatpush1.bf16.msra.mxu0 %v2178
        %2198 = vmatprep.subr.bf16.mxu0 0
        %2199 = vmatpush1.bf16.msra.mxu0 %v2179
        %2200 = vmatprep.subr.bf16.mxu0 0
        %2201 = vmatpush1.bf16.msra.mxu0 %v2180
        %2202 = vmatprep.subr.bf16.mxu0 0
        %2203 = vmatpush1.bf16.msra.mxu0 %v2181
        %2204 = vmatprep.subr.bf16.mxu0 0
        %2205 = vmatpush1.bf16.msra.mxu0 %v2182
        %2206 = vmatprep.subr.bf16.mxu0 0
        %2207 = vmatpush1.bf16.msra.mxu0 %v2183
        %2208 = vmatprep.subr.bf16.mxu0 0
        %2209 = vmatpush1.bf16.msra.mxu0 0
        %2210 = vmatprep.subr.bf16.mxu0 0
        %2211 = vmatpush1.bf16.msra.mxu0 0
        %2212 = vmatprep.subr.bf16.mxu0 0
        %2213 = vmatpush1.bf16.msra.mxu0 0
        %2214 = vmatprep.subr.bf16.mxu0 0
        %2215 = vmatpush1.bf16.msra.mxu0 0
        %2216 = vmatprep.subr.bf16.mxu0 0
        %2217 = vmatpush1.bf16.msra.mxu0 0
        %2218 = vmatprep.subr.bf16.mxu0 0
        %2219 = vmatpush1.bf16.msra.mxu0 0
        %2220 = vmatprep.subr.bf16.mxu0 0
        %2221 = vmatpush1.bf16.msra.mxu0 0
        %2222 = vmatprep.subr.bf16.mxu0 0
        %2223 = vmatpush1.bf16.msra.mxu0 0
        %2224 = vmatprep.mubr.bf16.mxu0 0
        %2225 = vmatmul.mubr.bf16.gmra.mrb[0].mxu0 %v2140
        %v2226 = vpop.f32.mrb[0].mxu0
        %v2227 = vadd.f32 0.0, %v2226
        %v2228 = vpop.f32.mrb[0].mxu0
        %v2229 = vpop.f32.mrb[0].mxu0
        %v2230 = vadd.f32 0.0, %v2229
        %v2231 = vpop.f32.mrb[0].mxu0
        %2232 = vmatprep.mubr.bf16.mxu0 0
        %2233 = vmatmul.mubr.bf16.gmra.mrb[0].mxu0 %v2141
        %v2234 = vpop.f32.mrb[0].mxu0
        %v2235 = vadd.f32 0.0, %v2234
        %v2236 = vpop.f32.mrb[0].mxu0
        %v2237 = vpop.f32.mrb[0].mxu0
        %v2238 = vadd.f32 0.0, %v2237
        %v2239 = vpop.f32.mrb[0].mxu0
        %2240 = vmatprep.mubr.bf16.mxu0 0
        %2241 = vmatmul.mubr.bf16.gmra.mrb[0].mxu0 %v2142
        %v2242 = vpop.f32.mrb[0].mxu0
        %v2243 = vadd.f32 0.0, %v2242
        %v2244 = vpop.f32.mrb[0].mxu0
        %v2245 = vpop.f32.mrb[0].mxu0
        %v2246 = vadd.f32 0.0, %v2245
        %v2247 = vpop.f32.mrb[0].mxu0
        %2248 = vmatprep.mubr.bf16.mxu0 0
        %2249 = vmatmul.mubr.bf16.gmra.mrb[0].mxu0 %v2143
        %v2250 = vpop.f32.mrb[0].mxu0
        %v2251 = vadd.f32 0.0, %v2250
        %v2252 = vpop.f32.mrb[0].mxu0
        %v2253 = vpop.f32.mrb[0].mxu0
        %v2254 = vadd.f32 0.0, %v2253
        %v2255 = vpop.f32.mrb[0].mxu0
        %2256 = vdwg.mxu0
        %v2257 = vadd.f32 %v1953, %v2227
        %v2258 = vadd.f32 %v1954, %v2230
        %v2259 = vadd.f32 %v1955, %v2235
        %v2260 = vadd.f32 %v1956, %v2238
        %v2261 = vadd.f32 %v1957, %v2243
        %v2262 = vadd.f32 %v1958, %v2246
        %v2263 = vadd.f32 %v1959, %v2251
        %v2264 = vadd.f32 %v1960, %v2254
        %v2265 = vlaneseq
        %v2266 = vshrl.u32 %v2265, 7
        %v2267 = vsub.s32 2, %v2266
        %v2268 = vrot.slane %v1952, %v2267
        %v2269 = vadd.f32 %v2257, %v2268
        %v2270 = vadd.f32 %v2258, %v2268
        %v2271 = vadd.f32 %v2259, %v2268
        %v2272 = vadd.f32 %v2260, %v2268
        %v2273 = vadd.f32 %v2261, %v2268
        %v2274 = vadd.f32 %v2262, %v2268
        %v2275 = vadd.f32 %v2263, %v2268
        %v2276 = vadd.f32 %v2264, %v2268
        %2277 = vadd.xlane.f32.xlu0 %v2269
        %v2278 = vpop.xlane.xlu0 %2277
        %2279 = vadd.xlane.f32.xlu0 %v2270
        %v2280 = vpop.xlane.xlu0 %2279
        %2281 = vadd.xlane.f32.xlu0 %v2271
        %v2282 = vpop.xlane.xlu0 %2281
        %2283 = vadd.xlane.f32.xlu0 %v2272
        %v2284 = vpop.xlane.xlu0 %2283
        %2285 = vadd.xlane.f32.xlu0 %v2273
        %v2286 = vpop.xlane.xlu0 %2285
        %2287 = vadd.xlane.f32.xlu0 %v2274
        %v2288 = vpop.xlane.xlu0 %2287
        %2289 = vadd.xlane.f32.xlu0 %v2275
        %v2290 = vpop.xlane.xlu0 %2289
        %2291 = vadd.xlane.f32.xlu0 %v2276
        %v2292 = vpop.xlane.xlu0 %2291
        %v2293 = vmul.f32 %v2278, %v2027
        %v2294 = vmul.f32 %v2280, %v2027
        %v2295 = vmul.f32 %v2282, %v2027
        %v2296 = vmul.f32 %v2284, %v2027
        %v2297 = vmul.f32 %v2286, %v2027
        %v2298 = vmul.f32 %v2288, %v2027
        %v2299 = vmul.f32 %v2290, %v2027
        %v2300 = vmul.f32 %v2292, %v2027
        %v2301 = vsub.f32 %v2269, %v2293
        %v2302 = vsub.f32 %v2270, %v2294
        %v2303 = vsub.f32 %v2271, %v2295
        %v2304 = vsub.f32 %v2272, %v2296
        %v2305 = vsub.f32 %v2273, %v2297
        %v2306 = vsub.f32 %v2274, %v2298
        %v2307 = vsub.f32 %v2275, %v2299
        %v2308 = vsub.f32 %v2276, %v2300
        %v2309 = vmul.f32 %v2301, %v2301
        %v2310 = vmul.f32 %v2302, %v2302
        %v2311 = vmul.f32 %v2303, %v2303
        %v2312 = vmul.f32 %v2304, %v2304
        %v2313 = vmul.f32 %v2305, %v2305
        %v2314 = vmul.f32 %v2306, %v2306
        %v2315 = vmul.f32 %v2307, %v2307
        %v2316 = vmul.f32 %v2308, %v2308
        %2317 = vadd.xlane.f32.xlu0 %v2309
        %v2318 = vpop.xlane.xlu0 %2317
        %2319 = vadd.xlane.f32.xlu0 %v2310
        %v2320 = vpop.xlane.xlu0 %2319
        %2321 = vadd.xlane.f32.xlu0 %v2311
        %v2322 = vpop.xlane.xlu0 %2321
        %2323 = vadd.xlane.f32.xlu0 %v2312
        %v2324 = vpop.xlane.xlu0 %2323
        %2325 = vadd.xlane.f32.xlu0 %v2313
        %v2326 = vpop.xlane.xlu0 %2325
        %2327 = vadd.xlane.f32.xlu0 %v2314
        %v2328 = vpop.xlane.xlu0 %2327
        %2329 = vadd.xlane.f32.xlu0 %v2315
        %v2330 = vpop.xlane.xlu0 %2329
        %2331 = vadd.xlane.f32.xlu0 %v2316
        %v2332 = vpop.xlane.xlu0 %2331
        %v2333 = vmul.f32 %v2318, %v2027
        %v2334 = vmul.f32 %v2320, %v2027
        %v2335 = vmul.f32 %v2322, %v2027
        %v2336 = vmul.f32 %v2324, %v2027
        %v2337 = vmul.f32 %v2326, %v2027
        %v2338 = vmul.f32 %v2328, %v2027
        %v2339 = vmul.f32 %v2330, %v2027
        %v2340 = vmul.f32 %v2332, %v2027
        %v2341 = vadd.f32 %v2333, 1e-05
        %v2342 = vadd.f32 %v2334, 1e-05
        %v2343 = vadd.f32 %v2335, 1e-05
        %v2344 = vadd.f32 %v2336, 1e-05
        %v2345 = vadd.f32 %v2337, 1e-05
        %v2346 = vadd.f32 %v2338, 1e-05
        %v2347 = vadd.f32 %v2339, 1e-05
        %v2348 = vadd.f32 %v2340, 1e-05
        %v2349 = vrsqrt.pop %v2341
        %v2350 = vrsqrt.pop %v2342
        %v2351 = vrsqrt.pop %v2343
        %v2352 = vrsqrt.pop %v2344
        %v2353 = vrsqrt.pop %v2345
        %v2354 = vrsqrt.pop %v2346
        %v2355 = vrsqrt.pop %v2347
        %v2356 = vrsqrt.pop %v2348
        %v2357 = vmul.f32 %v2301, %v2349
        %v2358 = vmul.f32 %v2302, %v2350
        %v2359 = vmul.f32 %v2303, %v2351
        %v2360 = vmul.f32 %v2304, %v2352
        %v2361 = vmul.f32 %v2305, %v2353
        %v2362 = vmul.f32 %v2306, %v2354
        %v2363 = vmul.f32 %v2307, %v2355
        %v2364 = vmul.f32 %v2308, %v2356
        %v2365 = vlaneseq
        %v2366 = vshrl.u32 %v2365, 7
        %v2367 = vsub.s32 3, %v2366
        %v2368 = vrot.slane %v1952, %v2367
        %v2369 = vmul.f32 %v2357, %v2368
        %v2370 = vmul.f32 %v2358, %v2368
        %v2371 = vmul.f32 %v2359, %v2368
        %v2372 = vmul.f32 %v2360, %v2368
        %v2373 = vmul.f32 %v2361, %v2368
        %v2374 = vmul.f32 %v2362, %v2368
        %v2375 = vmul.f32 %v2363, %v2368
        %v2376 = vmul.f32 %v2364, %v2368
        %v2377 = vlaneseq
        %v2378 = vshrl.u32 %v2377, 7
        %v2379 = vsub.s32 4, %v2378
        %v2380 = vrot.slane %v1952, %v2379
        %v2381 = vadd.f32 %v2369, %v2380
        %v2382 = vadd.f32 %v2370, %v2380
        %v2383 = vadd.f32 %v2371, %v2380
        %v2384 = vadd.f32 %v2372, %v2380
        %v2385 = vadd.f32 %v2373, %v2380
        %v2386 = vadd.f32 %v2374, %v2380
        %v2387 = vadd.f32 %v2375, %v2380
        %v2388 = vadd.f32 %v2376, %v2380
        %v2389 = vld [vmem:[%s773] sm:$0xff]
        %v2390 = vld [vmem:[%s773 + $0x8] sm:$0xff]
        %v2391 = vld [vmem:[%s773 + $0x10] sm:$0xff]
        %v2392 = vld [vmem:[%s773 + $0x18] sm:$0xff]
        %v2393 = vld [vmem:[%s773 + $0x20] sm:$0xff]
        %v2394 = vld [vmem:[%s773 + $0x28] sm:$0xff]
        %v2395 = vld [vmem:[%s773 + $0x30] sm:$0xff]
        %v2396 = vld [vmem:[%s773 + $0x38] sm:$0xff]
        %v2397 = vld [vmem:[%s773 + $0x40] sm:$0xff]
        %v2398 = vld [vmem:[%s773 + $0x48] sm:$0xff]
        %v2399 = vld [vmem:[%s773 + $0x50] sm:$0xff]
        %v2400 = vld [vmem:[%s773 + $0x58] sm:$0xff]
        %v2401 = vld [vmem:[%s773 + $0x60] sm:$0xff]
        %v2402 = vld [vmem:[%s773 + $0x68] sm:$0xff]
        %v2403 = vld [vmem:[%s773 + $0x70] sm:$0xff]
        %v2404 = vld [vmem:[%s773 + $0x78] sm:$0xff]
        %v2405 = vld [vmem:[%s773 + $0x80] sm:$0xff]
        %v2406 = vld [vmem:[%s773 + $0x88] sm:$0xff]
        %v2407 = vld [vmem:[%s773 + $0x90] sm:$0xff]
        %v2408 = vld [vmem:[%s773 + $0x98] sm:$0xff]
        %v2409 = vld [vmem:[%s773 + $0xa0] sm:$0xff]
        %v2410 = vld [vmem:[%s773 + $0xa8] sm:$0xff]
        %v2411 = vld [vmem:[%s773 + $0xb0] sm:$0xff]
        %v2412 = vld [vmem:[%s773 + $0xb8] sm:$0xff]
        %v2413 = vld [vmem:[%s773 + $0xc0] sm:$0xff]
        %v2414 = vld [vmem:[%s773 + $0xc8] sm:$0xff]
        %v2415 = vld [vmem:[%s773 + $0xd0] sm:$0xff]
        %v2416 = vld [vmem:[%s773 + $0xd8] sm:$0xff]
        %v2417 = vld [vmem:[%s773 + $0xe0] sm:$0xff]
        %v2418 = vld [vmem:[%s773 + $0xe8] sm:$0xff]
        %v2419 = vld [vmem:[%s773 + $0xf0] sm:$0xff]
        %v2420 = vld [vmem:[%s773 + $0xf8] sm:$0xff]
        %v2421 = vpack.c.bf16 %v2382, %v2381
        %v2422 = vpack.c.bf16 %v2384, %v2383
        %v2423 = vpack.c.bf16 %v2386, %v2385
        %v2424 = vpack.c.bf16 %v2388, %v2387
        %v2425 = vld [vmem:[%s887] sm:$0xf]
        %v2427 = vlaneseq
        %v2428 = vshrl.u32 %v2427, 7
        %v2429 = vsub.s32 0, %v2428
        %v2430 = vrot.slane %v2425, %v2429
        %v2431 = vlaneseq
        %v2432 = vshrl.u32 %v2431, 7
        %v2433 = vsub.s32 1, %v2432
        %v2434 = vrot.slane %v2425, %v2433
        %v2435 = vlaneseq
        %v2436 = vshrl.u32 %v2435, 7
        %v2437 = vsub.s32 2, %v2436
        %v2438 = vrot.slane %v2425, %v2437
        %v2439 = vlaneseq
        %v2440 = vshrl.u32 %v2439, 7
        %v2441 = vsub.s32 3, %v2440
        %v2442 = vrot.slane %v2425, %v2441
        %v2479 = vunpack.c.l.b16 %v2389
        %v2480 = vunpack.c.h.b16 %v2389
        %v2481 = vunpack.c.l.b16 %v2390
        %v2482 = vunpack.c.h.b16 %v2390
        %v2483 = vunpack.c.l.b16 %v2391
        %v2484 = vunpack.c.h.b16 %v2391
        %v2485 = vunpack.c.l.b16 %v2392
        %v2486 = vunpack.c.h.b16 %v2392
        %v2487 = vunpack.c.l.b16 %v2393
        %v2488 = vunpack.c.h.b16 %v2393
        %v2489 = vunpack.c.l.b16 %v2394
        %v2490 = vunpack.c.h.b16 %v2394
        %v2491 = vunpack.c.l.b16 %v2395
        %v2492 = vunpack.c.h.b16 %v2395
        %v2493 = vunpack.c.l.b16 %v2396
        %v2494 = vunpack.c.h.b16 %v2396
        %v2495 = vunpack.c.l.b16 %v2397
        %v2496 = vunpack.c.h.b16 %v2397
        %v2497 = vunpack.c.l.b16 %v2398
        %v2498 = vunpack.c.h.b16 %v2398
        %v2499 = vunpack.c.l.b16 %v2399
        %v2500 = vunpack.c.h.b16 %v2399
        %v2501 = vunpack.c.l.b16 %v2400
        %v2502 = vunpack.c.h.b16 %v2400
        %v2503 = vunpack.c.l.b16 %v2401
        %v2504 = vunpack.c.h.b16 %v2401
        %v2505 = vunpack.c.l.b16 %v2402
        %v2506 = vunpack.c.h.b16 %v2402
        %v2507 = vunpack.c.l.b16 %v2403
        %v2508 = vunpack.c.h.b16 %v2403
        %v2509 = vunpack.c.l.b16 %v2404
        %v2510 = vunpack.c.h.b16 %v2404
        %v2511 = vunpack.c.l.b16 %v2405
        %v2512 = vunpack.c.h.b16 %v2405
        %v2513 = vunpack.c.l.b16 %v2406
        %v2514 = vunpack.c.h.b16 %v2406
        %v2515 = vunpack.c.l.b16 %v2407
        %v2516 = vunpack.c.h.b16 %v2407
        %v2517 = vunpack.c.l.b16 %v2408
        %v2518 = vunpack.c.h.b16 %v2408
        %v2519 = vunpack.c.l.b16 %v2409
        %v2520 = vunpack.c.h.b16 %v2409
        %v2521 = vunpack.c.l.b16 %v2410
        %v2522 = vunpack.c.h.b16 %v2410
        %v2523 = vunpack.c.l.b16 %v2411
        %v2524 = vunpack.c.h.b16 %v2411
        %v2525 = vunpack.c.l.b16 %v2412
        %v2526 = vunpack.c.h.b16 %v2412
        %v2527 = vunpack.c.l.b16 %v2413
        %v2528 = vunpack.c.h.b16 %v2413
        %v2529 = vunpack.c.l.b16 %v2414
        %v2530 = vunpack.c.h.b16 %v2414
        %v2531 = vunpack.c.l.b16 %v2415
        %v2532 = vunpack.c.h.b16 %v2415
        %v2533 = vunpack.c.l.b16 %v2416
        %v2534 = vunpack.c.h.b16 %v2416
        %v2535 = vunpack.c.l.b16 %v2417
        %v2536 = vunpack.c.h.b16 %v2417
        %v2537 = vunpack.c.l.b16 %v2418
        %v2538 = vunpack.c.h.b16 %v2418
        %v2539 = vunpack.c.l.b16 %v2419
        %v2540 = vunpack.c.h.b16 %v2419
        %v2541 = vunpack.c.l.b16 %v2420
        %v2542 = vunpack.c.h.b16 %v2420
        %v2543 = vpack.c.b16 %v2483, %v2479
        %v2544 = vpack.c.b16 %v2484, %v2480
        %v2545 = vpack.c.b16 %v2485, %v2481
        %v2546 = vpack.c.b16 %v2486, %v2482
        %v2547 = vpack.c.b16 %v2491, %v2487
        %v2548 = vpack.c.b16 %v2492, %v2488
        %v2549 = vpack.c.b16 %v2493, %v2489
        %v2550 = vpack.c.b16 %v2494, %v2490
        %v2551 = vpack.c.b16 %v2499, %v2495
        %v2552 = vpack.c.b16 %v2500, %v2496
        %v2553 = vpack.c.b16 %v2501, %v2497
        %v2554 = vpack.c.b16 %v2502, %v2498
        %v2555 = vpack.c.b16 %v2507, %v2503
        %v2556 = vpack.c.b16 %v2508, %v2504
        %v2557 = vpack.c.b16 %v2509, %v2505
        %v2558 = vpack.c.b16 %v2510, %v2506
        %v2559 = vpack.c.b16 %v2515, %v2511
        %v2560 = vpack.c.b16 %v2516, %v2512
        %v2561 = vpack.c.b16 %v2517, %v2513
        %v2562 = vpack.c.b16 %v2518, %v2514
        %v2563 = vpack.c.b16 %v2523, %v2519
        %v2564 = vpack.c.b16 %v2524, %v2520
        %v2565 = vpack.c.b16 %v2525, %v2521
        %v2566 = vpack.c.b16 %v2526, %v2522
        %v2567 = vpack.c.b16 %v2531, %v2527
        %v2568 = vpack.c.b16 %v2532, %v2528
        %v2569 = vpack.c.b16 %v2533, %v2529
        %v2570 = vpack.c.b16 %v2534, %v2530
        %v2571 = vpack.c.b16 %v2539, %v2535
        %v2572 = vpack.c.b16 %v2540, %v2536
        %v2573 = vpack.c.b16 %v2541, %v2537
        %v2574 = vpack.c.b16 %v2542, %v2538
        %2607 = vmatprep.subr.bf16.mxu0 %v2544
        %2608 = vmatpush1.bf16.msra.mxu0 %v2543
        %2609 = vmatprep.subr.bf16.mxu0 %v2548
        %2610 = vmatpush1.bf16.msra.mxu0 %v2547
        %2611 = vmatprep.subr.bf16.mxu0 %v2552
        %2612 = vmatpush1.bf16.msra.mxu0 %v2551
        %2613 = vmatprep.subr.bf16.mxu0 %v2556
        %2614 = vmatpush1.bf16.msra.mxu0 %v2555
        %2615 = vmatprep.subr.bf16.mxu0 %v2560
        %2616 = vmatpush1.bf16.msra.mxu0 %v2559
        %2617 = vmatprep.subr.bf16.mxu0 %v2564
        %2618 = vmatpush1.bf16.msra.mxu0 %v2563
        %2619 = vmatprep.subr.bf16.mxu0 %v2568
        %2620 = vmatpush1.bf16.msra.mxu0 %v2567
        %2621 = vmatprep.subr.bf16.mxu0 %v2572
        %2622 = vmatpush1.bf16.msra.mxu0 %v2571
        %2623 = vmatprep.subr.bf16.mxu0 0
        %2624 = vmatpush1.bf16.msra.mxu0 0
        %2625 = vmatprep.subr.bf16.mxu0 0
        %2626 = vmatpush1.bf16.msra.mxu0 0
        %2627 = vmatprep.subr.bf16.mxu0 0
        %2628 = vmatpush1.bf16.msra.mxu0 0
        %2629 = vmatprep.subr.bf16.mxu0 0
        %2630 = vmatpush1.bf16.msra.mxu0 0
        %2631 = vmatprep.subr.bf16.mxu0 0
        %2632 = vmatpush1.bf16.msra.mxu0 0
        %2633 = vmatprep.subr.bf16.mxu0 0
        %2634 = vmatpush1.bf16.msra.mxu0 0
        %2635 = vmatprep.subr.bf16.mxu0 0
        %2636 = vmatpush1.bf16.msra.mxu0 0
        %2637 = vmatprep.subr.bf16.mxu0 0
        %2638 = vmatpush1.bf16.msra.mxu0 0
        %2639 = vmatprep.mubr.bf16.mxu0 0
        %2640 = vmatmul.mubr.bf16.gmra.mrb[0].mxu0 %v2421
        %v2641 = vpop.f32.mrb[0].mxu0
        %v2642 = vadd.f32 %v2430, %v2641
        %v2643 = vpop.f32.mrb[0].mxu0
        %v2644 = vadd.f32 %v2434, %v2643
        %v2645 = vpop.f32.mrb[0].mxu0
        %v2646 = vadd.f32 %v2430, %v2645
        %v2647 = vpop.f32.mrb[0].mxu0
        %v2648 = vadd.f32 %v2434, %v2647
        %2649 = vmatprep.mubr.bf16.mxu0 0
        %2650 = vmatmul.mubr.bf16.gmra.mrb[0].mxu0 %v2422
        %v2651 = vpop.f32.mrb[0].mxu0
        %v2652 = vadd.f32 %v2430, %v2651
        %v2653 = vpop.f32.mrb[0].mxu0
        %v2654 = vadd.f32 %v2434, %v2653
        %v2655 = vpop.f32.mrb[0].mxu0
        %v2656 = vadd.f32 %v2430, %v2655
        %v2657 = vpop.f32.mrb[0].mxu0
        %v2658 = vadd.f32 %v2434, %v2657
        %2659 = vmatprep.mubr.bf16.mxu0 0
        %2660 = vmatmul.mubr.bf16.gmra.mrb[0].mxu0 %v2423
        %v2661 = vpop.f32.mrb[0].mxu0
        %v2662 = vadd.f32 %v2430, %v2661
        %v2663 = vpop.f32.mrb[0].mxu0
        %v2664 = vadd.f32 %v2434, %v2663
        %v2665 = vpop.f32.mrb[0].mxu0
        %v2666 = vadd.f32 %v2430, %v2665
        %v2667 = vpop.f32.mrb[0].mxu0
        %v2668 = vadd.f32 %v2434, %v2667
        %2669 = vmatprep.mubr.bf16.mxu0 0
        %2670 = vmatmul.mubr.bf16.gmra.mrb[0].mxu0 %v2424
        %v2671 = vpop.f32.mrb[0].mxu0
        %v2672 = vadd.f32 %v2430, %v2671
        %v2673 = vpop.f32.mrb[0].mxu0
        %v2674 = vadd.f32 %v2434, %v2673
        %v2675 = vpop.f32.mrb[0].mxu0
        %v2676 = vadd.f32 %v2430, %v2675
        %v2677 = vpop.f32.mrb[0].mxu0
        %v2678 = vadd.f32 %v2434, %v2677
        %2679 = vdwg.mxu0
        %2680 = vmatprep.subr.bf16.mxu0 %v2546
        %2681 = vmatpush1.bf16.msra.mxu0 %v2545
        %2682 = vmatprep.subr.bf16.mxu0 %v2550
        %2683 = vmatpush1.bf16.msra.mxu0 %v2549
        %2684 = vmatprep.subr.bf16.mxu0 %v2554
        %2685 = vmatpush1.bf16.msra.mxu0 %v2553
        %2686 = vmatprep.subr.bf16.mxu0 %v2558
        %2687 = vmatpush1.bf16.msra.mxu0 %v2557
        %2688 = vmatprep.subr.bf16.mxu0 %v2562
        %2689 = vmatpush1.bf16.msra.mxu0 %v2561
        %2690 = vmatprep.subr.bf16.mxu0 %v2566
        %2691 = vmatpush1.bf16.msra.mxu0 %v2565
        %2692 = vmatprep.subr.bf16.mxu0 %v2570
        %2693 = vmatpush1.bf16.msra.mxu0 %v2569
        %2694 = vmatprep.subr.bf16.mxu0 %v2574
        %2695 = vmatpush1.bf16.msra.mxu0 %v2573
        %2696 = vmatprep.subr.bf16.mxu0 0
        %2697 = vmatpush1.bf16.msra.mxu0 0
        %2698 = vmatprep.subr.bf16.mxu0 0
        %2699 = vmatpush1.bf16.msra.mxu0 0
        %2700 = vmatprep.subr.bf16.mxu0 0
        %2701 = vmatpush1.bf16.msra.mxu0 0
        %2702 = vmatprep.subr.bf16.mxu0 0
        %2703 = vmatpush1.bf16.msra.mxu0 0
        %2704 = vmatprep.subr.bf16.mxu0 0
        %2705 = vmatpush1.bf16.msra.mxu0 0
        %2706 = vmatprep.subr.bf16.mxu0 0
        %2707 = vmatpush1.bf16.msra.mxu0 0
        %2708 = vmatprep.subr.bf16.mxu0 0
        %2709 = vmatpush1.bf16.msra.mxu0 0
        %2710 = vmatprep.subr.bf16.mxu0 0
        %2711 = vmatpush1.bf16.msra.mxu0 0
        %2712 = vmatprep.mubr.bf16.mxu0 0
        %2713 = vmatmul.mubr.bf16.gmra.mrb[0].mxu0 %v2421
        %v2714 = vpop.f32.mrb[0].mxu0
        %v2715 = vadd.f32 %v2438, %v2714
        %v2716 = vpop.f32.mrb[0].mxu0
        %v2717 = vadd.f32 %v2442, %v2716
        %v2718 = vpop.f32.mrb[0].mxu0
        %v2719 = vadd.f32 %v2438, %v2718
        %v2720 = vpop.f32.mrb[0].mxu0
        %v2721 = vadd.f32 %v2442, %v2720
        %2722 = vmatprep.mubr.bf16.mxu0 0
        %2723 = vmatmul.mubr.bf16.gmra.mrb[0].mxu0 %v2422
        %v2724 = vpop.f32.mrb[0].mxu0
        %v2725 = vadd.f32 %v2438, %v2724
        %v2726 = vpop.f32.mrb[0].mxu0
        %v2727 = vadd.f32 %v2442, %v2726
        %v2728 = vpop.f32.mrb[0].mxu0
        %v2729 = vadd.f32 %v2438, %v2728
        %v2730 = vpop.f32.mrb[0].mxu0
        %v2731 = vadd.f32 %v2442, %v2730
        %2732 = vmatprep.mubr.bf16.mxu0 0
        %2733 = vmatmul.mubr.bf16.gmra.mrb[0].mxu0 %v2423
        %v2734 = vpop.f32.mrb[0].mxu0
        %v2735 = vadd.f32 %v2438, %v2734
        %v2736 = vpop.f32.mrb[0].mxu0
        %v2737 = vadd.f32 %v2442, %v2736
        %v2738 = vpop.f32.mrb[0].mxu0
        %v2739 = vadd.f32 %v2438, %v2738
        %v2740 = vpop.f32.mrb[0].mxu0
        %v2741 = vadd.f32 %v2442, %v2740
        %2742 = vmatprep.mubr.bf16.mxu0 0
        %2743 = vmatmul.mubr.bf16.gmra.mrb[0].mxu0 %v2424
        %v2744 = vpop.f32.mrb[0].mxu0
        %v2745 = vadd.f32 %v2438, %v2744
        %v2746 = vpop.f32.mrb[0].mxu0
        %v2747 = vadd.f32 %v2442, %v2746
        %v2748 = vpop.f32.mrb[0].mxu0
        %v2749 = vadd.f32 %v2438, %v2748
        %v2750 = vpop.f32.mrb[0].mxu0
        %v2751 = vadd.f32 %v2442, %v2750
        %2752 = vdwg.mxu0
        %v2753 = vmul.f32 %v2642, 0.5
        %v2754 = vmul.f32 %v2644, 0.5
        %v2755 = vmul.f32 %v2715, 0.5
        %v2756 = vmul.f32 %v2717, 0.5
        %v2757 = vmul.f32 %v2646, 0.5
        %v2758 = vmul.f32 %v2648, 0.5
        %v2759 = vmul.f32 %v2719, 0.5
        %v2760 = vmul.f32 %v2721, 0.5
        %v2761 = vmul.f32 %v2652, 0.5
        %v2762 = vmul.f32 %v2654, 0.5
        %v2763 = vmul.f32 %v2725, 0.5
        %v2764 = vmul.f32 %v2727, 0.5
        %v2765 = vmul.f32 %v2656, 0.5
        %v2766 = vmul.f32 %v2658, 0.5
        %v2767 = vmul.f32 %v2729, 0.5
        %v2768 = vmul.f32 %v2731, 0.5
        %v2769 = vmul.f32 %v2662, 0.5
        %v2770 = vmul.f32 %v2664, 0.5
        %v2771 = vmul.f32 %v2735, 0.5
        %v2772 = vmul.f32 %v2737, 0.5
        %v2773 = vmul.f32 %v2666, 0.5
        %v2774 = vmul.f32 %v2668, 0.5
        %v2775 = vmul.f32 %v2739, 0.5
        %v2776 = vmul.f32 %v2741, 0.5
        %v2777 = vmul.f32 %v2672, 0.5
        %v2778 = vmul.f32 %v2674, 0.5
        %v2779 = vmul.f32 %v2745, 0.5
        %v2780 = vmul.f32 %v2747, 0.5
        %v2781 = vmul.f32 %v2676, 0.5
        %v2782 = vmul.f32 %v2678, 0.5
        %v2783 = vmul.f32 %v2749, 0.5
        %v2784 = vmul.f32 %v2751, 0.5
        %v2785 = vmul.f32 %v2642, 0.70710677
        %v2786 = vmul.f32 %v2644, 0.70710677
        %v2787 = vmul.f32 %v2715, 0.70710677
        %v2788 = vmul.f32 %v2717, 0.70710677
        %v2789 = vmul.f32 %v2646, 0.70710677
        %v2790 = vmul.f32 %v2648, 0.70710677
        %v2791 = vmul.f32 %v2719, 0.70710677
        %v2792 = vmul.f32 %v2721, 0.70710677
        %v2793 = vmul.f32 %v2652, 0.70710677
        %v2794 = vmul.f32 %v2654, 0.70710677
        %v2795 = vmul.f32 %v2725, 0.70710677
        %v2796 = vmul.f32 %v2727, 0.70710677
        %v2797 = vmul.f32 %v2656, 0.70710677
        %v2798 = vmul.f32 %v2658, 0.70710677
        %v2799 = vmul.f32 %v2729, 0.70710677
        %v2800 = vmul.f32 %v2731, 0.70710677
        %v2801 = vmul.f32 %v2662, 0.70710677
        %v2802 = vmul.f32 %v2664, 0.70710677
        %v2803 = vmul.f32 %v2735, 0.70710677
        %v2804 = vmul.f32 %v2737, 0.70710677
        %v2805 = vmul.f32 %v2666, 0.70710677
        %v2806 = vmul.f32 %v2668, 0.70710677
        %v2807 = vmul.f32 %v2739, 0.70710677
        %v2808 = vmul.f32 %v2741, 0.70710677
        %v2809 = vmul.f32 %v2672, 0.70710677
        %v2810 = vmul.f32 %v2674, 0.70710677
        %v2811 = vmul.f32 %v2745, 0.70710677
        %v2812 = vmul.f32 %v2747, 0.70710677
        %v2813 = vmul.f32 %v2676, 0.70710677
        %v2814 = vmul.f32 %v2678, 0.70710677
        %v2815 = vmul.f32 %v2749, 0.70710677
        %v2816 = vmul.f32 %v2751, 0.70710677
        %v2817 = verf.f32.pop %v2785
        %v2818 = verf.f32.pop %v2786
        %v2819 = verf.f32.pop %v2787
        %v2820 = verf.f32.pop %v2788
        %v2821 = verf.f32.pop %v2789
        %v2822 = verf.f32.pop %v2790
        %v2823 = verf.f32.pop %v2791
        %v2824 = verf.f32.pop %v2792
        %v2825 = verf.f32.pop %v2793
        %v2826 = verf.f32.pop %v2794
        %v2827 = verf.f32.pop %v2795
        %v2828 = verf.f32.pop %v2796
        %v2829 = verf.f32.pop %v2797
        %v2830 = verf.f32.pop %v2798
        %v2831 = verf.f32.pop %v2799
        %v2832 = verf.f32.pop %v2800
        %v2833 = verf.f32.pop %v2801
        %v2834 = verf.f32.pop %v2802
        %v2835 = verf.f32.pop %v2803
        %v2836 = verf.f32.pop %v2804
        %v2837 = verf.f32.pop %v2805
        %v2838 = verf.f32.pop %v2806
        %v2839 = verf.f32.pop %v2807
        %v2840 = verf.f32.pop %v2808
        %v2841 = verf.f32.pop %v2809
        %v2842 = verf.f32.pop %v2810
        %v2843 = verf.f32.pop %v2811
        %v2844 = verf.f32.pop %v2812
        %v2845 = verf.f32.pop %v2813
        %v2846 = verf.f32.pop %v2814
        %v2847 = verf.f32.pop %v2815
        %v2848 = verf.f32.pop %v2816
        %v2849 = vadd.f32 %v2817, 1.0
        %v2850 = vadd.f32 %v2818, 1.0
        %v2851 = vadd.f32 %v2819, 1.0
        %v2852 = vadd.f32 %v2820, 1.0
        %v2853 = vadd.f32 %v2821, 1.0
        %v2854 = vadd.f32 %v2822, 1.0
        %v2855 = vadd.f32 %v2823, 1.0
        %v2856 = vadd.f32 %v2824, 1.0
        %v2857 = vadd.f32 %v2825, 1.0
        %v2858 = vadd.f32 %v2826, 1.0
        %v2859 = vadd.f32 %v2827, 1.0
        %v2860 = vadd.f32 %v2828, 1.0
        %v2861 = vadd.f32 %v2829, 1.0
        %v2862 = vadd.f32 %v2830, 1.0
        %v2863 = vadd.f32 %v2831, 1.0
        %v2864 = vadd.f32 %v2832, 1.0
        %v2865 = vadd.f32 %v2833, 1.0
        %v2866 = vadd.f32 %v2834, 1.0
        %v2867 = vadd.f32 %v2835, 1.0
        %v2868 = vadd.f32 %v2836, 1.0
        %v2869 = vadd.f32 %v2837, 1.0
        %v2870 = vadd.f32 %v2838, 1.0
        %v2871 = vadd.f32 %v2839, 1.0
        %v2872 = vadd.f32 %v2840, 1.0
        %v2873 = vadd.f32 %v2841, 1.0
        %v2874 = vadd.f32 %v2842, 1.0
        %v2875 = vadd.f32 %v2843, 1.0
        %v2876 = vadd.f32 %v2844, 1.0
        %v2877 = vadd.f32 %v2845, 1.0
        %v2878 = vadd.f32 %v2846, 1.0
        %v2879 = vadd.f32 %v2847, 1.0
        %v2880 = vadd.f32 %v2848, 1.0
        %v2881 = vmul.f32 %v2753, %v2849
        %v2882 = vmul.f32 %v2754, %v2850
        %v2883 = vmul.f32 %v2755, %v2851
        %v2884 = vmul.f32 %v2756, %v2852
        %v2885 = vmul.f32 %v2757, %v2853
        %v2886 = vmul.f32 %v2758, %v2854
        %v2887 = vmul.f32 %v2759, %v2855
        %v2888 = vmul.f32 %v2760, %v2856
        %v2889 = vmul.f32 %v2761, %v2857
        %v2890 = vmul.f32 %v2762, %v2858
        %v2891 = vmul.f32 %v2763, %v2859
        %v2892 = vmul.f32 %v2764, %v2860
        %v2893 = vmul.f32 %v2765, %v2861
        %v2894 = vmul.f32 %v2766, %v2862
        %v2895 = vmul.f32 %v2767, %v2863
        %v2896 = vmul.f32 %v2768, %v2864
        %v2897 = vmul.f32 %v2769, %v2865
        %v2898 = vmul.f32 %v2770, %v2866
        %v2899 = vmul.f32 %v2771, %v2867
        %v2900 = vmul.f32 %v2772, %v2868
        %v2901 = vmul.f32 %v2773, %v2869
        %v2902 = vmul.f32 %v2774, %v2870
        %v2903 = vmul.f32 %v2775, %v2871
        %v2904 = vmul.f32 %v2776, %v2872
        %v2905 = vmul.f32 %v2777, %v2873
        %v2906 = vmul.f32 %v2778, %v2874
        %v2907 = vmul.f32 %v2779, %v2875
        %v2908 = vmul.f32 %v2780, %v2876
        %v2909 = vmul.f32 %v2781, %v2877
        %v2910 = vmul.f32 %v2782, %v2878
        %v2911 = vmul.f32 %v2783, %v2879
        %v2912 = vmul.f32 %v2784, %v2880
        %v2913 = vld [vmem:[%s782] sm:$0xf]
        %v2914 = vld [vmem:[%s782 + $0x4] sm:$0xf]
        %v2915 = vld [vmem:[%s782 + $0x8] sm:$0xf]
        %v2916 = vld [vmem:[%s782 + $0xc] sm:$0xf]
        %v2917 = vld [vmem:[%s782 + $0x10] sm:$0xf]
        %v2918 = vld [vmem:[%s782 + $0x14] sm:$0xf]
        %v2919 = vld [vmem:[%s782 + $0x18] sm:$0xf]
        %v2920 = vld [vmem:[%s782 + $0x1c] sm:$0xf]
        %v2921 = vld [vmem:[%s782 + $0x20] sm:$0xf]
        %v2922 = vld [vmem:[%s782 + $0x24] sm:$0xf]
        %v2923 = vld [vmem:[%s782 + $0x28] sm:$0xf]
        %v2924 = vld [vmem:[%s782 + $0x2c] sm:$0xf]
        %v2925 = vld [vmem:[%s782 + $0x30] sm:$0xf]
        %v2926 = vld [vmem:[%s782 + $0x34] sm:$0xf]
        %v2927 = vld [vmem:[%s782 + $0x38] sm:$0xf]
        %v2928 = vld [vmem:[%s782 + $0x3c] sm:$0xf]
        %v2929 = vld [vmem:[%s782 + $0x40] sm:$0xf]
        %v2930 = vld [vmem:[%s782 + $0x44] sm:$0xf]
        %v2931 = vld [vmem:[%s782 + $0x48] sm:$0xf]
        %v2932 = vld [vmem:[%s782 + $0x4c] sm:$0xf]
        %v2933 = vld [vmem:[%s782 + $0x50] sm:$0xf]
        %v2934 = vld [vmem:[%s782 + $0x54] sm:$0xf]
        %v2935 = vld [vmem:[%s782 + $0x58] sm:$0xf]
        %v2936 = vld [vmem:[%s782 + $0x5c] sm:$0xf]
        %v2937 = vld [vmem:[%s782 + $0x60] sm:$0xf]
        %v2938 = vld [vmem:[%s782 + $0x64] sm:$0xf]
        %v2939 = vld [vmem:[%s782 + $0x68] sm:$0xf]
        %v2940 = vld [vmem:[%s782 + $0x6c] sm:$0xf]
        %v2941 = vld [vmem:[%s782 + $0x70] sm:$0xf]
        %v2942 = vld [vmem:[%s782 + $0x74] sm:$0xf]
        %v2943 = vld [vmem:[%s782 + $0x78] sm:$0xf]
        %v2944 = vld [vmem:[%s782 + $0x7c] sm:$0xf]
        %v2945 = vld [vmem:[%s782 + $0x80] sm:$0xf]
        %v2946 = vld [vmem:[%s782 + $0x84] sm:$0xf]
        %v2947 = vld [vmem:[%s782 + $0x88] sm:$0xf]
        %v2948 = vld [vmem:[%s782 + $0x8c] sm:$0xf]
        %v2949 = vld [vmem:[%s782 + $0x90] sm:$0xf]
        %v2950 = vld [vmem:[%s782 + $0x94] sm:$0xf]
        %v2951 = vld [vmem:[%s782 + $0x98] sm:$0xf]
        %v2952 = vld [vmem:[%s782 + $0x9c] sm:$0xf]
        %v2953 = vld [vmem:[%s782 + $0xa0] sm:$0xf]
        %v2954 = vld [vmem:[%s782 + $0xa4] sm:$0xf]
        %v2955 = vld [vmem:[%s782 + $0xa8] sm:$0xf]
        %v2956 = vld [vmem:[%s782 + $0xac] sm:$0xf]
        %v2957 = vld [vmem:[%s782 + $0xb0] sm:$0xf]
        %v2958 = vld [vmem:[%s782 + $0xb4] sm:$0xf]
        %v2959 = vld [vmem:[%s782 + $0xb8] sm:$0xf]
        %v2960 = vld [vmem:[%s782 + $0xbc] sm:$0xf]
        %v2961 = vld [vmem:[%s782 + $0xc0] sm:$0xf]
        %v2962 = vld [vmem:[%s782 + $0xc4] sm:$0xf]
        %v2963 = vld [vmem:[%s782 + $0xc8] sm:$0xf]
        %v2964 = vld [vmem:[%s782 + $0xcc] sm:$0xf]
        %v2965 = vld [vmem:[%s782 + $0xd0] sm:$0xf]
        %v2966 = vld [vmem:[%s782 + $0xd4] sm:$0xf]
        %v2967 = vld [vmem:[%s782 + $0xd8] sm:$0xf]
        %v2968 = vld [vmem:[%s782 + $0xdc] sm:$0xf]
        %v2969 = vld [vmem:[%s782 + $0xe0] sm:$0xf]
        %v2970 = vld [vmem:[%s782 + $0xe4] sm:$0xf]
        %v2971 = vld [vmem:[%s782 + $0xe8] sm:$0xf]
        %v2972 = vld [vmem:[%s782 + $0xec] sm:$0xf]
        %v2973 = vld [vmem:[%s782 + $0xf0] sm:$0xf]
        %v2974 = vld [vmem:[%s782 + $0xf4] sm:$0xf]
        %v2975 = vld [vmem:[%s782 + $0xf8] sm:$0xf]
        %v2976 = vld [vmem:[%s782 + $0xfc] sm:$0xf]
        %v2977 = vpack.c.bf16 %v2885, %v2881
        %v2978 = vpack.c.bf16 %v2886, %v2882
        %v2979 = vpack.c.bf16 %v2887, %v2883
        %v2980 = vpack.c.bf16 %v2888, %v2884
        %v2981 = vpack.c.bf16 %v2893, %v2889
        %v2982 = vpack.c.bf16 %v2894, %v2890
        %v2983 = vpack.c.bf16 %v2895, %v2891
        %v2984 = vpack.c.bf16 %v2896, %v2892
        %v2985 = vpack.c.bf16 %v2901, %v2897
        %v2986 = vpack.c.bf16 %v2902, %v2898
        %v2987 = vpack.c.bf16 %v2903, %v2899
        %v2988 = vpack.c.bf16 %v2904, %v2900
        %v2989 = vpack.c.bf16 %v2909, %v2905
        %v2990 = vpack.c.bf16 %v2910, %v2906
        %v2991 = vpack.c.bf16 %v2911, %v2907
        %v2992 = vpack.c.bf16 %v2912, %v2908
        %v3057 = vunpack.c.l.b16 %v2913
        %v3058 = vunpack.c.l.b16 %v2914
        %v3059 = vunpack.c.l.b16 %v2915
        %v3060 = vunpack.c.l.b16 %v2916
        %v3061 = vunpack.c.l.b16 %v2917
        %v3062 = vunpack.c.l.b16 %v2918
        %v3063 = vunpack.c.l.b16 %v2919
        %v3064 = vunpack.c.l.b16 %v2920
        %v3065 = vunpack.c.l.b16 %v2921
        %v3066 = vunpack.c.l.b16 %v2922
        %v3067 = vunpack.c.l.b16 %v2923
        %v3068 = vunpack.c.l.b16 %v2924
        %v3069 = vunpack.c.l.b16 %v2925
        %v3070 = vunpack.c.l.b16 %v2926
        %v3071 = vunpack.c.l.b16 %v2927
        %v3072 = vunpack.c.l.b16 %v2928
        %v3073 = vunpack.c.l.b16 %v2929
        %v3074 = vunpack.c.l.b16 %v2930
        %v3075 = vunpack.c.l.b16 %v2931
        %v3076 = vunpack.c.l.b16 %v2932
        %v3077 = vunpack.c.l.b16 %v2933
        %v3078 = vunpack.c.l.b16 %v2934
        %v3079 = vunpack.c.l.b16 %v2935
        %v3080 = vunpack.c.l.b16 %v2936
        %v3081 = vunpack.c.l.b16 %v2937
        %v3082 = vunpack.c.l.b16 %v2938
        %v3083 = vunpack.c.l.b16 %v2939
        %v3084 = vunpack.c.l.b16 %v2940
        %v3085 = vunpack.c.l.b16 %v2941
        %v3086 = vunpack.c.l.b16 %v2942
        %v3087 = vunpack.c.l.b16 %v2943
        %v3088 = vunpack.c.l.b16 %v2944
        %v3089 = vunpack.c.l.b16 %v2945
        %v3090 = vunpack.c.l.b16 %v2946
        %v3091 = vunpack.c.l.b16 %v2947
        %v3092 = vunpack.c.l.b16 %v2948
        %v3093 = vunpack.c.l.b16 %v2949
        %v3094 = vunpack.c.l.b16 %v2950
        %v3095 = vunpack.c.l.b16 %v2951
        %v3096 = vunpack.c.l.b16 %v2952
        %v3097 = vunpack.c.l.b16 %v2953
        %v3098 = vunpack.c.l.b16 %v2954
        %v3099 = vunpack.c.l.b16 %v2955
        %v3100 = vunpack.c.l.b16 %v2956
        %v3101 = vunpack.c.l.b16 %v2957
        %v3102 = vunpack.c.l.b16 %v2958
        %v3103 = vunpack.c.l.b16 %v2959
        %v3104 = vunpack.c.l.b16 %v2960
        %v3105 = vunpack.c.l.b16 %v2961
        %v3106 = vunpack.c.l.b16 %v2962
        %v3107 = vunpack.c.l.b16 %v2963
        %v3108 = vunpack.c.l.b16 %v2964
        %v3109 = vunpack.c.l.b16 %v2965
        %v3110 = vunpack.c.l.b16 %v2966
        %v3111 = vunpack.c.l.b16 %v2967
        %v3112 = vunpack.c.l.b16 %v2968
        %v3113 = vunpack.c.l.b16 %v2969
        %v3114 = vunpack.c.l.b16 %v2970
        %v3115 = vunpack.c.l.b16 %v2971
        %v3116 = vunpack.c.l.b16 %v2972
        %v3117 = vunpack.c.l.b16 %v2973
        %v3118 = vunpack.c.l.b16 %v2974
        %v3119 = vunpack.c.l.b16 %v2975
        %v3120 = vunpack.c.l.b16 %v2976
        %v3121 = vpack.c.b16 %v3058, %v3057
        %v3122 = vpack.c.b16 %v3060, %v3059
        %v3123 = vpack.c.b16 %v3062, %v3061
        %v3124 = vpack.c.b16 %v3064, %v3063
        %v3125 = vpack.c.b16 %v3066, %v3065
        %v3126 = vpack.c.b16 %v3068, %v3067
        %v3127 = vpack.c.b16 %v3070, %v3069
        %v3128 = vpack.c.b16 %v3072, %v3071
        %v3129 = vpack.c.b16 %v3074, %v3073
        %v3130 = vpack.c.b16 %v3076, %v3075
        %v3131 = vpack.c.b16 %v3078, %v3077
        %v3132 = vpack.c.b16 %v3080, %v3079
        %v3133 = vpack.c.b16 %v3082, %v3081
        %v3134 = vpack.c.b16 %v3084, %v3083
        %v3135 = vpack.c.b16 %v3086, %v3085
        %v3136 = vpack.c.b16 %v3088, %v3087
        %v3137 = vpack.c.b16 %v3090, %v3089
        %v3138 = vpack.c.b16 %v3092, %v3091
        %v3139 = vpack.c.b16 %v3094, %v3093
        %v3140 = vpack.c.b16 %v3096, %v3095
        %v3141 = vpack.c.b16 %v3098, %v3097
        %v3142 = vpack.c.b16 %v3100, %v3099
        %v3143 = vpack.c.b16 %v3102, %v3101
        %v3144 = vpack.c.b16 %v3104, %v3103
        %v3145 = vpack.c.b16 %v3106, %v3105
        %v3146 = vpack.c.b16 %v3108, %v3107
        %v3147 = vpack.c.b16 %v3110, %v3109
        %v3148 = vpack.c.b16 %v3112, %v3111
        %v3149 = vpack.c.b16 %v3114, %v3113
        %v3150 = vpack.c.b16 %v3116, %v3115
        %v3151 = vpack.c.b16 %v3118, %v3117
        %v3152 = vpack.c.b16 %v3120, %v3119
        %3185 = vmatprep.subr.bf16.mxu0 0
        %3186 = vmatpush1.bf16.msra.mxu0 %v3121
        %3187 = vmatprep.subr.bf16.mxu0 0
        %3188 = vmatpush1.bf16.msra.mxu0 %v3122
        %3189 = vmatprep.subr.bf16.mxu0 0
        %3190 = vmatpush1.bf16.msra.mxu0 %v3123
        %3191 = vmatprep.subr.bf16.mxu0 0
        %3192 = vmatpush1.bf16.msra.mxu0 %v3124
        %3193 = vmatprep.subr.bf16.mxu0 0
        %3194 = vmatpush1.bf16.msra.mxu0 %v3125
        %3195 = vmatprep.subr.bf16.mxu0 0
        %3196 = vmatpush1.bf16.msra.mxu0 %v3126
        %3197 = vmatprep.subr.bf16.mxu0 0
        %3198 = vmatpush1.bf16.msra.mxu0 %v3127
        %3199 = vmatprep.subr.bf16.mxu0 0
        %3200 = vmatpush1.bf16.msra.mxu0 %v3128
        %3201 = vmatprep.subr.bf16.mxu0 0
        %3202 = vmatpush1.bf16.msra.mxu0 %v3129
        %3203 = vmatprep.subr.bf16.mxu0 0
        %3204 = vmatpush1.bf16.msra.mxu0 %v3130
        %3205 = vmatprep.subr.bf16.mxu0 0
        %3206 = vmatpush1.bf16.msra.mxu0 %v3131
        %3207 = vmatprep.subr.bf16.mxu0 0
        %3208 = vmatpush1.bf16.msra.mxu0 %v3132
        %3209 = vmatprep.subr.bf16.mxu0 0
        %3210 = vmatpush1.bf16.msra.mxu0 %v3133
        %3211 = vmatprep.subr.bf16.mxu0 0
        %3212 = vmatpush1.bf16.msra.mxu0 %v3134
        %3213 = vmatprep.subr.bf16.mxu0 0
        %3214 = vmatpush1.bf16.msra.mxu0 %v3135
        %3215 = vmatprep.subr.bf16.mxu0 0
        %3216 = vmatpush1.bf16.msra.mxu0 %v3136
        %3217 = vmatprep.mubr.bf16.mxu0 %v2978
        %3218 = vmatmul.mubr.bf16.gmra.mrb[0].mxu0 %v2977
        %v3219 = vpop.f32.mrb[0].mxu0
        %v3220 = vadd.f32 0.0, %v3219
        %v3221 = vpop.f32.mrb[0].mxu0
        %v3222 = vpop.f32.mrb[0].mxu0
        %v3223 = vadd.f32 0.0, %v3222
        %v3224 = vpop.f32.mrb[0].mxu0
        %3225 = vmatprep.mubr.bf16.mxu0 %v2982
        %3226 = vmatmul.mubr.bf16.gmra.mrb[0].mxu0 %v2981
        %v3227 = vpop.f32.mrb[0].mxu0
        %v3228 = vadd.f32 0.0, %v3227
        %v3229 = vpop.f32.mrb[0].mxu0
        %v3230 = vpop.f32.mrb[0].mxu0
        %v3231 = vadd.f32 0.0, %v3230
        %v3232 = vpop.f32.mrb[0].mxu0
        %3233 = vmatprep.mubr.bf16.mxu0 %v2986
        %3234 = vmatmul.mubr.bf16.gmra.mrb[0].mxu0 %v2985
        %v3235 = vpop.f32.mrb[0].mxu0
        %v3236 = vadd.f32 0.0, %v3235
        %v3237 = vpop.f32.mrb[0].mxu0
        %v3238 = vpop.f32.mrb[0].mxu0
        %v3239 = vadd.f32 0.0, %v3238
        %v3240 = vpop.f32.mrb[0].mxu0
        %3241 = vmatprep.mubr.bf16.mxu0 %v2990
        %3242 = vmatmul.mubr.bf16.gmra.mrb[0].mxu0 %v2989
        %v3243 = vpop.f32.mrb[0].mxu0
        %v3244 = vadd.f32 0.0, %v3243
        %v3245 = vpop.f32.mrb[0].mxu0
        %v3246 = vpop.f32.mrb[0].mxu0
        %v3247 = vadd.f32 0.0, %v3246
        %v3248 = vpop.f32.mrb[0].mxu0
        %3249 = vdwg.mxu0
        %3250 = vmatprep.subr.bf16.mxu0 0
        %3251 = vmatpush1.bf16.msra.mxu0 %v3137
        %3252 = vmatprep.subr.bf16.mxu0 0
        %3253 = vmatpush1.bf16.msra.mxu0 %v3138
        %3254 = vmatprep.subr.bf16.mxu0 0
        %3255 = vmatpush1.bf16.msra.mxu0 %v3139
        %3256 = vmatprep.subr.bf16.mxu0 0
        %3257 = vmatpush1.bf16.msra.mxu0 %v3140
        %3258 = vmatprep.subr.bf16.mxu0 0
        %3259 = vmatpush1.bf16.msra.mxu0 %v3141
        %3260 = vmatprep.subr.bf16.mxu0 0
        %3261 = vmatpush1.bf16.msra.mxu0 %v3142
        %3262 = vmatprep.subr.bf16.mxu0 0
        %3263 = vmatpush1.bf16.msra.mxu0 %v3143
        %3264 = vmatprep.subr.bf16.mxu0 0
        %3265 = vmatpush1.bf16.msra.mxu0 %v3144
        %3266 = vmatprep.subr.bf16.mxu0 0
        %3267 = vmatpush1.bf16.msra.mxu0 %v3145
        %3268 = vmatprep.subr.bf16.mxu0 0
        %3269 = vmatpush1.bf16.msra.mxu0 %v3146
        %3270 = vmatprep.subr.bf16.mxu0 0
        %3271 = vmatpush1.bf16.msra.mxu0 %v3147
        %3272 = vmatprep.subr.bf16.mxu0 0
        %3273 = vmatpush1.bf16.msra.mxu0 %v3148
        %3274 = vmatprep.subr.bf16.mxu0 0
        %3275 = vmatpush1.bf16.msra.mxu0 %v3149
        %3276 = vmatprep.subr.bf16.mxu0 0
        %3277 = vmatpush1.bf16.msra.mxu0 %v3150
        %3278 = vmatprep.subr.bf16.mxu0 0
        %3279 = vmatpush1.bf16.msra.mxu0 %v3151
        %3280 = vmatprep.subr.bf16.mxu0 0
        %3281 = vmatpush1.bf16.msra.mxu0 %v3152
        %3282 = vmatprep.mubr.bf16.mxu0 %v2980
        %3283 = vmatmul.mubr.bf16.gmra.mrb[0].mxu0 %v2979
        %v3284 = vpop.f32.mrb[0].mxu0
        %v3285 = vadd.f32 %v3220, %v3284
        %v3286 = vpop.f32.mrb[0].mxu0
        %v3287 = vpop.f32.mrb[0].mxu0
        %v3288 = vadd.f32 %v3223, %v3287
        %v3289 = vpop.f32.mrb[0].mxu0
        %3290 = vmatprep.mubr.bf16.mxu0 %v2984
        %3291 = vmatmul.mubr.bf16.gmra.mrb[0].mxu0 %v2983
        %v3292 = vpop.f32.mrb[0].mxu0
        %v3293 = vadd.f32 %v3228, %v3292
        %v3294 = vpop.f32.mrb[0].mxu0
        %v3295 = vpop.f32.mrb[0].mxu0
        %v3296 = vadd.f32 %v3231, %v3295
        %v3297 = vpop.f32.mrb[0].mxu0
        %3298 = vmatprep.mubr.bf16.mxu0 %v2988
        %3299 = vmatmul.mubr.bf16.gmra.mrb[0].mxu0 %v2987
        %v3300 = vpop.f32.mrb[0].mxu0
        %v3301 = vadd.f32 %v3236, %v3300
        %v3302 = vpop.f32.mrb[0].mxu0
        %v3303 = vpop.f32.mrb[0].mxu0
        %v3304 = vadd.f32 %v3239, %v3303
        %v3305 = vpop.f32.mrb[0].mxu0
        %3306 = vmatprep.mubr.bf16.mxu0 %v2992
        %3307 = vmatmul.mubr.bf16.gmra.mrb[0].mxu0 %v2991
        %v3308 = vpop.f32.mrb[0].mxu0
        %v3309 = vadd.f32 %v3244, %v3308
        %v3310 = vpop.f32.mrb[0].mxu0
        %v3311 = vpop.f32.mrb[0].mxu0
        %v3312 = vadd.f32 %v3247, %v3311
        %v3313 = vpop.f32.mrb[0].mxu0
        %3314 = vdwg.mxu0
        %v3315 = vadd.f32 %v2269, %v3285
        %v3316 = vadd.f32 %v2270, %v3288
        %v3317 = vadd.f32 %v2271, %v3293
        %v3318 = vadd.f32 %v2272, %v3296
        %v3319 = vadd.f32 %v2273, %v3301
        %v3320 = vadd.f32 %v2274, %v3304
        %v3321 = vadd.f32 %v2275, %v3309
        %v3322 = vadd.f32 %v2276, %v3312
        %v3323 = vlaneseq
        %v3324 = vshrl.u32 %v3323, 7
        %v3325 = vsub.s32 5, %v3324
        %v3326 = vrot.slane %v1952, %v3325
        %v3327 = vadd.f32 %v3315, %v3326
        %v3328 = vadd.f32 %v3316, %v3326
        %v3329 = vadd.f32 %v3317, %v3326
        %v3330 = vadd.f32 %v3318, %v3326
        %v3331 = vadd.f32 %v3319, %v3326
        %v3332 = vadd.f32 %v3320, %v3326
        %v3333 = vadd.f32 %v3321, %v3326
        %v3334 = vadd.f32 %v3322, %v3326
        %3335 = vst [vmem:[#allocation2] sm:$0xff] %v3327
        %3336 = vst [vmem:[#allocation2 + $0x8] sm:$0xff] %v3328
        %3337 = vst [vmem:[#allocation2 + $0x10] sm:$0xff] %v3329
        %3338 = vst [vmem:[#allocation2 + $0x18] sm:$0xff] %v3330
        %3339 = vst [vmem:[#allocation2 + $0x20] sm:$0xff] %v3331
        %3340 = vst [vmem:[#allocation2 + $0x28] sm:$0xff] %v3332
        %3341 = vst [vmem:[#allocation2 + $0x30] sm:$0xff] %v3333
        %3342 = vst [vmem:[#allocation2 + $0x38] sm:$0xff] %v3334
        %p3343 = scmp.eq.s32.totalorder %s44, 5
        // Predicated region
        $region137: #{tpu_custom_call.1} parent=83 // pred_check
          %p3344 = pneg %p3343
        $region138: #{tpu_custom_call.1} parent=83 // pred_check_branch
          %3346 = sbr.rel (%p3344) target = $region140
        $region139: #{tpu_custom_call.1} parent=83 // pred_region
          %v3347 = vld [vmem:[#allocation9 + $0x8] sm:$0x3]
          %v3348 = vld [vmem:[#allocation2] sm:$0xff]
          %v3349 = vld [vmem:[#allocation2 + $0x8] sm:$0xff]
          %v3350 = vld [vmem:[#allocation2 + $0x10] sm:$0xff]
          %v3351 = vld [vmem:[#allocation2 + $0x18] sm:$0xff]
          %v3352 = vld [vmem:[#allocation2 + $0x20] sm:$0xff]
          %v3353 = vld [vmem:[#allocation2 + $0x28] sm:$0xff]
          %v3354 = vld [vmem:[#allocation2 + $0x30] sm:$0xff]
          %v3355 = vld [vmem:[#allocation2 + $0x38] sm:$0xff]
          %3356 = vadd.xlane.f32.xlu0 %v3348
          %v3357 = vpop.xlane.xlu0 %3356
          %3358 = vadd.xlane.f32.xlu0 %v3349
          %v3359 = vpop.xlane.xlu0 %3358
          %3360 = vadd.xlane.f32.xlu0 %v3350
          %v3361 = vpop.xlane.xlu0 %3360
          %3362 = vadd.xlane.f32.xlu0 %v3351
          %v3363 = vpop.xlane.xlu0 %3362
          %3364 = vadd.xlane.f32.xlu0 %v3352
          %v3365 = vpop.xlane.xlu0 %3364
          %3366 = vadd.xlane.f32.xlu0 %v3353
          %v3367 = vpop.xlane.xlu0 %3366
          %3368 = vadd.xlane.f32.xlu0 %v3354
          %v3369 = vpop.xlane.xlu0 %3368
          %3370 = vadd.xlane.f32.xlu0 %v3355
          %v3371 = vpop.xlane.xlu0 %3370
          %v3372 = vmul.f32 %v3357, %v2027
          %v3373 = vmul.f32 %v3359, %v2027
          %v3374 = vmul.f32 %v3361, %v2027
          %v3375 = vmul.f32 %v3363, %v2027
          %v3376 = vmul.f32 %v3365, %v2027
          %v3377 = vmul.f32 %v3367, %v2027
          %v3378 = vmul.f32 %v3369, %v2027
          %v3379 = vmul.f32 %v3371, %v2027
          %v3380 = vsub.f32 %v3348, %v3372
          %v3381 = vsub.f32 %v3349, %v3373
          %v3382 = vsub.f32 %v3350, %v3374
          %v3383 = vsub.f32 %v3351, %v3375
          %v3384 = vsub.f32 %v3352, %v3376
          %v3385 = vsub.f32 %v3353, %v3377
          %v3386 = vsub.f32 %v3354, %v3378
          %v3387 = vsub.f32 %v3355, %v3379
          %v3388 = vmul.f32 %v3380, %v3380
          %v3389 = vmul.f32 %v3381, %v3381
          %v3390 = vmul.f32 %v3382, %v3382
          %v3391 = vmul.f32 %v3383, %v3383
          %v3392 = vmul.f32 %v3384, %v3384
          %v3393 = vmul.f32 %v3385, %v3385
          %v3394 = vmul.f32 %v3386, %v3386
          %v3395 = vmul.f32 %v3387, %v3387
          %3396 = vadd.xlane.f32.xlu0 %v3388
          %v3397 = vpop.xlane.xlu0 %3396
          %3398 = vadd.xlane.f32.xlu0 %v3389
          %v3399 = vpop.xlane.xlu0 %3398
          %3400 = vadd.xlane.f32.xlu0 %v3390
          %v3401 = vpop.xlane.xlu0 %3400
          %3402 = vadd.xlane.f32.xlu0 %v3391
          %v3403 = vpop.xlane.xlu0 %3402
          %3404 = vadd.xlane.f32.xlu0 %v3392
          %v3405 = vpop.xlane.xlu0 %3404
          %3406 = vadd.xlane.f32.xlu0 %v3393
          %v3407 = vpop.xlane.xlu0 %3406
          %3408 = vadd.xlane.f32.xlu0 %v3394
          %v3409 = vpop.xlane.xlu0 %3408
          %3410 = vadd.xlane.f32.xlu0 %v3395
          %v3411 = vpop.xlane.xlu0 %3410
          %v3412 = vmul.f32 %v3397, %v2027
          %v3413 = vmul.f32 %v3399, %v2027
          %v3414 = vmul.f32 %v3401, %v2027
          %v3415 = vmul.f32 %v3403, %v2027
          %v3416 = vmul.f32 %v3405, %v2027
          %v3417 = vmul.f32 %v3407, %v2027
          %v3418 = vmul.f32 %v3409, %v2027
          %v3419 = vmul.f32 %v3411, %v2027
          %v3420 = vadd.f32 %v3412, 1e-05
          %v3421 = vadd.f32 %v3413, 1e-05
          %v3422 = vadd.f32 %v3414, 1e-05
          %v3423 = vadd.f32 %v3415, 1e-05
          %v3424 = vadd.f32 %v3416, 1e-05
          %v3425 = vadd.f32 %v3417, 1e-05
          %v3426 = vadd.f32 %v3418, 1e-05
          %v3427 = vadd.f32 %v3419, 1e-05
          %v3428 = vrsqrt.pop %v3420
          %v3429 = vrsqrt.pop %v3421
          %v3430 = vrsqrt.pop %v3422
          %v3431 = vrsqrt.pop %v3423
          %v3432 = vrsqrt.pop %v3424
          %v3433 = vrsqrt.pop %v3425
          %v3434 = vrsqrt.pop %v3426
          %v3435 = vrsqrt.pop %v3427
          %v3436 = vmul.f32 %v3380, %v3428
          %v3437 = vmul.f32 %v3381, %v3429
          %v3438 = vmul.f32 %v3382, %v3430
          %v3439 = vmul.f32 %v3383, %v3431
          %v3440 = vmul.f32 %v3384, %v3432
          %v3441 = vmul.f32 %v3385, %v3433
          %v3442 = vmul.f32 %v3386, %v3434
          %v3443 = vmul.f32 %v3387, %v3435
          %v3444 = vlaneseq
          %v3445 = vshrl.u32 %v3444, 7
          %v3446 = vsub.s32 0, %v3445
          %v3447 = vrot.slane %v3347, %v3446
          %v3448 = vmul.f32 %v3436, %v3447
          %v3449 = vmul.f32 %v3437, %v3447
          %v3450 = vmul.f32 %v3438, %v3447
          %v3451 = vmul.f32 %v3439, %v3447
          %v3452 = vmul.f32 %v3440, %v3447
          %v3453 = vmul.f32 %v3441, %v3447
          %v3454 = vmul.f32 %v3442, %v3447
          %v3455 = vmul.f32 %v3443, %v3447
          %v3456 = vlaneseq
          %v3457 = vshrl.u32 %v3456, 7
          %v3458 = vsub.s32 1, %v3457
          %v3459 = vrot.slane %v3347, %v3458
          %v3460 = vadd.f32 %v3448, %v3459
          %v3461 = vadd.f32 %v3449, %v3459
          %v3462 = vadd.f32 %v3450, %v3459
          %v3463 = vadd.f32 %v3451, %v3459
          %v3464 = vadd.f32 %v3452, %v3459
          %v3465 = vadd.f32 %v3453, %v3459
          %v3466 = vadd.f32 %v3454, %v3459
          %v3467 = vadd.f32 %v3455, %v3459
          %v3468 = vxor.u32 %v3460, 2147483648
          %v3469 = vxor.u32 %v3461, 2147483648
          %v3470 = vxor.u32 %v3462, 2147483648
          %v3471 = vxor.u32 %v3463, 2147483648
          %v3472 = vxor.u32 %v3464, 2147483648
          %v3473 = vxor.u32 %v3465, 2147483648
          %v3474 = vxor.u32 %v3466, 2147483648
          %v3475 = vxor.u32 %v3467, 2147483648
          %v3476 = vmul.f32 %v3468, 1.442695
          %v3477 = vpow.pop %v3476
          %v3478 = vmul.f32 %v3469, 1.442695
          %v3479 = vpow.pop %v3478
          %v3480 = vmul.f32 %v3470, 1.442695
          %v3481 = vpow.pop %v3480
          %v3482 = vmul.f32 %v3471, 1.442695
          %v3483 = vpow.pop %v3482
          %v3484 = vmul.f32 %v3472, 1.442695
          %v3485 = vpow.pop %v3484
          %v3486 = vmul.f32 %v3473, 1.442695
          %v3487 = vpow.pop %v3486
          %v3488 = vmul.f32 %v3474, 1.442695
          %v3489 = vpow.pop %v3488
          %v3490 = vmul.f32 %v3475, 1.442695
          %v3491 = vpow.pop %v3490
          %v3492 = vadd.f32 %v3477, 1.0
          %v3493 = vadd.f32 %v3479, 1.0
          %v3494 = vadd.f32 %v3481, 1.0
          %v3495 = vadd.f32 %v3483, 1.0
          %v3496 = vadd.f32 %v3485, 1.0
          %v3497 = vadd.f32 %v3487, 1.0
          %v3498 = vadd.f32 %v3489, 1.0
          %v3499 = vadd.f32 %v3491, 1.0
          %v3500 = vrcp.pop %v3492
          %v3501 = vmul.f32 1.0, %v3500
          %v3502 = vrcp.pop %v3493
          %v3503 = vmul.f32 1.0, %v3502
          %v3504 = vrcp.pop %v3494
          %v3505 = vmul.f32 1.0, %v3504
          %v3506 = vrcp.pop %v3495
          %v3507 = vmul.f32 1.0, %v3506
          %v3508 = vrcp.pop %v3496
          %v3509 = vmul.f32 1.0, %v3508
          %v3510 = vrcp.pop %v3497
          %v3511 = vmul.f32 1.0, %v3510
          %v3512 = vrcp.pop %v3498
          %v3513 = vmul.f32 1.0, %v3512
          %v3514 = vrcp.pop %v3499
          %v3515 = vmul.f32 1.0, %v3514
          %v3516 = vmul.f32 %v3460, %v3501
          %v3517 = vmul.f32 %v3461, %v3503
          %v3518 = vmul.f32 %v3462, %v3505
          %v3519 = vmul.f32 %v3463, %v3507
          %v3520 = vmul.f32 %v3464, %v3509
          %v3521 = vmul.f32 %v3465, %v3511
          %v3522 = vmul.f32 %v3466, %v3513
          %v3523 = vmul.f32 %v3467, %v3515
          %v3524 = vld [vmem:[#allocation16] sm:$0xf]
          %v3525 = vld [vmem:[#allocation16 + $0x4] sm:$0xf]
          %v3526 = vld [vmem:[#allocation16 + $0x8] sm:$0xf]
          %v3527 = vld [vmem:[#allocation16 + $0xc] sm:$0xf]
          %v3528 = vld [vmem:[#allocation16 + $0x10] sm:$0xf]
          %v3529 = vld [vmem:[#allocation16 + $0x14] sm:$0xf]
          %v3530 = vld [vmem:[#allocation16 + $0x18] sm:$0xf]
          %v3531 = vld [vmem:[#allocation16 + $0x1c] sm:$0xf]
          %v3532 = vld [vmem:[#allocation16 + $0x20] sm:$0xf]
          %v3533 = vld [vmem:[#allocation16 + $0x24] sm:$0xf]
          %v3534 = vld [vmem:[#allocation16 + $0x28] sm:$0xf]
          %v3535 = vld [vmem:[#allocation16 + $0x2c] sm:$0xf]
          %v3536 = vld [vmem:[#allocation16 + $0x30] sm:$0xf]
          %v3537 = vld [vmem:[#allocation16 + $0x34] sm:$0xf]
          %v3538 = vld [vmem:[#allocation16 + $0x38] sm:$0xf]
          %v3539 = vld [vmem:[#allocation16 + $0x3c] sm:$0xf]
          %v3540 = vpack.c.bf16 %v3517, %v3516
          %v3541 = vpack.c.bf16 %v3519, %v3518
          %v3542 = vpack.c.bf16 %v3521, %v3520
          %v3543 = vpack.c.bf16 %v3523, %v3522
          %v3544 = vld [vmem:[%s10] sm:$0x1]
          %v3546 = vlaneseq
          %v3547 = vshrl.u32 %v3546, 7
          %v3548 = vsub.s32 0, %v3547
          %v3549 = vrot.slane %v3544, %v3548
          %v3567 = vunpack.c.l.b16 %v3524
          %v3568 = vunpack.c.l.b16 %v3525
          %v3569 = vunpack.c.l.b16 %v3526
          %v3570 = vunpack.c.l.b16 %v3527
          %v3571 = vunpack.c.l.b16 %v3528
          %v3572 = vunpack.c.l.b16 %v3529
          %v3573 = vunpack.c.l.b16 %v3530
          %v3574 = vunpack.c.l.b16 %v3531
          %v3575 = vunpack.c.l.b16 %v3532
          %v3576 = vunpack.c.l.b16 %v3533
          %v3577 = vunpack.c.l.b16 %v3534
          %v3578 = vunpack.c.l.b16 %v3535
          %v3579 = vunpack.c.l.b16 %v3536
          %v3580 = vunpack.c.l.b16 %v3537
          %v3581 = vunpack.c.l.b16 %v3538
          %v3582 = vunpack.c.l.b16 %v3539
          %v3583 = vpack.c.b16 %v3568, %v3567
          %v3584 = vpack.c.b16 %v3570, %v3569
          %v3585 = vpack.c.b16 %v3572, %v3571
          %v3586 = vpack.c.b16 %v3574, %v3573
          %v3587 = vpack.c.b16 %v3576, %v3575
          %v3588 = vpack.c.b16 %v3578, %v3577
          %v3589 = vpack.c.b16 %v3580, %v3579
          %v3590 = vpack.c.b16 %v3582, %v3581
          %3599 = vmatprep.subr.bf16.mxu0 0
          %3600 = vmatpush1.bf16.msra.mxu0 %v3583
          %3601 = vmatprep.subr.bf16.mxu0 0
          %3602 = vmatpush1.bf16.msra.mxu0 %v3584
          %3603 = vmatprep.subr.bf16.mxu0 0
          %3604 = vmatpush1.bf16.msra.mxu0 %v3585
          %3605 = vmatprep.subr.bf16.mxu0 0
          %3606 = vmatpush1.bf16.msra.mxu0 %v3586
          %3607 = vmatprep.subr.bf16.mxu0 0
          %3608 = vmatpush1.bf16.msra.mxu0 %v3587
          %3609 = vmatprep.subr.bf16.mxu0 0
          %3610 = vmatpush1.bf16.msra.mxu0 %v3588
          %3611 = vmatprep.subr.bf16.mxu0 0
          %3612 = vmatpush1.bf16.msra.mxu0 %v3589
          %3613 = vmatprep.subr.bf16.mxu0 0
          %3614 = vmatpush1.bf16.msra.mxu0 %v3590
          %3615 = vmatprep.subr.bf16.mxu0 0
          %3616 = vmatpush1.bf16.msra.mxu0 0
          %3617 = vmatprep.subr.bf16.mxu0 0
          %3618 = vmatpush1.bf16.msra.mxu0 0
          %3619 = vmatprep.subr.bf16.mxu0 0
          %3620 = vmatpush1.bf16.msra.mxu0 0
          %3621 = vmatprep.subr.bf16.mxu0 0
          %3622 = vmatpush1.bf16.msra.mxu0 0
          %3623 = vmatprep.subr.bf16.mxu0 0
          %3624 = vmatpush1.bf16.msra.mxu0 0
          %3625 = vmatprep.subr.bf16.mxu0 0
          %3626 = vmatpush1.bf16.msra.mxu0 0
          %3627 = vmatprep.subr.bf16.mxu0 0
          %3628 = vmatpush1.bf16.msra.mxu0 0
          %3629 = vmatprep.subr.bf16.mxu0 0
          %3630 = vmatpush1.bf16.msra.mxu0 0
          %3631 = vmatprep.mubr.bf16.mxu0 0
          %3632 = vmatmul.mubr.bf16.gmra.mrb[0].mxu0 %v3540
          %v3633 = vpop.f32.mrb[0].mxu0
          %v3634 = vadd.f32 %v3549, %v3633
          %v3635 = vpop.f32.mrb[0].mxu0
          %v3636 = vpop.f32.mrb[0].mxu0
          %v3637 = vadd.f32 %v3549, %v3636
          %v3638 = vpop.f32.mrb[0].mxu0
          %3639 = vmatprep.mubr.bf16.mxu0 0
          %3640 = vmatmul.mubr.bf16.gmra.mrb[0].mxu0 %v3541
          %v3641 = vpop.f32.mrb[0].mxu0
          %v3642 = vadd.f32 %v3549, %v3641
          %v3643 = vpop.f32.mrb[0].mxu0
          %v3644 = vpop.f32.mrb[0].mxu0
          %v3645 = vadd.f32 %v3549, %v3644
          %v3646 = vpop.f32.mrb[0].mxu0
          %3647 = vmatprep.mubr.bf16.mxu0 0
          %3648 = vmatmul.mubr.bf16.gmra.mrb[0].mxu0 %v3542
          %v3649 = vpop.f32.mrb[0].mxu0
          %v3650 = vadd.f32 %v3549, %v3649
          %v3651 = vpop.f32.mrb[0].mxu0
          %v3652 = vpop.f32.mrb[0].mxu0
          %v3653 = vadd.f32 %v3549, %v3652
          %v3654 = vpop.f32.mrb[0].mxu0
          %3655 = vmatprep.mubr.bf16.mxu0 0
          %3656 = vmatmul.mubr.bf16.gmra.mrb[0].mxu0 %v3543
          %v3657 = vpop.f32.mrb[0].mxu0
          %v3658 = vadd.f32 %v3549, %v3657
          %v3659 = vpop.f32.mrb[0].mxu0
          %v3660 = vpop.f32.mrb[0].mxu0
          %v3661 = vadd.f32 %v3549, %v3660
          %v3662 = vpop.f32.mrb[0].mxu0
          %3663 = vdwg.mxu0
          %3664 = vst [vmem:[%s869] sm:$0xff] %v3634
          %3665 = vst [vmem:[%s869 + $0x8] sm:$0xff] %v3637
          %3666 = vst [vmem:[%s869 + $0x10] sm:$0xff] %v3642
          %3667 = vst [vmem:[%s869 + $0x18] sm:$0xff] %v3645
          %3668 = vst [vmem:[%s869 + $0x20] sm:$0xff] %v3650
          %3669 = vst [vmem:[%s869 + $0x28] sm:$0xff] %v3653
          %3670 = vst [vmem:[%s869 + $0x30] sm:$0xff] %v3658
          %3671 = vst [vmem:[%s869 + $0x38] sm:$0xff] %v3661
        $region140: #{tpu_custom_call.1} parent=83 // pred_fallthru
          _
        %s3672 = sand.u32 %s440, 1
        %s3673 = scalar_lea.sflag [#allocation6], %s3672
        %s3674 = sand.u32 %s440, 1
        %s3675 = smul.addr %s3674, 64
        %s3676 = scalar_lea.vmem [#allocation22], %s3675
        // Predicated region
        $region141: #{tpu_custom_call.1} parent=83 // pred_check
          %p3677 = pneg %p450
        $region142: #{tpu_custom_call.1} parent=83 // pred_check_branch
          %3679 = sbr.rel (%p3677) target = $region144
        $region143: #{tpu_custom_call.1} parent=83 // pred_region
          %s3680 = smul.u32 8, %s43
          %s3682 = ssub.s32 1024, 1024
          %3683 = vsyncadd %s3673, %s3682
          %s3684 = smul.addr %s3680, 128
          %s3685 = scalar_lea.hbm %s16, %s3684
          %s3686 = sshll.u32 %s3676, 4
          %s3687 = int_to_ptr.vmem [resolvable:$true] %s3686
          %3692 = dma.vmem_to_hbm [thread:$0]  %s3687, 1024, %s3685, %s3673, 128, 128, 8
        $region144: #{tpu_custom_call.1} parent=83 // pred_fallthru
          _
      $region84: #{tpu_custom_call.1} parent=5 // pred_fallthru
        _
      %p3693 = scmp.le.s32.totalorder 2, %s34
      // Predicated region
      $region145: #{tpu_custom_call.1} parent=5 // pred_check
        %p3694 = pneg %p3693
      $region146: #{tpu_custom_call.1} parent=5 // pred_check_branch
        %3696 = sbr.rel (%p3694) target = $region148
      $region147: #{tpu_custom_call.1} parent=5 // pred_region
        %s3697 = ssub.s32 %s34, 2
        // Predicated region
        $region149: #{tpu_custom_call.1} parent=147 // pred_check
          %p3698 = pneg %p456
        $region150: #{tpu_custom_call.1} parent=147 // pred_check_branch
          %3700 = sbr.rel (%p3698) target = $region152
        $region151: #{tpu_custom_call.1} parent=147 // pred_region
          %s3701 = sand.u32 %s441, 1
          %s3702 = scalar_lea.sflag [#allocation6], %s3701
          %s3703 = sand.u32 %s441, 1
          %s3704 = smul.addr %s3703, 64
          %s3705 = scalar_lea.vmem [#allocation22], %s3704
          %3706 = dma.done %s3702, 1024
        $region152: #{tpu_custom_call.1} parent=147 // pred_fallthru
          _
      $region148: #{tpu_custom_call.1} parent=5 // pred_fallthru
        _
    $region6: #{tpu_custom_call.1} parent=1 // loop_footer
      %s38 = sadd.s32 1, %s34
    $region7: #{tpu_custom_call.1} parent=1 // loop_footer_branch
      %33 = sbr.rel target = $region3
    $region8: #{tpu_custom_call.1} parent=1 // loop_exit
      _
    %3707 = vsyncpa [#allocation5], 1
    %s3708 = scalar_lea.sflag [#allocation5], 1
    %3709 = vsyncpa %s3708, 1
    %3710 = vsyncpa [#allocation8], 1
    %s3711 = scalar_lea.sflag [#allocation8], 1
    %3712 = vsyncpa %s3711, 1
    %3713 = vsyncpa [#allocation11], 1
    %3714 = vsyncpa [#allocation14], 1
    %3715 = vsyncpa [#allocation17], 1
    %3716 = vsyncpa [#allocation6], 1
    %s3717 = scalar_lea.sflag [#allocation6], 1
    %3718 = vsyncpa %s3717, 1

</llo_original>
